<compile_context>
chip_gen: v7x
topology: tpu7x:2x2x1
jax: 0.10.0
libtpu: 0.0.40
codegen_flags: <defaults>
</compile_context>

<pallas_src>
import functools
import math

import jax
import jax.numpy as jnp
from jax.experimental import pallas as pl
from jax.experimental.pallas import tpu as pltpu


_CPARAMS = pltpu.CompilerParams(dimension_semantics=("parallel",))


# ------------------------------- fused kernel ------------------------------ #

def _block_kernel(p00_ref, p01_ref, p10_ref, p11_ref,
                  w1_ref, wdn_ref, wfh_ref, wfl_ref, wlh_ref, wll_ref,
                  wpool_ref, w4_ref, sh_ref,
                  out_ref, pad_ref,
                  *, ho, wo, cin, cout, c_h, c_l):
    """Entire BLOCK forward for one image; all intermediates stay on-chip."""
    bf16 = jnp.bfloat16
    m = ho * wo

    # ---------- conv1: 3x3 stride-2 + BN + ReLU ----------
    # p_ab = zero-padded input at rows a::2 / cols b::2, so every tap of the
    # stride-2 conv is a contiguous static slice of a VMEM block.
    phases = ((p00_ref, p01_ref), (p10_ref, p11_ref))
    acc1 = None
    for ky in range(3):
        for kx in range(3):
            pref = phases[ky % 2][kx % 2]
            ry, rx = ky // 2, kx // 2
            patch = pref[ry:ry + ho, rx:rx + wo, :].reshape(m, cin)
            part = jnp.dot(patch.astype(bf16), w1_ref[ky * 3 + kx],
                           preferred_element_type=jnp.float32)
            acc1 = part if acc1 is None else acc1 + part
    out1 = jnp.maximum(acc1 + sh_ref[0:1, :], 0.0)            # (m, cout) f32

    # ---------- downsample: 1x1 stride-2 + BN (residual path) ----------
    centre = p11_ref[0:ho, 0:wo, :].reshape(m, cin)
    residual = (jnp.dot(centre.astype(bf16), wdn_ref[...],
                        preferred_element_type=jnp.float32) + sh_ref[1:2, :])

    # ---------- octave chain (FirstOctaveConv + LastOctaveConv) ----------
    # avgpool2x2 -> per-pixel 1x1 conv / BN / ReLU -> nearest 2x upsample
    # commutes to the same per-pixel chain applied to the 2x2 block-mean,
    # which is one constant-matrix matmul at full resolution.
    out1_b = out1.astype(bf16)
    bmean = jnp.dot(wpool_ref[...], out1_b, preferred_element_type=jnp.float32)
    xl = jnp.maximum(
        jnp.dot(bmean.astype(bf16), wfl_ref[...],
                preferred_element_type=jnp.float32) + sh_ref[3:4, 0:c_l], 0.0)
    xl2h = jnp.dot(xl.astype(bf16), wll_ref[...],
                   preferred_element_type=jnp.float32)
    xh = jnp.maximum(
        jnp.dot(out1_b, wfh_ref[...],
                preferred_element_type=jnp.float32) + sh_ref[2:3, 0:c_h], 0.0)
    xh2h = jnp.dot(xh.astype(bf16), wlh_ref[...],
                   preferred_element_type=jnp.float32)
    y = jnp.maximum(xh2h + xl2h + sh_ref[4:5, :], 0.0)        # (m, cout) f32

    # ---------- conv4: 3x3 pad-1 + BN + residual add + ReLU ----------
    pad_ref[...] = jnp.zeros(pad_ref.shape, pad_ref.dtype)
    pad_ref[1:1 + ho, 1:1 + wo, :] = y.reshape(ho, wo, cout)
    acc4 = None
    for ky in range(3):
        for kx in range(3):
            patch = pad_ref[ky:ky + ho, kx:kx + wo, :].reshape(m, cout)
            part = jnp.dot(patch.astype(bf16), w4_ref[ky * 3 + kx],
                           preferred_element_type=jnp.float32)
            acc4 = part if acc4 is None else acc4 + part
    z = jnp.maximum(acc4 + sh_ref[5:6, :] + residual, 0.0)
    out_ref[...] = z.reshape(ho, wo, cout).astype(out_ref.dtype)


# ------------------------------ glue helpers ------------------------------- #

def _split_phases(x):
    """Even/odd row/col polyphase views of an NHWC tensor (XLA strided slices)."""
    return (x[:, 0::2, 0::2, :], x[:, 0::2, 1::2, :],
            x[:, 1::2, 0::2, :], x[:, 1::2, 1::2, :])


def _fold_bn(w_oihw, bias, bn):
    """Fold inference-mode BN scale into the conv weight; return (HWIO w, shift)."""
    gamma, beta, mean, var, eps = bn
    inv = gamma / jnp.sqrt(var + eps)
    b = bias if bias is not None else 0.0
    w = jnp.transpose(w_oihw, (2, 3, 1, 0)) * inv          # (K, K, Cin, Cout)
    shift = (b - mean) * inv + beta
    return w, shift


def _batch_spec(arr):
    """BlockSpec: batch on the grid, rest of the (small) array as one block."""
    shp = arr.shape[1:]
    nd = len(shp)
    return pl.BlockSpec((None,) + shp, lambda i: (i,) + (0,) * nd)


def _const_spec(arr):
    """BlockSpec: full array, resident across grid steps (weights/shifts)."""
    nd = arr.ndim
    return pl.BlockSpec(arr.shape, lambda i: (0,) * nd)


# ------------------------------ BLOCK forward ------------------------------ #

def block_forward(x_nchw, params):
    x = jnp.transpose(x_nchw, (0, 2, 3, 1)).astype(jnp.float32)   # NCHW -> NHWC
    n, h, w, cin = x.shape
    bf16 = jnp.bfloat16

    # ---- fold BatchNorm (inference mode) into the tiny conv weights ----------
    w_c1, s_c1 = _fold_bn(params['c1_w'], params['c1_b'], params['c1_bn'])
    w_dn, s_dn = _fold_bn(params['down_w'], params['down_b'], params['down_bn'])
    w_fh, s_fh = _fold_bn(params['fo_h2h_w'], None, params['fo_bn_h'])
    w_fl, s_fl = _fold_bn(params['fo_h2l_w'], None, params['fo_bn_l'])
    gamma, beta, mean, var, eps = params['lo_bn_h']
    inv_lo = gamma / jnp.sqrt(var + eps)
    w_lh = jnp.transpose(params['lo_h2h_w'], (2, 3, 1, 0))[0, 0] * inv_lo
    w_ll = jnp.transpose(params['lo_l2h_w'], (2, 3, 1, 0))[0, 0] * inv_lo
    s_lo = beta - mean * inv_lo
    w_c4, s_c4 = _fold_bn(params['c4_w'], params['c4_b'], params['c4_bn'])

    cout = w_c1.shape[-1]
    c_h = w_fh.shape[-1]
    c_l = w_fl.shape[-1]

    ho = (h - 1) // 2 + 1
    wo = (w - 1) // 2 + 1
    assert ho % 2 == 0 and wo % 2 == 0, "fused octave path needs even spatial dims"
    m = ho * wo

    # ---- bf16 MXU operands (accumulation / epilogues stay f32 in-kernel) -----
    w1b = w_c1.reshape(9, cin, cout).astype(bf16)
    wdnb = w_dn[0, 0].astype(bf16)
    wfhb = w_fh[0, 0].astype(bf16)
    wflb = w_fl[0, 0].astype(bf16)
    wlhb = w_lh.astype(bf16)
    wllb = w_ll.astype(bf16)
    w4b = w_c4.reshape(9, cout, cout).astype(bf16)

    # 2x2 block-mean (== nearest-upsampled avgpool) as one constant matmul
    bid = ((jnp.arange(ho)[:, None] // 2) * (wo // 2)
           + (jnp.arange(wo)[None, :] // 2)).reshape(m)
    wpool = jnp.where(bid[:, None] == bid[None, :], 0.25, 0.0).astype(bf16)

    # per-channel BN shifts packed into one small f32 table
    s_tab = jnp.zeros((6, cout), jnp.float32)
    s_tab = s_tab.at[0, :].set(s_c1)
    s_tab = s_tab.at[1, :].set(s_dn)
    s_tab = s_tab.at[2, :c_h].set(s_fh)
    s_tab = s_tab.at[3, :c_l].set(s_fl)
    s_tab = s_tab.at[4, :].set(s_lo)
    s_tab = s_tab.at[5, :].set(s_c4)

    # polyphase views of the zero-padded input (stride-2 conv / downsample)
    xp = jnp.pad(x, ((0, 0), (1, 1), (1, 1), (0, 0)))
    p00, p01, p10, p11 = _split_phases(xp)

    kernel = functools.partial(_block_kernel, ho=ho, wo=wo, cin=cin, cout=cout,
                               c_h=c_h, c_l=c_l)

    out = pl.pallas_call(
        kernel,
        out_shape=jax.ShapeDtypeStruct((n, ho, wo, cout), jnp.float32),
        grid=(n,),
        in_specs=[_batch_spec(p00), _batch_spec(p01),
                  _batch_spec(p10), _batch_spec(p11),
                  _const_spec(w1b), _const_spec(wdnb),
                  _const_spec(wfhb), _const_spec(wflb),
                  _const_spec(wlhb), _const_spec(wllb),
                  _const_spec(wpool), _const_spec(w4b),
                  _const_spec(s_tab)],
        out_specs=pl.BlockSpec((None, ho, wo, cout), lambda i: (i, 0, 0, 0)),
        scratch_shapes=[pltpu.VMEM((ho + 2, wo + 2, cout), jnp.float32)],
        compiler_params=_CPARAMS,
    )(p00, p01, p10, p11, w1b, wdnb, wfhb, wflb, wlhb, wllb, wpool, w4b, s_tab)

    return jnp.transpose(out, (0, 3, 1, 2))                   # NHWC -> NCHW


# --------------------------- deterministic params --------------------------- #

def init_params(key, cin, cout, alpha=0.8):
    ks = jax.random.split(key, 16)

    def conv_w(k, co, ci, kk):
        fan_in = ci * kk * kk
        return (jax.random.normal(k, (co, ci, kk, kk), jnp.float32)
                / math.sqrt(fan_in))

    def conv_b(k, co):
        return 0.1 * jax.random.normal(k, (co,), jnp.float32)

    def bn(k, c):
        k1, k2, k3, k4 = jax.random.split(k, 4)
        gamma = 1.0 + 0.1 * jax.random.normal(k1, (c,), jnp.float32)
        beta = 0.1 * jax.random.normal(k2, (c,), jnp.float32)
        mean = 0.1 * jax.random.normal(k3, (c,), jnp.float32)
        var = 1.0 + 0.1 * jax.random.uniform(k4, (c,), jnp.float32)
        return (gamma, beta, mean, var, 1e-5)

    c_l = math.floor(alpha * cout)                    # low-freq channels
    c_h = cout - int(alpha * cout)                    # high-freq channels
    assert math.ceil(cout * (1 - alpha)) == c_h       # matches FirstOctaveConv.bn_h

    return dict(
        down_w=conv_w(ks[0], cout, cin, 1), down_b=conv_b(ks[1], cout), down_bn=bn(ks[2], cout),
        c1_w=conv_w(ks[3], cout, cin, 3), c1_b=conv_b(ks[4], cout), c1_bn=bn(ks[5], cout),
        fo_h2l_w=conv_w(ks[6], c_l, cout, 1),
        fo_h2h_w=conv_w(ks[7], c_h, cout, 1),
        fo_bn_h=bn(ks[8], c_h), fo_bn_l=bn(ks[9], c_l),
        lo_l2h_w=conv_w(ks[10], cout, c_l, 1),
        lo_h2h_w=conv_w(ks[11], cout, cout - c_l, 1),
        lo_bn_h=bn(ks[12], cout),
        c4_w=conv_w(ks[13], cout, cout, 3), c4_b=conv_b(ks[14], cout), c4_bn=bn(ks[15], cout),
    )


if __name__ == "__main__":
    key = jax.random.PRNGKey(0)
    kx, kp = jax.random.split(key)

    N, C_IN, H, W = 2, 4, 16, 16
    C_OUT = 16

    x = jax.random.normal(kx, (N, C_IN, H, W), dtype=jnp.float32)
    params = init_params(kp, C_IN, C_OUT)

    out = jax.jit(block_forward)(x, params)
    out = jax.block_until_ready(out)

    assert out.shape == (N, C_OUT, H // 2, W // 2), out.shape
    assert bool(jnp.all(jnp.isfinite(out)))
    assert bool(jnp.all(out >= 0.0))   # final ReLU
    assert bool(jnp.any(out > 0.0))    # not degenerate
    print("KERNEL_OK")
</pallas_src>

<mosaic_0001>
module attributes {stable_mosaic.version = 11 : i64} {
  func.func @_block_kernel(%arg0: i32, %arg1: memref<1x9x9x4xf32, #tpu.memory_space<vmem>>, %arg2: memref<1x9x9x4xf32, #tpu.memory_space<vmem>>, %arg3: memref<1x9x9x4xf32, #tpu.memory_space<vmem>>, %arg4: memref<1x9x9x4xf32, #tpu.memory_space<vmem>>, %arg5: memref<9x4x16xbf16, #tpu.memory_space<vmem>>, %arg6: memref<4x16xbf16, #tpu.memory_space<vmem>>, %arg7: memref<16x4xbf16, #tpu.memory_space<vmem>>, %arg8: memref<16x12xbf16, #tpu.memory_space<vmem>>, %arg9: memref<4x16xbf16, #tpu.memory_space<vmem>>, %arg10: memref<12x16xbf16, #tpu.memory_space<vmem>>, %arg11: memref<64x64xbf16, #tpu.memory_space<vmem>>, %arg12: memref<9x16x16xbf16, #tpu.memory_space<vmem>>, %arg13: memref<6x16xf32, #tpu.memory_space<vmem>>, %arg14: memref<1x8x8x16xf32, #tpu.memory_space<vmem>>, %arg15: memref<10x10x16xf32, #tpu.memory_space<vmem>>) attributes {dimension_semantics = [#tpu.dimension_semantics<parallel>], iteration_bounds = array<i64: 2>, scalar_prefetch = 0 : i64, scratch_operands = 1 : i64, tpu.core_type = #tpu.core_type<tc>, window_params = [{transform_indices = @transform_0, window_bounds = array<i64: 1, 9, 9, 4>}, {transform_indices = @transform_1, window_bounds = array<i64: 1, 9, 9, 4>}, {transform_indices = @transform_2, window_bounds = array<i64: 1, 9, 9, 4>}, {transform_indices = @transform_3, window_bounds = array<i64: 1, 9, 9, 4>}, {pipeline_mode = #tpu.pipeline_mode<synchronous>, transform_indices = @transform_4, window_bounds = array<i64: 9, 4, 16>}, {pipeline_mode = #tpu.pipeline_mode<synchronous>, transform_indices = @transform_5, window_bounds = array<i64: 4, 16>}, {pipeline_mode = #tpu.pipeline_mode<synchronous>, transform_indices = @transform_6, window_bounds = array<i64: 16, 4>}, {pipeline_mode = #tpu.pipeline_mode<synchronous>, transform_indices = @transform_7, window_bounds = array<i64: 16, 12>}, {pipeline_mode = #tpu.pipeline_mode<synchronous>, transform_indices = @transform_8, window_bounds = array<i64: 4, 16>}, {pipeline_mode = #tpu.pipeline_mode<synchronous>, transform_indices = @transform_9, window_bounds = array<i64: 12, 16>}, {pipeline_mode = #tpu.pipeline_mode<synchronous>, transform_indices = @transform_10, window_bounds = array<i64: 64, 64>}, {pipeline_mode = #tpu.pipeline_mode<synchronous>, transform_indices = @transform_11, window_bounds = array<i64: 9, 16, 16>}, {pipeline_mode = #tpu.pipeline_mode<synchronous>, transform_indices = @transform_12, window_bounds = array<i64: 6, 16>}, {transform_indices = @transform_13, window_bounds = array<i64: 1, 8, 8, 16>}]} {
    %c0 = arith.constant 0 : index
    %c0_0 = arith.constant 0 : index
    %c0_1 = arith.constant 0 : index
    %c0_2 = arith.constant 0 : index
    %0 = vector.load %arg1[%c0, %c0_0, %c0_1, %c0_2] : memref<1x9x9x4xf32, #tpu.memory_space<vmem>>, vector<1x8x8x4xf32>
    %1 = vector.shape_cast %0 : vector<1x8x8x4xf32> to vector<8x8x4xf32>
    %2 = vector.shape_cast %1 : vector<8x8x4xf32> to vector<64x4xf32>
    %3 = arith.truncf %2 : vector<64x4xf32> to vector<64x4xbf16>
    %c0_3 = arith.constant 0 : index
    %c0_4 = arith.constant 0 : index
    %c0_5 = arith.constant 0 : index
    %4 = vector.load %arg5[%c0_3, %c0_4, %c0_5] : memref<9x4x16xbf16, #tpu.memory_space<vmem>>, vector<1x4x16xbf16>
    %5 = vector.shape_cast %4 : vector<1x4x16xbf16> to vector<4x16xbf16>
    %cst = arith.constant dense<0.000000e+00> : vector<64x16xf32>
    %6 = tpu.matmul %3, %5, %cst {dimension_numbers = #tpu.dot_dimension_numbers<[1], [0], [0], [1], [0, 0, 1, 1], [], []>} : vector<64x4xbf16>, vector<4x16xbf16>, vector<64x16xf32> -> vector<64x16xf32>
    %c0_6 = arith.constant 0 : index
    %c0_7 = arith.constant 0 : index
    %c0_8 = arith.constant 0 : index
    %c0_9 = arith.constant 0 : index
    %7 = vector.load %arg2[%c0_6, %c0_7, %c0_8, %c0_9] : memref<1x9x9x4xf32, #tpu.memory_space<vmem>>, vector<1x8x8x4xf32>
    %8 = vector.shape_cast %7 : vector<1x8x8x4xf32> to vector<8x8x4xf32>
    %9 = vector.shape_cast %8 : vector<8x8x4xf32> to vector<64x4xf32>
    %10 = arith.truncf %9 : vector<64x4xf32> to vector<64x4xbf16>
    %c1 = arith.constant 1 : index
    %c0_10 = arith.constant 0 : index
    %c0_11 = arith.constant 0 : index
    %11 = vector.load %arg5[%c1, %c0_10, %c0_11] : memref<9x4x16xbf16, #tpu.memory_space<vmem>>, vector<1x4x16xbf16>
    %12 = vector.shape_cast %11 : vector<1x4x16xbf16> to vector<4x16xbf16>
    %cst_12 = arith.constant dense<0.000000e+00> : vector<64x16xf32>
    %13 = tpu.matmul %10, %12, %cst_12 {dimension_numbers = #tpu.dot_dimension_numbers<[1], [0], [0], [1], [0, 0, 1, 1], [], []>} : vector<64x4xbf16>, vector<4x16xbf16>, vector<64x16xf32> -> vector<64x16xf32>
    %14 = arith.addf %6, %13 : vector<64x16xf32>
    %c0_13 = arith.constant 0 : index
    %c0_14 = arith.constant 0 : index
    %c1_15 = arith.constant 1 : index
    %c0_16 = arith.constant 0 : index
    %15 = vector.load %arg1[%c0_13, %c0_14, %c1_15, %c0_16] : memref<1x9x9x4xf32, #tpu.memory_space<vmem>>, vector<1x8x8x4xf32>
    %16 = vector.shape_cast %15 : vector<1x8x8x4xf32> to vector<8x8x4xf32>
    %17 = vector.shape_cast %16 : vector<8x8x4xf32> to vector<64x4xf32>
    %18 = arith.truncf %17 : vector<64x4xf32> to vector<64x4xbf16>
    %c2 = arith.constant 2 : index
    %c0_17 = arith.constant 0 : index
    %c0_18 = arith.constant 0 : index
    %19 = vector.load %arg5[%c2, %c0_17, %c0_18] : memref<9x4x16xbf16, #tpu.memory_space<vmem>>, vector<1x4x16xbf16>
    %20 = vector.shape_cast %19 : vector<1x4x16xbf16> to vector<4x16xbf16>
    %cst_19 = arith.constant dense<0.000000e+00> : vector<64x16xf32>
    %21 = tpu.matmul %18, %20, %cst_19 {dimension_numbers = #tpu.dot_dimension_numbers<[1], [0], [0], [1], [0, 0, 1, 1], [], []>} : vector<64x4xbf16>, vector<4x16xbf16>, vector<64x16xf32> -> vector<64x16xf32>
    %22 = arith.addf %14, %21 : vector<64x16xf32>
    %c0_20 = arith.constant 0 : index
    %c0_21 = arith.constant 0 : index
    %c0_22 = arith.constant 0 : index
    %c0_23 = arith.constant 0 : index
    %23 = vector.load %arg3[%c0_20, %c0_21, %c0_22, %c0_23] : memref<1x9x9x4xf32, #tpu.memory_space<vmem>>, vector<1x8x8x4xf32>
    %24 = vector.shape_cast %23 : vector<1x8x8x4xf32> to vector<8x8x4xf32>
    %25 = vector.shape_cast %24 : vector<8x8x4xf32> to vector<64x4xf32>
    %26 = arith.truncf %25 : vector<64x4xf32> to vector<64x4xbf16>
    %c3 = arith.constant 3 : index
    %c0_24 = arith.constant 0 : index
    %c0_25 = arith.constant 0 : index
    %27 = vector.load %arg5[%c3, %c0_24, %c0_25] : memref<9x4x16xbf16, #tpu.memory_space<vmem>>, vector<1x4x16xbf16>
    %28 = vector.shape_cast %27 : vector<1x4x16xbf16> to vector<4x16xbf16>
    %cst_26 = arith.constant dense<0.000000e+00> : vector<64x16xf32>
    %29 = tpu.matmul %26, %28, %cst_26 {dimension_numbers = #tpu.dot_dimension_numbers<[1], [0], [0], [1], [0, 0, 1, 1], [], []>} : vector<64x4xbf16>, vector<4x16xbf16>, vector<64x16xf32> -> vector<64x16xf32>
    %30 = arith.addf %22, %29 : vector<64x16xf32>
    %c0_27 = arith.constant 0 : index
    %c0_28 = arith.constant 0 : index
    %c0_29 = arith.constant 0 : index
    %c0_30 = arith.constant 0 : index
    %31 = vector.load %arg4[%c0_27, %c0_28, %c0_29, %c0_30] : memref<1x9x9x4xf32, #tpu.memory_space<vmem>>, vector<1x8x8x4xf32>
    %32 = vector.shape_cast %31 : vector<1x8x8x4xf32> to vector<8x8x4xf32>
    %33 = vector.shape_cast %32 : vector<8x8x4xf32> to vector<64x4xf32>
    %34 = arith.truncf %33 : vector<64x4xf32> to vector<64x4xbf16>
    %c4 = arith.constant 4 : index
    %c0_31 = arith.constant 0 : index
    %c0_32 = arith.constant 0 : index
    %35 = vector.load %arg5[%c4, %c0_31, %c0_32] : memref<9x4x16xbf16, #tpu.memory_space<vmem>>, vector<1x4x16xbf16>
    %36 = vector.shape_cast %35 : vector<1x4x16xbf16> to vector<4x16xbf16>
    %cst_33 = arith.constant dense<0.000000e+00> : vector<64x16xf32>
    %37 = tpu.matmul %34, %36, %cst_33 {dimension_numbers = #tpu.dot_dimension_numbers<[1], [0], [0], [1], [0, 0, 1, 1], [], []>} : vector<64x4xbf16>, vector<4x16xbf16>, vector<64x16xf32> -> vector<64x16xf32>
    %38 = arith.addf %30, %37 : vector<64x16xf32>
    %c0_34 = arith.constant 0 : index
    %c0_35 = arith.constant 0 : index
    %c1_36 = arith.constant 1 : index
    %c0_37 = arith.constant 0 : index
    %39 = vector.load %arg3[%c0_34, %c0_35, %c1_36, %c0_37] : memref<1x9x9x4xf32, #tpu.memory_space<vmem>>, vector<1x8x8x4xf32>
    %40 = vector.shape_cast %39 : vector<1x8x8x4xf32> to vector<8x8x4xf32>
    %41 = vector.shape_cast %40 : vector<8x8x4xf32> to vector<64x4xf32>
    %42 = arith.truncf %41 : vector<64x4xf32> to vector<64x4xbf16>
    %c5 = arith.constant 5 : index
    %c0_38 = arith.constant 0 : index
    %c0_39 = arith.constant 0 : index
    %43 = vector.load %arg5[%c5, %c0_38, %c0_39] : memref<9x4x16xbf16, #tpu.memory_space<vmem>>, vector<1x4x16xbf16>
    %44 = vector.shape_cast %43 : vector<1x4x16xbf16> to vector<4x16xbf16>
    %cst_40 = arith.constant dense<0.000000e+00> : vector<64x16xf32>
    %45 = tpu.matmul %42, %44, %cst_40 {dimension_numbers = #tpu.dot_dimension_numbers<[1], [0], [0], [1], [0, 0, 1, 1], [], []>} : vector<64x4xbf16>, vector<4x16xbf16>, vector<64x16xf32> -> vector<64x16xf32>
    %46 = arith.addf %38, %45 : vector<64x16xf32>
    %c0_41 = arith.constant 0 : index
    %c1_42 = arith.constant 1 : index
    %c0_43 = arith.constant 0 : index
    %c0_44 = arith.constant 0 : index
    %47 = vector.load %arg1[%c0_41, %c1_42, %c0_43, %c0_44] : memref<1x9x9x4xf32, #tpu.memory_space<vmem>>, vector<1x8x8x4xf32>
    %48 = vector.shape_cast %47 : vector<1x8x8x4xf32> to vector<8x8x4xf32>
    %49 = vector.shape_cast %48 : vector<8x8x4xf32> to vector<64x4xf32>
    %50 = arith.truncf %49 : vector<64x4xf32> to vector<64x4xbf16>
    %c6 = arith.constant 6 : index
    %c0_45 = arith.constant 0 : index
    %c0_46 = arith.constant 0 : index
    %51 = vector.load %arg5[%c6, %c0_45, %c0_46] : memref<9x4x16xbf16, #tpu.memory_space<vmem>>, vector<1x4x16xbf16>
    %52 = vector.shape_cast %51 : vector<1x4x16xbf16> to vector<4x16xbf16>
    %cst_47 = arith.constant dense<0.000000e+00> : vector<64x16xf32>
    %53 = tpu.matmul %50, %52, %cst_47 {dimension_numbers = #tpu.dot_dimension_numbers<[1], [0], [0], [1], [0, 0, 1, 1], [], []>} : vector<64x4xbf16>, vector<4x16xbf16>, vector<64x16xf32> -> vector<64x16xf32>
    %54 = arith.addf %46, %53 : vector<64x16xf32>
    %c0_48 = arith.constant 0 : index
    %c1_49 = arith.constant 1 : index
    %c0_50 = arith.constant 0 : index
    %c0_51 = arith.constant 0 : index
    %55 = vector.load %arg2[%c0_48, %c1_49, %c0_50, %c0_51] : memref<1x9x9x4xf32, #tpu.memory_space<vmem>>, vector<1x8x8x4xf32>
    %56 = vector.shape_cast %55 : vector<1x8x8x4xf32> to vector<8x8x4xf32>
    %57 = vector.shape_cast %56 : vector<8x8x4xf32> to vector<64x4xf32>
    %58 = arith.truncf %57 : vector<64x4xf32> to vector<64x4xbf16>
    %c7 = arith.constant 7 : index
    %c0_52 = arith.constant 0 : index
    %c0_53 = arith.constant 0 : index
    %59 = vector.load %arg5[%c7, %c0_52, %c0_53] : memref<9x4x16xbf16, #tpu.memory_space<vmem>>, vector<1x4x16xbf16>
    %60 = vector.shape_cast %59 : vector<1x4x16xbf16> to vector<4x16xbf16>
    %cst_54 = arith.constant dense<0.000000e+00> : vector<64x16xf32>
    %61 = tpu.matmul %58, %60, %cst_54 {dimension_numbers = #tpu.dot_dimension_numbers<[1], [0], [0], [1], [0, 0, 1, 1], [], []>} : vector<64x4xbf16>, vector<4x16xbf16>, vector<64x16xf32> -> vector<64x16xf32>
    %62 = arith.addf %54, %61 : vector<64x16xf32>
    %c0_55 = arith.constant 0 : index
    %c1_56 = arith.constant 1 : index
    %c1_57 = arith.constant 1 : index
    %c0_58 = arith.constant 0 : index
    %63 = vector.load %arg1[%c0_55, %c1_56, %c1_57, %c0_58] : memref<1x9x9x4xf32, #tpu.memory_space<vmem>>, vector<1x8x8x4xf32>
    %64 = vector.shape_cast %63 : vector<1x8x8x4xf32> to vector<8x8x4xf32>
    %65 = vector.shape_cast %64 : vector<8x8x4xf32> to vector<64x4xf32>
    %66 = arith.truncf %65 : vector<64x4xf32> to vector<64x4xbf16>
    %c8 = arith.constant 8 : index
    %c0_59 = arith.constant 0 : index
    %c0_60 = arith.constant 0 : index
    %67 = vector.load %arg5[%c8, %c0_59, %c0_60] : memref<9x4x16xbf16, #tpu.memory_space<vmem>>, vector<1x4x16xbf16>
    %68 = vector.shape_cast %67 : vector<1x4x16xbf16> to vector<4x16xbf16>
    %cst_61 = arith.constant dense<0.000000e+00> : vector<64x16xf32>
    %69 = tpu.matmul %66, %68, %cst_61 {dimension_numbers = #tpu.dot_dimension_numbers<[1], [0], [0], [1], [0, 0, 1, 1], [], []>} : vector<64x4xbf16>, vector<4x16xbf16>, vector<64x16xf32> -> vector<64x16xf32>
    %70 = arith.addf %62, %69 : vector<64x16xf32>
    %c0_62 = arith.constant 0 : index
    %c0_63 = arith.constant 0 : index
    %71 = vector.load %arg13[%c0_62, %c0_63] : memref<6x16xf32, #tpu.memory_space<vmem>>, vector<1x16xf32>
    %72 = vector.broadcast %71 : vector<1x16xf32> to vector<64x16xf32>
    %73 = arith.addf %70, %72 : vector<64x16xf32>
    %cst_64 = arith.constant 0.000000e+00 : f32
    %74 = vector.broadcast %cst_64 : f32 to vector<64x16xf32>
    %75 = arith.maximumf %73, %74 : vector<64x16xf32>
    %c0_65 = arith.constant 0 : index
    %c0_66 = arith.constant 0 : index
    %c0_67 = arith.constant 0 : index
    %c0_68 = arith.constant 0 : index
    %76 = vector.load %arg4[%c0_65, %c0_66, %c0_67, %c0_68] : memref<1x9x9x4xf32, #tpu.memory_space<vmem>>, vector<1x8x8x4xf32>
    %77 = vector.shape_cast %76 : vector<1x8x8x4xf32> to vector<8x8x4xf32>
    %78 = vector.shape_cast %77 : vector<8x8x4xf32> to vector<64x4xf32>
    %79 = arith.truncf %78 : vector<64x4xf32> to vector<64x4xbf16>
    %c0_69 = arith.constant 0 : index
    %c0_70 = arith.constant 0 : index
    %80 = vector.load %arg6[%c0_69, %c0_70] : memref<4x16xbf16, #tpu.memory_space<vmem>>, vector<4x16xbf16>
    %cst_71 = arith.constant dense<0.000000e+00> : vector<64x16xf32>
    %81 = tpu.matmul %79, %80, %cst_71 {dimension_numbers = #tpu.dot_dimension_numbers<[1], [0], [0], [1], [0, 0, 1, 1], [], []>} : vector<64x4xbf16>, vector<4x16xbf16>, vector<64x16xf32> -> vector<64x16xf32>
    %c1_72 = arith.constant 1 : index
    %c0_73 = arith.constant 0 : index
    %82 = vector.load %arg13[%c1_72, %c0_73] : memref<6x16xf32, #tpu.memory_space<vmem>>, vector<1x16xf32>
    %83 = vector.broadcast %82 : vector<1x16xf32> to vector<64x16xf32>
    %84 = arith.addf %81, %83 : vector<64x16xf32>
    %85 = arith.truncf %75 : vector<64x16xf32> to vector<64x16xbf16>
    %c0_74 = arith.constant 0 : index
    %c0_75 = arith.constant 0 : index
    %86 = vector.load %arg11[%c0_74, %c0_75] : memref<64x64xbf16, #tpu.memory_space<vmem>>, vector<64x64xbf16>
    %cst_76 = arith.constant dense<0.000000e+00> : vector<64x16xf32>
    %87 = tpu.matmul %86, %85, %cst_76 {dimension_numbers = #tpu.dot_dimension_numbers<[1], [0], [0], [1], [0, 0, 1, 1], [], []>} : vector<64x64xbf16>, vector<64x16xbf16>, vector<64x16xf32> -> vector<64x16xf32>
    %88 = arith.truncf %87 : vector<64x16xf32> to vector<64x16xbf16>
    %c0_77 = arith.constant 0 : index
    %c0_78 = arith.constant 0 : index
    %89 = vector.load %arg8[%c0_77, %c0_78] : memref<16x12xbf16, #tpu.memory_space<vmem>>, vector<16x12xbf16>
    %cst_79 = arith.constant dense<0.000000e+00> : vector<64x12xf32>
    %90 = tpu.matmul %88, %89, %cst_79 {dimension_numbers = #tpu.dot_dimension_numbers<[1], [0], [0], [1], [0, 0, 1, 1], [], []>} : vector<64x16xbf16>, vector<16x12xbf16>, vector<64x12xf32> -> vector<64x12xf32>
    %c3_80 = arith.constant 3 : index
    %c0_81 = arith.constant 0 : index
    %91 = vector.load %arg13[%c3_80, %c0_81] : memref<6x16xf32, #tpu.memory_space<vmem>>, vector<1x12xf32>
    %92 = vector.broadcast %91 : vector<1x12xf32> to vector<64x12xf32>
    %93 = arith.addf %90, %92 : vector<64x12xf32>
    %cst_82 = arith.constant 0.000000e+00 : f32
    %94 = vector.broadcast %cst_82 : f32 to vector<64x12xf32>
    %95 = arith.maximumf %93, %94 : vector<64x12xf32>
    %96 = arith.truncf %95 : vector<64x12xf32> to vector<64x12xbf16>
    %c0_83 = arith.constant 0 : index
    %c0_84 = arith.constant 0 : index
    %97 = vector.load %arg10[%c0_83, %c0_84] : memref<12x16xbf16, #tpu.memory_space<vmem>>, vector<12x16xbf16>
    %cst_85 = arith.constant dense<0.000000e+00> : vector<64x16xf32>
    %98 = tpu.matmul %96, %97, %cst_85 {dimension_numbers = #tpu.dot_dimension_numbers<[1], [0], [0], [1], [0, 0, 1, 1], [], []>} : vector<64x12xbf16>, vector<12x16xbf16>, vector<64x16xf32> -> vector<64x16xf32>
    %c0_86 = arith.constant 0 : index
    %c0_87 = arith.constant 0 : index
    %99 = vector.load %arg7[%c0_86, %c0_87] : memref<16x4xbf16, #tpu.memory_space<vmem>>, vector<16x4xbf16>
    %cst_88 = arith.constant dense<0.000000e+00> : vector<64x4xf32>
    %100 = tpu.matmul %85, %99, %cst_88 {dimension_numbers = #tpu.dot_dimension_numbers<[1], [0], [0], [1], [0, 0, 1, 1], [], []>} : vector<64x16xbf16>, vector<16x4xbf16>, vector<64x4xf32> -> vector<64x4xf32>
    %c2_89 = arith.constant 2 : index
    %c0_90 = arith.constant 0 : index
    %101 = vector.load %arg13[%c2_89, %c0_90] : memref<6x16xf32, #tpu.memory_space<vmem>>, vector<1x4xf32>
    %102 = vector.broadcast %101 : vector<1x4xf32> to vector<64x4xf32>
    %103 = arith.addf %100, %102 : vector<64x4xf32>
    %cst_91 = arith.constant 0.000000e+00 : f32
    %104 = vector.broadcast %cst_91 : f32 to vector<64x4xf32>
    %105 = arith.maximumf %103, %104 : vector<64x4xf32>
    %106 = arith.truncf %105 : vector<64x4xf32> to vector<64x4xbf16>
    %c0_92 = arith.constant 0 : index
    %c0_93 = arith.constant 0 : index
    %107 = vector.load %arg9[%c0_92, %c0_93] : memref<4x16xbf16, #tpu.memory_space<vmem>>, vector<4x16xbf16>
    %cst_94 = arith.constant dense<0.000000e+00> : vector<64x16xf32>
    %108 = tpu.matmul %106, %107, %cst_94 {dimension_numbers = #tpu.dot_dimension_numbers<[1], [0], [0], [1], [0, 0, 1, 1], [], []>} : vector<64x4xbf16>, vector<4x16xbf16>, vector<64x16xf32> -> vector<64x16xf32>
    %109 = arith.addf %108, %98 : vector<64x16xf32>
    %c4_95 = arith.constant 4 : index
    %c0_96 = arith.constant 0 : index
    %110 = vector.load %arg13[%c4_95, %c0_96] : memref<6x16xf32, #tpu.memory_space<vmem>>, vector<1x16xf32>
    %111 = vector.broadcast %110 : vector<1x16xf32> to vector<64x16xf32>
    %112 = arith.addf %109, %111 : vector<64x16xf32>
    %cst_97 = arith.constant 0.000000e+00 : f32
    %113 = vector.broadcast %cst_97 : f32 to vector<64x16xf32>
    %114 = arith.maximumf %112, %113 : vector<64x16xf32>
    %cst_98 = arith.constant 0.000000e+00 : f32
    %115 = vector.broadcast %cst_98 : f32 to vector<10x10x16xf32>
    %c0_99 = arith.constant 0 : index
    %c0_100 = arith.constant 0 : index
    %c0_101 = arith.constant 0 : index
    %116 = vector.load %arg15[%c0_99, %c0_100, %c0_101] : memref<10x10x16xf32, #tpu.memory_space<vmem>>, vector<10x10x16xf32>
    tpu.vector_store %arg15[%c0_99, %c0_100, %c0_101], %115 {strides = array<i32>} : memref<10x10x16xf32, #tpu.memory_space<vmem>>, vector<10x10x16xf32>,
    %117 = vector.shape_cast %114 : vector<64x16xf32> to vector<8x8x16xf32>
    %c1_102 = arith.constant 1 : index
    %c1_103 = arith.constant 1 : index
    %c0_104 = arith.constant 0 : index
    %118 = vector.load %arg15[%c1_102, %c1_103, %c0_104] : memref<10x10x16xf32, #tpu.memory_space<vmem>>, vector<8x8x16xf32>
    tpu.vector_store %arg15[%c1_102, %c1_103, %c0_104], %117 {strides = array<i32>} : memref<10x10x16xf32, #tpu.memory_space<vmem>>, vector<8x8x16xf32>,
    %c0_105 = arith.constant 0 : index
    %c0_106 = arith.constant 0 : index
    %c0_107 = arith.constant 0 : index
    %119 = vector.load %arg15[%c0_105, %c0_106, %c0_107] : memref<10x10x16xf32, #tpu.memory_space<vmem>>, vector<8x8x16xf32>
    %120 = vector.shape_cast %119 : vector<8x8x16xf32> to vector<64x16xf32>
    %121 = arith.truncf %120 : vector<64x16xf32> to vector<64x16xbf16>
    %c0_108 = arith.constant 0 : index
    %c0_109 = arith.constant 0 : index
    %c0_110 = arith.constant 0 : index
    %122 = vector.load %arg12[%c0_108, %c0_109, %c0_110] : memref<9x16x16xbf16, #tpu.memory_space<vmem>>, vector<1x16x16xbf16>
    %123 = vector.shape_cast %122 : vector<1x16x16xbf16> to vector<16x16xbf16>
    %cst_111 = arith.constant dense<0.000000e+00> : vector<64x16xf32>
    %124 = tpu.matmul %121, %123, %cst_111 {dimension_numbers = #tpu.dot_dimension_numbers<[1], [0], [0], [1], [0, 0, 1, 1], [], []>} : vector<64x16xbf16>, vector<16x16xbf16>, vector<64x16xf32> -> vector<64x16xf32>
    %c0_112 = arith.constant 0 : index
    %c1_113 = arith.constant 1 : index
    %c0_114 = arith.constant 0 : index
    %125 = vector.load %arg15[%c0_112, %c1_113, %c0_114] : memref<10x10x16xf32, #tpu.memory_space<vmem>>, vector<8x8x16xf32>
    %126 = vector.shape_cast %125 : vector<8x8x16xf32> to vector<64x16xf32>
    %127 = arith.truncf %126 : vector<64x16xf32> to vector<64x16xbf16>
    %c1_115 = arith.constant 1 : index
    %c0_116 = arith.constant 0 : index
    %c0_117 = arith.constant 0 : index
    %128 = vector.load %arg12[%c1_115, %c0_116, %c0_117] : memref<9x16x16xbf16, #tpu.memory_space<vmem>>, vector<1x16x16xbf16>
    %129 = vector.shape_cast %128 : vector<1x16x16xbf16> to vector<16x16xbf16>
    %cst_118 = arith.constant dense<0.000000e+00> : vector<64x16xf32>
    %130 = tpu.matmul %127, %129, %cst_118 {dimension_numbers = #tpu.dot_dimension_numbers<[1], [0], [0], [1], [0, 0, 1, 1], [], []>} : vector<64x16xbf16>, vector<16x16xbf16>, vector<64x16xf32> -> vector<64x16xf32>
    %131 = arith.addf %124, %130 : vector<64x16xf32>
    %c0_119 = arith.constant 0 : index
    %c2_120 = arith.constant 2 : index
    %c0_121 = arith.constant 0 : index
    %132 = vector.load %arg15[%c0_119, %c2_120, %c0_121] : memref<10x10x16xf32, #tpu.memory_space<vmem>>, vector<8x8x16xf32>
    %133 = vector.shape_cast %132 : vector<8x8x16xf32> to vector<64x16xf32>
    %134 = arith.truncf %133 : vector<64x16xf32> to vector<64x16xbf16>
    %c2_122 = arith.constant 2 : index
    %c0_123 = arith.constant 0 : index
    %c0_124 = arith.constant 0 : index
    %135 = vector.load %arg12[%c2_122, %c0_123, %c0_124] : memref<9x16x16xbf16, #tpu.memory_space<vmem>>, vector<1x16x16xbf16>
    %136 = vector.shape_cast %135 : vector<1x16x16xbf16> to vector<16x16xbf16>
    %cst_125 = arith.constant dense<0.000000e+00> : vector<64x16xf32>
    %137 = tpu.matmul %134, %136, %cst_125 {dimension_numbers = #tpu.dot_dimension_numbers<[1], [0], [0], [1], [0, 0, 1, 1], [], []>} : vector<64x16xbf16>, vector<16x16xbf16>, vector<64x16xf32> -> vector<64x16xf32>
    %138 = arith.addf %131, %137 : vector<64x16xf32>
    %c1_126 = arith.constant 1 : index
    %c0_127 = arith.constant 0 : index
    %c0_128 = arith.constant 0 : index
    %139 = vector.load %arg15[%c1_126, %c0_127, %c0_128] : memref<10x10x16xf32, #tpu.memory_space<vmem>>, vector<8x8x16xf32>
    %140 = vector.shape_cast %139 : vector<8x8x16xf32> to vector<64x16xf32>
    %141 = arith.truncf %140 : vector<64x16xf32> to vector<64x16xbf16>
    %c3_129 = arith.constant 3 : index
    %c0_130 = arith.constant 0 : index
    %c0_131 = arith.constant 0 : index
    %142 = vector.load %arg12[%c3_129, %c0_130, %c0_131] : memref<9x16x16xbf16, #tpu.memory_space<vmem>>, vector<1x16x16xbf16>
    %143 = vector.shape_cast %142 : vector<1x16x16xbf16> to vector<16x16xbf16>
    %cst_132 = arith.constant dense<0.000000e+00> : vector<64x16xf32>
    %144 = tpu.matmul %141, %143, %cst_132 {dimension_numbers = #tpu.dot_dimension_numbers<[1], [0], [0], [1], [0, 0, 1, 1], [], []>} : vector<64x16xbf16>, vector<16x16xbf16>, vector<64x16xf32> -> vector<64x16xf32>
    %145 = arith.addf %138, %144 : vector<64x16xf32>
    %c1_133 = arith.constant 1 : index
    %c1_134 = arith.constant 1 : index
    %c0_135 = arith.constant 0 : index
    %146 = vector.load %arg15[%c1_133, %c1_134, %c0_135] : memref<10x10x16xf32, #tpu.memory_space<vmem>>, vector<8x8x16xf32>
    %147 = vector.shape_cast %146 : vector<8x8x16xf32> to vector<64x16xf32>
    %148 = arith.truncf %147 : vector<64x16xf32> to vector<64x16xbf16>
    %c4_136 = arith.constant 4 : index
    %c0_137 = arith.constant 0 : index
    %c0_138 = arith.constant 0 : index
    %149 = vector.load %arg12[%c4_136, %c0_137, %c0_138] : memref<9x16x16xbf16, #tpu.memory_space<vmem>>, vector<1x16x16xbf16>
    %150 = vector.shape_cast %149 : vector<1x16x16xbf16> to vector<16x16xbf16>
    %cst_139 = arith.constant dense<0.000000e+00> : vector<64x16xf32>
    %151 = tpu.matmul %148, %150, %cst_139 {dimension_numbers = #tpu.dot_dimension_numbers<[1], [0], [0], [1], [0, 0, 1, 1], [], []>} : vector<64x16xbf16>, vector<16x16xbf16>, vector<64x16xf32> -> vector<64x16xf32>
    %152 = arith.addf %145, %151 : vector<64x16xf32>
    %c1_140 = arith.constant 1 : index
    %c2_141 = arith.constant 2 : index
    %c0_142 = arith.constant 0 : index
    %153 = vector.load %arg15[%c1_140, %c2_141, %c0_142] : memref<10x10x16xf32, #tpu.memory_space<vmem>>, vector<8x8x16xf32>
    %154 = vector.shape_cast %153 : vector<8x8x16xf32> to vector<64x16xf32>
    %155 = arith.truncf %154 : vector<64x16xf32> to vector<64x16xbf16>
    %c5_143 = arith.constant 5 : index
    %c0_144 = arith.constant 0 : index
    %c0_145 = arith.constant 0 : index
    %156 = vector.load %arg12[%c5_143, %c0_144, %c0_145] : memref<9x16x16xbf16, #tpu.memory_space<vmem>>, vector<1x16x16xbf16>
    %157 = vector.shape_cast %156 : vector<1x16x16xbf16> to vector<16x16xbf16>
    %cst_146 = arith.constant dense<0.000000e+00> : vector<64x16xf32>
    %158 = tpu.matmul %155, %157, %cst_146 {dimension_numbers = #tpu.dot_dimension_numbers<[1], [0], [0], [1], [0, 0, 1, 1], [], []>} : vector<64x16xbf16>, vector<16x16xbf16>, vector<64x16xf32> -> vector<64x16xf32>
    %159 = arith.addf %152, %158 : vector<64x16xf32>
    %c2_147 = arith.constant 2 : index
    %c0_148 = arith.constant 0 : index
    %c0_149 = arith.constant 0 : index
    %160 = vector.load %arg15[%c2_147, %c0_148, %c0_149] : memref<10x10x16xf32, #tpu.memory_space<vmem>>, vector<8x8x16xf32>
    %161 = vector.shape_cast %160 : vector<8x8x16xf32> to vector<64x16xf32>
    %162 = arith.truncf %161 : vector<64x16xf32> to vector<64x16xbf16>
    %c6_150 = arith.constant 6 : index
    %c0_151 = arith.constant 0 : index
    %c0_152 = arith.constant 0 : index
    %163 = vector.load %arg12[%c6_150, %c0_151, %c0_152] : memref<9x16x16xbf16, #tpu.memory_space<vmem>>, vector<1x16x16xbf16>
    %164 = vector.shape_cast %163 : vector<1x16x16xbf16> to vector<16x16xbf16>
    %cst_153 = arith.constant dense<0.000000e+00> : vector<64x16xf32>
    %165 = tpu.matmul %162, %164, %cst_153 {dimension_numbers = #tpu.dot_dimension_numbers<[1], [0], [0], [1], [0, 0, 1, 1], [], []>} : vector<64x16xbf16>, vector<16x16xbf16>, vector<64x16xf32> -> vector<64x16xf32>
    %166 = arith.addf %159, %165 : vector<64x16xf32>
    %c2_154 = arith.constant 2 : index
    %c1_155 = arith.constant 1 : index
    %c0_156 = arith.constant 0 : index
    %167 = vector.load %arg15[%c2_154, %c1_155, %c0_156] : memref<10x10x16xf32, #tpu.memory_space<vmem>>, vector<8x8x16xf32>
    %168 = vector.shape_cast %167 : vector<8x8x16xf32> to vector<64x16xf32>
    %169 = arith.truncf %168 : vector<64x16xf32> to vector<64x16xbf16>
    %c7_157 = arith.constant 7 : index
    %c0_158 = arith.constant 0 : index
    %c0_159 = arith.constant 0 : index
    %170 = vector.load %arg12[%c7_157, %c0_158, %c0_159] : memref<9x16x16xbf16, #tpu.memory_space<vmem>>, vector<1x16x16xbf16>
    %171 = vector.shape_cast %170 : vector<1x16x16xbf16> to vector<16x16xbf16>
    %cst_160 = arith.constant dense<0.000000e+00> : vector<64x16xf32>
    %172 = tpu.matmul %169, %171, %cst_160 {dimension_numbers = #tpu.dot_dimension_numbers<[1], [0], [0], [1], [0, 0, 1, 1], [], []>} : vector<64x16xbf16>, vector<16x16xbf16>, vector<64x16xf32> -> vector<64x16xf32>
    %173 = arith.addf %166, %172 : vector<64x16xf32>
    %c2_161 = arith.constant 2 : index
    %c2_162 = arith.constant 2 : index
    %c0_163 = arith.constant 0 : index
    %174 = vector.load %arg15[%c2_161, %c2_162, %c0_163] : memref<10x10x16xf32, #tpu.memory_space<vmem>>, vector<8x8x16xf32>
    %175 = vector.shape_cast %174 : vector<8x8x16xf32> to vector<64x16xf32>
    %176 = arith.truncf %175 : vector<64x16xf32> to vector<64x16xbf16>
    %c8_164 = arith.constant 8 : index
    %c0_165 = arith.constant 0 : index
    %c0_166 = arith.constant 0 : index
    %177 = vector.load %arg12[%c8_164, %c0_165, %c0_166] : memref<9x16x16xbf16, #tpu.memory_space<vmem>>, vector<1x16x16xbf16>
    %178 = vector.shape_cast %177 : vector<1x16x16xbf16> to vector<16x16xbf16>
    %cst_167 = arith.constant dense<0.000000e+00> : vector<64x16xf32>
    %179 = tpu.matmul %176, %178, %cst_167 {dimension_numbers = #tpu.dot_dimension_numbers<[1], [0], [0], [1], [0, 0, 1, 1], [], []>} : vector<64x16xbf16>, vector<16x16xbf16>, vector<64x16xf32> -> vector<64x16xf32>
    %180 = arith.addf %173, %179 : vector<64x16xf32>
    %c5_168 = arith.constant 5 : index
    %c0_169 = arith.constant 0 : index
    %181 = vector.load %arg13[%c5_168, %c0_169] : memref<6x16xf32, #tpu.memory_space<vmem>>, vector<1x16xf32>
    %182 = vector.broadcast %181 : vector<1x16xf32> to vector<64x16xf32>
    %183 = arith.addf %180, %182 : vector<64x16xf32>
    %184 = arith.addf %183, %84 : vector<64x16xf32>
    %cst_170 = arith.constant 0.000000e+00 : f32
    %185 = vector.broadcast %cst_170 : f32 to vector<64x16xf32>
    %186 = arith.maximumf %184, %185 : vector<64x16xf32>
    %187 = vector.shape_cast %186 : vector<64x16xf32> to vector<8x8x16xf32>
    %c0_171 = arith.constant 0 : index
    %c0_172 = arith.constant 0 : index
    %c0_173 = arith.constant 0 : index
    %c0_174 = arith.constant 0 : index
    %188 = vector.load %arg14[%c0_171, %c0_172, %c0_173, %c0_174] : memref<1x8x8x16xf32, #tpu.memory_space<vmem>>, vector<1x8x8x16xf32>
    %189 = vector.shape_cast %188 : vector<1x8x8x16xf32> to vector<8x8x16xf32>
    %190 = vector.shape_cast %187 : vector<8x8x16xf32> to vector<1x8x8x16xf32>
    tpu.vector_store %arg14[%c0_171, %c0_172, %c0_173, %c0_174], %190 {strides = array<i32>} : memref<1x8x8x16xf32, #tpu.memory_space<vmem>>, vector<1x8x8x16xf32>,
    return
  }
  func.func @transform_0(%arg0: i32) -> (i32, i32, i32, i32) {
    %c0_i32 = arith.constant 0 : i32
    %c0_i32_0 = arith.constant 0 : i32
    %c0_i32_1 = arith.constant 0 : i32
    %c0_i32_2 = arith.constant 0 : i32
    return %arg0, %c0_i32, %c0_i32_0, %c0_i32_1 : i32, i32, i32, i32
  }
  func.func @transform_1(%arg0: i32) -> (i32, i32, i32, i32) {
    %c0_i32 = arith.constant 0 : i32
    %c0_i32_0 = arith.constant 0 : i32
    %c0_i32_1 = arith.constant 0 : i32
    %c0_i32_2 = arith.constant 0 : i32
    return %arg0, %c0_i32, %c0_i32_0, %c0_i32_1 : i32, i32, i32, i32
  }
  func.func @transform_2(%arg0: i32) -> (i32, i32, i32, i32) {
    %c0_i32 = arith.constant 0 : i32
    %c0_i32_0 = arith.constant 0 : i32
    %c0_i32_1 = arith.constant 0 : i32
    %c0_i32_2 = arith.constant 0 : i32
    return %arg0, %c0_i32, %c0_i32_0, %c0_i32_1 : i32, i32, i32, i32
  }
  func.func @transform_3(%arg0: i32) -> (i32, i32, i32, i32) {
    %c0_i32 = arith.constant 0 : i32
    %c0_i32_0 = arith.constant 0 : i32
    %c0_i32_1 = arith.constant 0 : i32
    %c0_i32_2 = arith.constant 0 : i32
    return %arg0, %c0_i32, %c0_i32_0, %c0_i32_1 : i32, i32, i32, i32
  }
  func.func @transform_4(%arg0: i32) -> (i32, i32, i32) {
    %c0_i32 = arith.constant 0 : i32
    %c0_i32_0 = arith.constant 0 : i32
    %c0_i32_1 = arith.constant 0 : i32
    %c0_i32_2 = arith.constant 0 : i32
    return %c0_i32, %c0_i32_0, %c0_i32_1 : i32, i32, i32
  }
  func.func @transform_5(%arg0: i32) -> (i32, i32) {
    %c0_i32 = arith.constant 0 : i32
    %c0_i32_0 = arith.constant 0 : i32
    %c0_i32_1 = arith.constant 0 : i32
    return %c0_i32, %c0_i32_0 : i32, i32
  }
  func.func @transform_6(%arg0: i32) -> (i32, i32) {
    %c0_i32 = arith.constant 0 : i32
    %c0_i32_0 = arith.constant 0 : i32
    %c0_i32_1 = arith.constant 0 : i32
    return %c0_i32, %c0_i32_0 : i32, i32
  }
  func.func @transform_7(%arg0: i32) -> (i32, i32) {
    %c0_i32 = arith.constant 0 : i32
    %c0_i32_0 = arith.constant 0 : i32
    %c0_i32_1 = arith.constant 0 : i32
    return %c0_i32, %c0_i32_0 : i32, i32
  }
  func.func @transform_8(%arg0: i32) -> (i32, i32) {
    %c0_i32 = arith.constant 0 : i32
    %c0_i32_0 = arith.constant 0 : i32
    %c0_i32_1 = arith.constant 0 : i32
    return %c0_i32, %c0_i32_0 : i32, i32
  }
  func.func @transform_9(%arg0: i32) -> (i32, i32) {
    %c0_i32 = arith.constant 0 : i32
    %c0_i32_0 = arith.constant 0 : i32
    %c0_i32_1 = arith.constant 0 : i32
    return %c0_i32, %c0_i32_0 : i32, i32
  }
  func.func @transform_10(%arg0: i32) -> (i32, i32) {
    %c0_i32 = arith.constant 0 : i32
    %c0_i32_0 = arith.constant 0 : i32
    %c0_i32_1 = arith.constant 0 : i32
    return %c0_i32, %c0_i32_0 : i32, i32
  }
  func.func @transform_11(%arg0: i32) -> (i32, i32, i32) {
    %c0_i32 = arith.constant 0 : i32
    %c0_i32_0 = arith.constant 0 : i32
    %c0_i32_1 = arith.constant 0 : i32
    %c0_i32_2 = arith.constant 0 : i32
    return %c0_i32, %c0_i32_0, %c0_i32_1 : i32, i32, i32
  }
  func.func @transform_12(%arg0: i32) -> (i32, i32) {
    %c0_i32 = arith.constant 0 : i32
    %c0_i32_0 = arith.constant 0 : i32
    %c0_i32_1 = arith.constant 0 : i32
    return %c0_i32, %c0_i32_0 : i32, i32
  }
  func.func @transform_13(%arg0: i32) -> (i32, i32, i32, i32) {
    %c0_i32 = arith.constant 0 : i32
    %c0_i32_0 = arith.constant 0 : i32
    %c0_i32_1 = arith.constant 0 : i32
    %c0_i32_2 = arith.constant 0 : i32
    return %arg0, %c0_i32, %c0_i32_0, %c0_i32_1 : i32, i32, i32, i32
  }
}

</mosaic_0001>

<llo_original>
// kernel: block_forward.1
$region0: #{block_forward.1}
  #allocation0 [shape = 'u32[]', space=smem, size = 0x4, offset = 0x4, fixed_abs, tag = 'smem constant byte address 0x4 - core index']
  #allocation1 [shape = 'u32[144,128]{1,0:T(1,128)}', space=vmem, size = 0x12000, scoped, tag = 'internal scratch']
  #allocation2 [shape = 'f32[10,10,16]{2,1,0:T(8,128)}', space=vmem, size = 0x14000, scoped, tag = 'scratch operand']
  %s0 = inlined_call_operand.vmem [shape: f32[2,9,9,4], index: 0, kind: input, shape index: {}]
  %s1 = inlined_call_operand.vmem [shape: f32[2,9,9,4], index: 1, kind: input, shape index: {}]
  %s2 = inlined_call_operand.vmem [shape: f32[2,9,9,4], index: 2, kind: input, shape index: {}]
  %s3 = inlined_call_operand.vmem [shape: f32[2,9,9,4], index: 3, kind: input, shape index: {}]
  %s4 = inlined_call_operand.vmem [shape: bf16[9,4,16], index: 4, kind: input, shape index: {}]
  %s5 = inlined_call_operand.vmem [shape: bf16[4,16], index: 5, kind: input, shape index: {}]
  %s6 = inlined_call_operand.vmem [shape: bf16[16,4], index: 6, kind: input, shape index: {}]
  %s7 = inlined_call_operand.vmem [shape: bf16[16,12], index: 7, kind: input, shape index: {}]
  %s8 = inlined_call_operand.vmem [shape: bf16[4,16], index: 8, kind: input, shape index: {}]
  %s9 = inlined_call_operand.vmem [shape: bf16[12,16], index: 9, kind: input, shape index: {}]
  %s10 = inlined_call_operand.vmem [shape: bf16[64,64], index: 10, kind: input, shape index: {}]
  %s11 = inlined_call_operand.vmem [shape: bf16[9,16,16], index: 11, kind: input, shape index: {}]
  %s12 = inlined_call_operand.vmem [shape: f32[6,16], index: 12, kind: input, shape index: {}]
  %s13 = inlined_call_operand.hbm [shape: f32[2,8,8,16], index: 13, kind: output, shape index: {}]
  %s14 = sld [smem:[#allocation0]]
  $region85: #{block_forward.1} parent=0
    _
  %s16 = ssub.s32 1, %s14
  %s17 = scalar_select 0, %s16, %s14
  $region1: #{block_forward.1} parent=0
    #allocation3 [shape = 'u8[65536]{0}', space=vmem, size = 0x10000, scoped, tag = 'output window, operand 0']
    #allocation4 [shape = 's32[2]{0}', space=sflag, size = 0x8, scoped, tag = 'scoped memory for block_forward.1']
    %18 = vsyncpa [#allocation4], 0
    %s19 = scalar_lea.sflag [#allocation4], 1
    %20 = vsyncpa %s19, 0
    loop: start=0, step=1, limit=4
    $region2: #{block_forward.1} parent=1 // loop_pre_header
      _
    $region3: #{block_forward.1} parent=1 // loop_header
      %s22 = sphi 0, %s26
      %p23 = scmp.ge.s32.totalorder %s22, 4
      %s32 = sphi 0, %s34
      %s35 = sphi 0, %s32
      %s36 = sphi 0, %s35
      %s52 = sphi 0, %s36
      %s58 = sphi 0, %s60
      %s61 = sphi 0, %s58
      %s62 = sphi 0, %s61
      %s78 = sphi 0, %s62
      %s84 = sphi 0, %s86
      %s87 = sphi 0, %s84
      %s88 = sphi 0, %s87
      %s104 = sphi 0, %s88
      %s110 = sphi 0, %s112
      %s113 = sphi 0, %s110
      %s114 = sphi 0, %s113
      %s130 = sphi 0, %s114
      %s134 = sphi 0, %s134
      %s136 = sphi 0, %s134
      %s137 = sphi 0, %s136
      %s151 = sphi 0, %s137
      %s155 = sphi 0, %s155
      %s157 = sphi 0, %s155
      %s158 = sphi 0, %s157
      %s172 = sphi 0, %s158
      %s176 = sphi 0, %s176
      %s178 = sphi 0, %s176
      %s179 = sphi 0, %s178
      %s193 = sphi 0, %s179
      %s197 = sphi 0, %s197
      %s199 = sphi 0, %s197
      %s200 = sphi 0, %s199
      %s214 = sphi 0, %s200
      %s218 = sphi 0, %s218
      %s220 = sphi 0, %s218
      %s221 = sphi 0, %s220
      %s235 = sphi 0, %s221
      %s239 = sphi 0, %s239
      %s241 = sphi 0, %s239
      %s242 = sphi 0, %s241
      %s256 = sphi 0, %s242
      %s260 = sphi 0, %s260
      %s262 = sphi 0, %s260
      %s263 = sphi 0, %s262
      %s277 = sphi 0, %s263
      %s281 = sphi 0, %s281
      %s283 = sphi 0, %s281
      %s284 = sphi 0, %s283
      %s298 = sphi 0, %s284
      %s302 = sphi 0, %s302
      %s304 = sphi 0, %s302
      %s305 = sphi 0, %s304
      %s319 = sphi 0, %s305
      %s325 = sphi 0, %s327
      %s328 = sphi 0, %s325
      %s329 = sphi 0, %s328
      %s345 = sphi 0, %s329
    $region4: #{block_forward.1} parent=1 // loop_header_branch
      %25 = sbr.rel (%p23) target = $region8
    $region5: #{block_forward.1} parent=1 // loop_body
      %s27 = ssub.s32 %s22, 1
      %s28 = ssub.s32 %s22, 2
      %s29 = sadd.s32 %s22, 1
      %s30 = ssub.s32 %s22, %s29
      %p31 = scmp.eq.s32.totalorder %s30, 0
      %s33 = sadd.s32 %s32, 1
      %s34 = scalar_select %p31, %s32, %s33
      %p37 = pneg %p31
      %p38 = scmp.eq.s32.totalorder %s22, 1
      %p39 = por %p37, %p38
      %p40 = scmp.ne.s32.totalorder %s32, %s35
      %p41 = scmp.eq.s32.totalorder %s22, 0
      %p42 = por %p40, %p41
      %p43 = scmp.ne.s32.totalorder %s32, %s35
      %p44 = scmp.eq.s32.totalorder %s27, 1
      %p45 = por %p43, %p44
      %p46 = scmp.ne.s32.totalorder %s35, %s36
      %p47 = scmp.eq.s32.totalorder %s27, 0
      %p48 = por %p46, %p47
      %p49 = scmp.ne.s32.totalorder %s35, %s36
      %p50 = scmp.eq.s32.totalorder %s28, 1
      %p51 = por %p49, %p50
      %p53 = scmp.ne.s32.totalorder %s36, %s52
      %p54 = scmp.eq.s32.totalorder %s28, 0
      %p55 = por %p53, %p54
      %s56 = ssub.s32 %s22, %s29
      %p57 = scmp.eq.s32.totalorder %s56, 0
      %s59 = sadd.s32 %s58, 1
      %s60 = scalar_select %p57, %s58, %s59
      %p63 = pneg %p57
      %p64 = scmp.eq.s32.totalorder %s22, 1
      %p65 = por %p63, %p64
      %p66 = scmp.ne.s32.totalorder %s58, %s61
      %p67 = scmp.eq.s32.totalorder %s22, 0
      %p68 = por %p66, %p67
      %p69 = scmp.ne.s32.totalorder %s58, %s61
      %p70 = scmp.eq.s32.totalorder %s27, 1
      %p71 = por %p69, %p70
      %p72 = scmp.ne.s32.totalorder %s61, %s62
      %p73 = scmp.eq.s32.totalorder %s27, 0
      %p74 = por %p72, %p73
      %p75 = scmp.ne.s32.totalorder %s61, %s62
      %p76 = scmp.eq.s32.totalorder %s28, 1
      %p77 = por %p75, %p76
      %p79 = scmp.ne.s32.totalorder %s62, %s78
      %p80 = scmp.eq.s32.totalorder %s28, 0
      %p81 = por %p79, %p80
      %s82 = ssub.s32 %s22, %s29
      %p83 = scmp.eq.s32.totalorder %s82, 0
      %s85 = sadd.s32 %s84, 1
      %s86 = scalar_select %p83, %s84, %s85
      %p89 = pneg %p83
      %p90 = scmp.eq.s32.totalorder %s22, 1
      %p91 = por %p89, %p90
      %p92 = scmp.ne.s32.totalorder %s84, %s87
      %p93 = scmp.eq.s32.totalorder %s22, 0
      %p94 = por %p92, %p93
      %p95 = scmp.ne.s32.totalorder %s84, %s87
      %p96 = scmp.eq.s32.totalorder %s27, 1
      %p97 = por %p95, %p96
      %p98 = scmp.ne.s32.totalorder %s87, %s88
      %p99 = scmp.eq.s32.totalorder %s27, 0
      %p100 = por %p98, %p99
      %p101 = scmp.ne.s32.totalorder %s87, %s88
      %p102 = scmp.eq.s32.totalorder %s28, 1
      %p103 = por %p101, %p102
      %p105 = scmp.ne.s32.totalorder %s88, %s104
      %p106 = scmp.eq.s32.totalorder %s28, 0
      %p107 = por %p105, %p106
      %s108 = ssub.s32 %s22, %s29
      %p109 = scmp.eq.s32.totalorder %s108, 0
      %s111 = sadd.s32 %s110, 1
      %s112 = scalar_select %p109, %s110, %s111
      %p115 = pneg %p109
      %p116 = scmp.eq.s32.totalorder %s22, 1
      %p117 = por %p115, %p116
      %p118 = scmp.ne.s32.totalorder %s110, %s113
      %p119 = scmp.eq.s32.totalorder %s22, 0
      %p120 = por %p118, %p119
      %p121 = scmp.ne.s32.totalorder %s110, %s113
      %p122 = scmp.eq.s32.totalorder %s27, 1
      %p123 = por %p121, %p122
      %p124 = scmp.ne.s32.totalorder %s113, %s114
      %p125 = scmp.eq.s32.totalorder %s27, 0
      %p126 = por %p124, %p125
      %p127 = scmp.ne.s32.totalorder %s113, %s114
      %p128 = scmp.eq.s32.totalorder %s28, 1
      %p129 = por %p127, %p128
      %p131 = scmp.ne.s32.totalorder %s114, %s130
      %p132 = scmp.eq.s32.totalorder %s28, 0
      %p133 = por %p131, %p132
      %s135 = sadd.s32 %s134, 1
      %p138 = scmp.eq.s32.totalorder %s22, 1
      %p139 = scmp.ne.s32.totalorder %s134, %s136
      %p140 = scmp.eq.s32.totalorder %s22, 0
      %p141 = por %p139, %p140
      %p142 = scmp.ne.s32.totalorder %s134, %s136
      %p143 = scmp.eq.s32.totalorder %s27, 1
      %p144 = por %p142, %p143
      %p145 = scmp.ne.s32.totalorder %s136, %s137
      %p146 = scmp.eq.s32.totalorder %s27, 0
      %p147 = por %p145, %p146
      %p148 = scmp.ne.s32.totalorder %s136, %s137
      %p149 = scmp.eq.s32.totalorder %s28, 1
      %p150 = por %p148, %p149
      %p152 = scmp.ne.s32.totalorder %s137, %s151
      %p153 = scmp.eq.s32.totalorder %s28, 0
      %p154 = por %p152, %p153
      %s156 = sadd.s32 %s155, 1
      %p159 = scmp.eq.s32.totalorder %s22, 1
      %p160 = scmp.ne.s32.totalorder %s155, %s157
      %p161 = scmp.eq.s32.totalorder %s22, 0
      %p162 = por %p160, %p161
      %p163 = scmp.ne.s32.totalorder %s155, %s157
      %p164 = scmp.eq.s32.totalorder %s27, 1
      %p165 = por %p163, %p164
      %p166 = scmp.ne.s32.totalorder %s157, %s158
      %p167 = scmp.eq.s32.totalorder %s27, 0
      %p168 = por %p166, %p167
      %p169 = scmp.ne.s32.totalorder %s157, %s158
      %p170 = scmp.eq.s32.totalorder %s28, 1
      %p171 = por %p169, %p170
      %p173 = scmp.ne.s32.totalorder %s158, %s172
      %p174 = scmp.eq.s32.totalorder %s28, 0
      %p175 = por %p173, %p174
      %s177 = sadd.s32 %s176, 1
      %p180 = scmp.eq.s32.totalorder %s22, 1
      %p181 = scmp.ne.s32.totalorder %s176, %s178
      %p182 = scmp.eq.s32.totalorder %s22, 0
      %p183 = por %p181, %p182
      %p184 = scmp.ne.s32.totalorder %s176, %s178
      %p185 = scmp.eq.s32.totalorder %s27, 1
      %p186 = por %p184, %p185
      %p187 = scmp.ne.s32.totalorder %s178, %s179
      %p188 = scmp.eq.s32.totalorder %s27, 0
      %p189 = por %p187, %p188
      %p190 = scmp.ne.s32.totalorder %s178, %s179
      %p191 = scmp.eq.s32.totalorder %s28, 1
      %p192 = por %p190, %p191
      %p194 = scmp.ne.s32.totalorder %s179, %s193
      %p195 = scmp.eq.s32.totalorder %s28, 0
      %p196 = por %p194, %p195
      %s198 = sadd.s32 %s197, 1
      %p201 = scmp.eq.s32.totalorder %s22, 1
      %p202 = scmp.ne.s32.totalorder %s197, %s199
      %p203 = scmp.eq.s32.totalorder %s22, 0
      %p204 = por %p202, %p203
      %p205 = scmp.ne.s32.totalorder %s197, %s199
      %p206 = scmp.eq.s32.totalorder %s27, 1
      %p207 = por %p205, %p206
      %p208 = scmp.ne.s32.totalorder %s199, %s200
      %p209 = scmp.eq.s32.totalorder %s27, 0
      %p210 = por %p208, %p209
      %p211 = scmp.ne.s32.totalorder %s199, %s200
      %p212 = scmp.eq.s32.totalorder %s28, 1
      %p213 = por %p211, %p212
      %p215 = scmp.ne.s32.totalorder %s200, %s214
      %p216 = scmp.eq.s32.totalorder %s28, 0
      %p217 = por %p215, %p216
      %s219 = sadd.s32 %s218, 1
      %p222 = scmp.eq.s32.totalorder %s22, 1
      %p223 = scmp.ne.s32.totalorder %s218, %s220
      %p224 = scmp.eq.s32.totalorder %s22, 0
      %p225 = por %p223, %p224
      %p226 = scmp.ne.s32.totalorder %s218, %s220
      %p227 = scmp.eq.s32.totalorder %s27, 1
      %p228 = por %p226, %p227
      %p229 = scmp.ne.s32.totalorder %s220, %s221
      %p230 = scmp.eq.s32.totalorder %s27, 0
      %p231 = por %p229, %p230
      %p232 = scmp.ne.s32.totalorder %s220, %s221
      %p233 = scmp.eq.s32.totalorder %s28, 1
      %p234 = por %p232, %p233
      %p236 = scmp.ne.s32.totalorder %s221, %s235
      %p237 = scmp.eq.s32.totalorder %s28, 0
      %p238 = por %p236, %p237
      %s240 = sadd.s32 %s239, 1
      %p243 = scmp.eq.s32.totalorder %s22, 1
      %p244 = scmp.ne.s32.totalorder %s239, %s241
      %p245 = scmp.eq.s32.totalorder %s22, 0
      %p246 = por %p244, %p245
      %p247 = scmp.ne.s32.totalorder %s239, %s241
      %p248 = scmp.eq.s32.totalorder %s27, 1
      %p249 = por %p247, %p248
      %p250 = scmp.ne.s32.totalorder %s241, %s242
      %p251 = scmp.eq.s32.totalorder %s27, 0
      %p252 = por %p250, %p251
      %p253 = scmp.ne.s32.totalorder %s241, %s242
      %p254 = scmp.eq.s32.totalorder %s28, 1
      %p255 = por %p253, %p254
      %p257 = scmp.ne.s32.totalorder %s242, %s256
      %p258 = scmp.eq.s32.totalorder %s28, 0
      %p259 = por %p257, %p258
      %s261 = sadd.s32 %s260, 1
      %p264 = scmp.eq.s32.totalorder %s22, 1
      %p265 = scmp.ne.s32.totalorder %s260, %s262
      %p266 = scmp.eq.s32.totalorder %s22, 0
      %p267 = por %p265, %p266
      %p268 = scmp.ne.s32.totalorder %s260, %s262
      %p269 = scmp.eq.s32.totalorder %s27, 1
      %p270 = por %p268, %p269
      %p271 = scmp.ne.s32.totalorder %s262, %s263
      %p272 = scmp.eq.s32.totalorder %s27, 0
      %p273 = por %p271, %p272
      %p274 = scmp.ne.s32.totalorder %s262, %s263
      %p275 = scmp.eq.s32.totalorder %s28, 1
      %p276 = por %p274, %p275
      %p278 = scmp.ne.s32.totalorder %s263, %s277
      %p279 = scmp.eq.s32.totalorder %s28, 0
      %p280 = por %p278, %p279
      %s282 = sadd.s32 %s281, 1
      %p285 = scmp.eq.s32.totalorder %s22, 1
      %p286 = scmp.ne.s32.totalorder %s281, %s283
      %p287 = scmp.eq.s32.totalorder %s22, 0
      %p288 = por %p286, %p287
      %p289 = scmp.ne.s32.totalorder %s281, %s283
      %p290 = scmp.eq.s32.totalorder %s27, 1
      %p291 = por %p289, %p290
      %p292 = scmp.ne.s32.totalorder %s283, %s284
      %p293 = scmp.eq.s32.totalorder %s27, 0
      %p294 = por %p292, %p293
      %p295 = scmp.ne.s32.totalorder %s283, %s284
      %p296 = scmp.eq.s32.totalorder %s28, 1
      %p297 = por %p295, %p296
      %p299 = scmp.ne.s32.totalorder %s284, %s298
      %p300 = scmp.eq.s32.totalorder %s28, 0
      %p301 = por %p299, %p300
      %s303 = sadd.s32 %s302, 1
      %p306 = scmp.eq.s32.totalorder %s22, 1
      %p307 = scmp.ne.s32.totalorder %s302, %s304
      %p308 = scmp.eq.s32.totalorder %s22, 0
      %p309 = por %p307, %p308
      %p310 = scmp.ne.s32.totalorder %s302, %s304
      %p311 = scmp.eq.s32.totalorder %s27, 1
      %p312 = por %p310, %p311
      %p313 = scmp.ne.s32.totalorder %s304, %s305
      %p314 = scmp.eq.s32.totalorder %s27, 0
      %p315 = por %p313, %p314
      %p316 = scmp.ne.s32.totalorder %s304, %s305
      %p317 = scmp.eq.s32.totalorder %s28, 1
      %p318 = por %p316, %p317
      %p320 = scmp.ne.s32.totalorder %s305, %s319
      %p321 = scmp.eq.s32.totalorder %s28, 0
      %p322 = por %p320, %p321
      %s323 = ssub.s32 %s22, %s29
      %p324 = scmp.eq.s32.totalorder %s323, 0
      %s326 = sadd.s32 %s325, 1
      %s327 = scalar_select %p324, %s325, %s326
      %p330 = pneg %p324
      %p331 = scmp.eq.s32.totalorder %s22, 1
      %p332 = por %p330, %p331
      %p333 = scmp.ne.s32.totalorder %s325, %s328
      %p334 = scmp.eq.s32.totalorder %s22, 0
      %p335 = por %p333, %p334
      %p336 = scmp.ne.s32.totalorder %s325, %s328
      %p337 = scmp.eq.s32.totalorder %s27, 1
      %p338 = por %p336, %p337
      %p339 = scmp.ne.s32.totalorder %s328, %s329
      %p340 = scmp.eq.s32.totalorder %s27, 0
      %p341 = por %p339, %p340
      %p342 = scmp.ne.s32.totalorder %s328, %s329
      %p343 = scmp.eq.s32.totalorder %s28, 1
      %p344 = por %p342, %p343
      %p346 = scmp.ne.s32.totalorder %s329, %s345
      %p347 = scmp.eq.s32.totalorder %s28, 0
      %p348 = por %p346, %p347
      %p349 = scmp.le.s32.totalorder 1, %s22
      %p350 = scmp.lt.s32.totalorder %s22, 3
      %p351 = pnand %p349, %p350
      %p352 = pneg %p351
      // Predicated region
      $region9: #{block_forward.1} parent=5 // pred_check
        _
      $region10: #{block_forward.1} parent=5 // pred_check_branch
        %354 = sbr.rel (%p351) target = $region12
      $region11: #{block_forward.1} parent=5 // pred_region
        %s355 = ssub.s32 %s22, 1
        // Predicated region
        $region13: #{block_forward.1} parent=11 // pred_check
          %p356 = pneg %p147
        $region14: #{block_forward.1} parent=11 // pred_check_branch
          %358 = sbr.rel (%p356) target = $region16
        $region15: #{block_forward.1} parent=11 // pred_region
          _
        $region16: #{block_forward.1} parent=11 // pred_fallthru
          _
        // Predicated region
        $region17: #{block_forward.1} parent=11 // pred_check
          %p359 = pneg %p168
        $region18: #{block_forward.1} parent=11 // pred_check_branch
          %361 = sbr.rel (%p359) target = $region20
        $region19: #{block_forward.1} parent=11 // pred_region
          _
        $region20: #{block_forward.1} parent=11 // pred_fallthru
          _
        // Predicated region
        $region21: #{block_forward.1} parent=11 // pred_check
          %p362 = pneg %p189
        $region22: #{block_forward.1} parent=11 // pred_check_branch
          %364 = sbr.rel (%p362) target = $region24
        $region23: #{block_forward.1} parent=11 // pred_region
          _
        $region24: #{block_forward.1} parent=11 // pred_fallthru
          _
        // Predicated region
        $region25: #{block_forward.1} parent=11 // pred_check
          %p365 = pneg %p210
        $region26: #{block_forward.1} parent=11 // pred_check_branch
          %367 = sbr.rel (%p365) target = $region28
        $region27: #{block_forward.1} parent=11 // pred_region
          _
        $region28: #{block_forward.1} parent=11 // pred_fallthru
          _
        // Predicated region
        $region29: #{block_forward.1} parent=11 // pred_check
          %p368 = pneg %p231
        $region30: #{block_forward.1} parent=11 // pred_check_branch
          %370 = sbr.rel (%p368) target = $region32
        $region31: #{block_forward.1} parent=11 // pred_region
          _
        $region32: #{block_forward.1} parent=11 // pred_fallthru
          _
        // Predicated region
        $region33: #{block_forward.1} parent=11 // pred_check
          %p371 = pneg %p252
        $region34: #{block_forward.1} parent=11 // pred_check_branch
          %373 = sbr.rel (%p371) target = $region36
        $region35: #{block_forward.1} parent=11 // pred_region
          _
        $region36: #{block_forward.1} parent=11 // pred_fallthru
          _
        // Predicated region
        $region37: #{block_forward.1} parent=11 // pred_check
          %p374 = pneg %p273
        $region38: #{block_forward.1} parent=11 // pred_check_branch
          %376 = sbr.rel (%p374) target = $region40
        $region39: #{block_forward.1} parent=11 // pred_region
          _
        $region40: #{block_forward.1} parent=11 // pred_fallthru
          _
        // Predicated region
        $region41: #{block_forward.1} parent=11 // pred_check
          %p377 = pneg %p294
        $region42: #{block_forward.1} parent=11 // pred_check_branch
          %379 = sbr.rel (%p377) target = $region44
        $region43: #{block_forward.1} parent=11 // pred_region
          _
        $region44: #{block_forward.1} parent=11 // pred_fallthru
          _
        // Predicated region
        $region45: #{block_forward.1} parent=11 // pred_check
          %p380 = pneg %p315
        $region46: #{block_forward.1} parent=11 // pred_check_branch
          %382 = sbr.rel (%p380) target = $region48
        $region47: #{block_forward.1} parent=11 // pred_region
          _
        $region48: #{block_forward.1} parent=11 // pred_fallthru
          _
      $region12: #{block_forward.1} parent=5 // pred_fallthru
        _
      %p383 = scmp.lt.s32.totalorder %s22, 2
      // Predicated region
      $region49: #{block_forward.1} parent=5 // pred_check
        %p384 = pneg %p383
      $region50: #{block_forward.1} parent=5 // pred_check_branch
        %386 = sbr.rel (%p384) target = $region52
      $region51: #{block_forward.1} parent=5 // pred_region
        // Predicated region
        $region53: #{block_forward.1} parent=51 // pred_check
          %p387 = pneg %p42
        $region54: #{block_forward.1} parent=51 // pred_check_branch
          %389 = sbr.rel (%p387) target = $region56
        $region55: #{block_forward.1} parent=51 // pred_region
          %p390 = scmp.lt.s32.totalorder %s22, 1
          %s391 = scalar_select %p390, %s22, 1
          %s392 = smul.addr %s391, 18
          %s393 = smul.addr %s392, 8
          %s394 = scalar_lea.vmem %s0, %s393
        $region56: #{block_forward.1} parent=51 // pred_fallthru
          _
        // Predicated region
        $region57: #{block_forward.1} parent=51 // pred_check
          %p395 = pneg %p68
        $region58: #{block_forward.1} parent=51 // pred_check_branch
          %397 = sbr.rel (%p395) target = $region60
        $region59: #{block_forward.1} parent=51 // pred_region
          %p398 = scmp.lt.s32.totalorder %s22, 1
          %s399 = scalar_select %p398, %s22, 1
          %s400 = smul.addr %s399, 18
          %s401 = smul.addr %s400, 8
          %s402 = scalar_lea.vmem %s1, %s401
        $region60: #{block_forward.1} parent=51 // pred_fallthru
          _
        // Predicated region
        $region61: #{block_forward.1} parent=51 // pred_check
          %p403 = pneg %p94
        $region62: #{block_forward.1} parent=51 // pred_check_branch
          %405 = sbr.rel (%p403) target = $region64
        $region63: #{block_forward.1} parent=51 // pred_region
          %p406 = scmp.lt.s32.totalorder %s22, 1
          %s407 = scalar_select %p406, %s22, 1
          %s408 = smul.addr %s407, 18
          %s409 = smul.addr %s408, 8
          %s410 = scalar_lea.vmem %s2, %s409
        $region64: #{block_forward.1} parent=51 // pred_fallthru
          _
        // Predicated region
        $region65: #{block_forward.1} parent=51 // pred_check
          %p411 = pneg %p120
        $region66: #{block_forward.1} parent=51 // pred_check_branch
          %413 = sbr.rel (%p411) target = $region68
        $region67: #{block_forward.1} parent=51 // pred_region
          %p414 = scmp.lt.s32.totalorder %s22, 1
          %s415 = scalar_select %p414, %s22, 1
          %s416 = smul.addr %s415, 18
          %s417 = smul.addr %s416, 8
          %s418 = scalar_lea.vmem %s3, %s417
        $region68: #{block_forward.1} parent=51 // pred_fallthru
          _
      $region52: #{block_forward.1} parent=5 // pred_fallthru
        _
      %p419 = scmp.le.s32.totalorder 1, %s22
      %p420 = scmp.lt.s32.totalorder %s22, 3
      %p421 = pnand %p419, %p420
      %p422 = pneg %p421
      // Predicated region
      $region69: #{block_forward.1} parent=5 // pred_check
        _
      $region70: #{block_forward.1} parent=5 // pred_check_branch
        %424 = sbr.rel (%p421) target = $region72
      $region71: #{block_forward.1} parent=5 // pred_region
        %s425 = ssub.s32 %s22, 1
        %p426 = scmp.lt.s32.totalorder %s27, 1
        %s427 = scalar_select %p426, %s27, 1
        %s428 = smul.addr %s427, 18
        %s429 = smul.addr %s428, 8
        %s430 = scalar_lea.vmem %s0, %s429
        %p431 = pneg %p48
        %p432 = pneg %p45
        %p433 = scmp.lt.s32.totalorder %s27, 1
        %s434 = scalar_select %p433, %s27, 1
        %s435 = smul.addr %s434, 18
        %s436 = smul.addr %s435, 8
        %s437 = scalar_lea.vmem %s1, %s436
        %p438 = pneg %p74
        %p439 = pneg %p71
        %p440 = scmp.lt.s32.totalorder %s27, 1
        %s441 = scalar_select %p440, %s27, 1
        %s442 = smul.addr %s441, 18
        %s443 = smul.addr %s442, 8
        %s444 = scalar_lea.vmem %s2, %s443
        %p445 = pneg %p100
        %p446 = pneg %p97
        %p447 = scmp.lt.s32.totalorder %s27, 1
        %s448 = scalar_select %p447, %s27, 1
        %s449 = smul.addr %s448, 18
        %s450 = smul.addr %s449, 8
        %s451 = scalar_lea.vmem %s3, %s450
        %p452 = pneg %p126
        %p453 = pneg %p123
        %p454 = pneg %p147
        %p455 = pneg %p144
        %p456 = pneg %p168
        %p457 = pneg %p165
        %p458 = pneg %p189
        %p459 = pneg %p186
        %p460 = pneg %p210
        %p461 = pneg %p207
        %p462 = pneg %p231
        %p463 = pneg %p228
        %p464 = pneg %p252
        %p465 = pneg %p249
        %p466 = pneg %p273
        %p467 = pneg %p270
        %p468 = pneg %p294
        %p469 = pneg %p291
        %p470 = pneg %p315
        %p471 = pneg %p312
        %p472 = pneg %p341
        %p473 = pneg %p338
        %s474 = sand.u32 %s328, 1
        %s475 = scalar_lea.sflag [#allocation4], %s474
        %s476 = sand.u32 %s328, 1
        %s477 = smul.addr %s476, 64
        %s478 = scalar_lea.vmem [#allocation3], %s477
        %p479 = scmp.lt.s32.totalorder %s27, 1
        %s480 = scalar_select %p479, %s27, 1
        %s481 = smul.addr %s480, 18
        %s482 = smul.addr %s481, 8
        %s483 = scalar_lea.vmem %s0, %s482
        %p484 = scmp.lt.s32.totalorder %s27, 1
        %s485 = scalar_select %p484, %s27, 1
        %s486 = smul.addr %s485, 18
        %s487 = smul.addr %s486, 8
        %s488 = scalar_lea.vmem %s1, %s487
        %p489 = scmp.lt.s32.totalorder %s27, 1
        %s490 = scalar_select %p489, %s27, 1
        %s491 = smul.addr %s490, 18
        %s492 = smul.addr %s491, 8
        %s493 = scalar_lea.vmem %s2, %s492
        %p494 = scmp.lt.s32.totalorder %s27, 1
        %s495 = scalar_select %p494, %s27, 1
        %s496 = smul.addr %s495, 18
        %s497 = smul.addr %s496, 8
        %s498 = scalar_lea.vmem %s3, %s497
        %v500 = vld [vmem:[%s483] sm:$0xff]
        %v501 = vld [vmem:[%s483 + $0x10] sm:$0xff]
        %v502 = vld [vmem:[%s483 + $0x20] sm:$0xff]
        %v503 = vld [vmem:[%s483 + $0x30] sm:$0xff]
        %v504 = vld [vmem:[%s483 + $0x40] sm:$0xff]
        %v505 = vld [vmem:[%s483 + $0x50] sm:$0xff]
        %v506 = vld [vmem:[%s483 + $0x60] sm:$0xff]
        %v507 = vld [vmem:[%s483 + $0x70] sm:$0xff]
        %v508 = vpack.c.bf16 %v501, %v500
        %v509 = vpack.c.bf16 %v503, %v502
        %v510 = vpack.c.bf16 %v505, %v504
        %v511 = vpack.c.bf16 %v507, %v506
        %v512 = vld [vmem:[%s4] sm:$0x3]
        %v513 = vld [vmem:[%s488] sm:$0xff]
        %v514 = vld [vmem:[%s488 + $0x10] sm:$0xff]
        %v515 = vld [vmem:[%s488 + $0x20] sm:$0xff]
        %v516 = vld [vmem:[%s488 + $0x30] sm:$0xff]
        %v517 = vld [vmem:[%s488 + $0x40] sm:$0xff]
        %v518 = vld [vmem:[%s488 + $0x50] sm:$0xff]
        %v519 = vld [vmem:[%s488 + $0x60] sm:$0xff]
        %v520 = vld [vmem:[%s488 + $0x70] sm:$0xff]
        %v521 = vpack.c.bf16 %v514, %v513
        %v522 = vpack.c.bf16 %v516, %v515
        %v523 = vpack.c.bf16 %v518, %v517
        %v524 = vpack.c.bf16 %v520, %v519
        %s525 = scalar_lea.vmem %s4, 2
        %v526 = vld [vmem:[%s525] sm:$0x3]
        %vm527 = vcmask 31744
        %v529 = vsel %vm527, %v521, 0
        %v532 = vsel %vm527, %v522, 0
        %v535 = vsel %vm527, %v523, 0
        %v538 = vsel %vm527, %v524, 0
        %vm540 = vcmask 1041408
        %v542 = vsel %vm540, %v526, 0
        %544 = vmatprep.subr.bf16.mxu0 0
        %545 = vmatpush1.bf16.msra.mxu0 %v542
        %546 = vmatprep.subr.bf16.mxu0 0
        %547 = vmatpush1.bf16.msra.mxu0 0
        %548 = vmatprep.subr.bf16.mxu0 0
        %549 = vmatpush1.bf16.msra.mxu0 0
        %550 = vmatprep.subr.bf16.mxu0 0
        %551 = vmatpush1.bf16.msra.mxu0 0
        %552 = vmatprep.subr.bf16.mxu0 0
        %553 = vmatpush1.bf16.msra.mxu0 0
        %554 = vmatprep.subr.bf16.mxu0 0
        %555 = vmatpush1.bf16.msra.mxu0 0
        %556 = vmatprep.subr.bf16.mxu0 0
        %557 = vmatpush1.bf16.msra.mxu0 0
        %558 = vmatprep.subr.bf16.mxu0 0
        %559 = vmatpush1.bf16.msra.mxu0 0
        %560 = vmatprep.subr.bf16.mxu0 0
        %561 = vmatpush1.bf16.msra.mxu0 0
        %562 = vmatprep.subr.bf16.mxu0 0
        %563 = vmatpush1.bf16.msra.mxu0 0
        %564 = vmatprep.subr.bf16.mxu0 0
        %565 = vmatpush1.bf16.msra.mxu0 0
        %566 = vmatprep.subr.bf16.mxu0 0
        %567 = vmatpush1.bf16.msra.mxu0 0
        %568 = vmatprep.subr.bf16.mxu0 0
        %569 = vmatpush1.bf16.msra.mxu0 0
        %570 = vmatprep.subr.bf16.mxu0 0
        %571 = vmatpush1.bf16.msra.mxu0 0
        %572 = vmatprep.subr.bf16.mxu0 0
        %573 = vmatpush1.bf16.msra.mxu0 0
        %574 = vmatprep.subr.bf16.mxu0 0
        %575 = vmatpush1.bf16.msra.mxu0 0
        %576 = vmatprep.mubr.bf16.mxu0 0
        %577 = vmatmul.mubr.bf16.gmra.mrb[0].mxu0 %v529
        %v578 = vpop.f32.mrb[0].mxu0
        %v579 = vadd.f32 0.0, %v578
        %v580 = vpop.f32.mrb[0].mxu0
        %v581 = vpop.f32.mrb[0].mxu0
        %v582 = vadd.f32 0.0, %v581
        %v583 = vpop.f32.mrb[0].mxu0
        %584 = vmatprep.mubr.bf16.mxu0 0
        %585 = vmatmul.mubr.bf16.gmra.mrb[0].mxu0 %v532
        %v586 = vpop.f32.mrb[0].mxu0
        %v587 = vadd.f32 0.0, %v586
        %v588 = vpop.f32.mrb[0].mxu0
        %v589 = vpop.f32.mrb[0].mxu0
        %v590 = vadd.f32 0.0, %v589
        %v591 = vpop.f32.mrb[0].mxu0
        %592 = vmatprep.mubr.bf16.mxu0 0
        %593 = vmatmul.mubr.bf16.gmra.mrb[0].mxu0 %v535
        %v594 = vpop.f32.mrb[0].mxu0
        %v595 = vadd.f32 0.0, %v594
        %v596 = vpop.f32.mrb[0].mxu0
        %v597 = vpop.f32.mrb[0].mxu0
        %v598 = vadd.f32 0.0, %v597
        %v599 = vpop.f32.mrb[0].mxu0
        %600 = vmatprep.mubr.bf16.mxu0 0
        %601 = vmatmul.mubr.bf16.gmra.mrb[0].mxu0 %v538
        %v602 = vpop.f32.mrb[0].mxu0
        %v603 = vadd.f32 0.0, %v602
        %v604 = vpop.f32.mrb[0].mxu0
        %v605 = vpop.f32.mrb[0].mxu0
        %v606 = vadd.f32 0.0, %v605
        %v607 = vpop.f32.mrb[0].mxu0
        %608 = vdwg.mxu0
        %v610 = vsel %vm527, %v508, 0
        %v613 = vsel %vm527, %v509, 0
        %v616 = vsel %vm527, %v510, 0
        %v619 = vsel %vm527, %v511, 0
        %v622 = vsel %vm540, %v512, 0
        %624 = vmatprep.subr.bf16.mxu0 0
        %625 = vmatpush1.bf16.msra.mxu0 %v622
        %626 = vmatprep.subr.bf16.mxu0 0
        %627 = vmatpush1.bf16.msra.mxu0 0
        %628 = vmatprep.subr.bf16.mxu0 0
        %629 = vmatpush1.bf16.msra.mxu0 0
        %630 = vmatprep.subr.bf16.mxu0 0
        %631 = vmatpush1.bf16.msra.mxu0 0
        %632 = vmatprep.subr.bf16.mxu0 0
        %633 = vmatpush1.bf16.msra.mxu0 0
        %634 = vmatprep.subr.bf16.mxu0 0
        %635 = vmatpush1.bf16.msra.mxu0 0
        %636 = vmatprep.subr.bf16.mxu0 0
        %637 = vmatpush1.bf16.msra.mxu0 0
        %638 = vmatprep.subr.bf16.mxu0 0
        %639 = vmatpush1.bf16.msra.mxu0 0
        %640 = vmatprep.subr.bf16.mxu0 0
        %641 = vmatpush1.bf16.msra.mxu0 0
        %642 = vmatprep.subr.bf16.mxu0 0
        %643 = vmatpush1.bf16.msra.mxu0 0
        %644 = vmatprep.subr.bf16.mxu0 0
        %645 = vmatpush1.bf16.msra.mxu0 0
        %646 = vmatprep.subr.bf16.mxu0 0
        %647 = vmatpush1.bf16.msra.mxu0 0
        %648 = vmatprep.subr.bf16.mxu0 0
        %649 = vmatpush1.bf16.msra.mxu0 0
        %650 = vmatprep.subr.bf16.mxu0 0
        %651 = vmatpush1.bf16.msra.mxu0 0
        %652 = vmatprep.subr.bf16.mxu0 0
        %653 = vmatpush1.bf16.msra.mxu0 0
        %654 = vmatprep.subr.bf16.mxu0 0
        %655 = vmatpush1.bf16.msra.mxu0 0
        %656 = vmatprep.mubr.bf16.mxu0 0
        %657 = vmatmul.mubr.bf16.gmra.mrb[0].mxu0 %v610
        %v658 = vpop.f32.mrb[0].mxu0
        %v659 = vadd.f32 %v579, %v658
        %v660 = vpop.f32.mrb[0].mxu0
        %v661 = vpop.f32.mrb[0].mxu0
        %v662 = vadd.f32 %v582, %v661
        %v663 = vpop.f32.mrb[0].mxu0
        %664 = vmatprep.mubr.bf16.mxu0 0
        %665 = vmatmul.mubr.bf16.gmra.mrb[0].mxu0 %v613
        %v666 = vpop.f32.mrb[0].mxu0
        %v667 = vadd.f32 %v587, %v666
        %v668 = vpop.f32.mrb[0].mxu0
        %v669 = vpop.f32.mrb[0].mxu0
        %v670 = vadd.f32 %v590, %v669
        %v671 = vpop.f32.mrb[0].mxu0
        %672 = vmatprep.mubr.bf16.mxu0 0
        %673 = vmatmul.mubr.bf16.gmra.mrb[0].mxu0 %v616
        %v674 = vpop.f32.mrb[0].mxu0
        %v675 = vadd.f32 %v595, %v674
        %v676 = vpop.f32.mrb[0].mxu0
        %v677 = vpop.f32.mrb[0].mxu0
        %v678 = vadd.f32 %v598, %v677
        %v679 = vpop.f32.mrb[0].mxu0
        %680 = vmatprep.mubr.bf16.mxu0 0
        %681 = vmatmul.mubr.bf16.gmra.mrb[0].mxu0 %v619
        %v682 = vpop.f32.mrb[0].mxu0
        %v683 = vadd.f32 %v603, %v682
        %v684 = vpop.f32.mrb[0].mxu0
        %v685 = vpop.f32.mrb[0].mxu0
        %v686 = vadd.f32 %v606, %v685
        %v687 = vpop.f32.mrb[0].mxu0
        %688 = vdwg.mxu0
        %v689 = vld [vmem:[%s483 + $0x1] sm:$0xff]
        %v690 = vld [vmem:[%s483 + $0x11] sm:$0xff]
        %v691 = vld [vmem:[%s483 + $0x21] sm:$0xff]
        %v692 = vld [vmem:[%s483 + $0x31] sm:$0xff]
        %v693 = vld [vmem:[%s483 + $0x41] sm:$0xff]
        %v694 = vld [vmem:[%s483 + $0x51] sm:$0xff]
        %v695 = vld [vmem:[%s483 + $0x61] sm:$0xff]
        %v696 = vld [vmem:[%s483 + $0x71] sm:$0xff]
        %v697 = vpack.c.bf16 %v690, %v689
        %v698 = vpack.c.bf16 %v692, %v691
        %v699 = vpack.c.bf16 %v694, %v693
        %v700 = vpack.c.bf16 %v696, %v695
        %s701 = scalar_lea.vmem %s4, 4
        %v702 = vld [vmem:[%s701] sm:$0x3]
        %v704 = vsel %vm527, %v697, 0
        %v707 = vsel %vm527, %v698, 0
        %v710 = vsel %vm527, %v699, 0
        %v713 = vsel %vm527, %v700, 0
        %v716 = vsel %vm540, %v702, 0
        %718 = vmatprep.subr.bf16.mxu0 0
        %719 = vmatpush1.bf16.msra.mxu0 %v716
        %720 = vmatprep.subr.bf16.mxu0 0
        %721 = vmatpush1.bf16.msra.mxu0 0
        %722 = vmatprep.subr.bf16.mxu0 0
        %723 = vmatpush1.bf16.msra.mxu0 0
        %724 = vmatprep.subr.bf16.mxu0 0
        %725 = vmatpush1.bf16.msra.mxu0 0
        %726 = vmatprep.subr.bf16.mxu0 0
        %727 = vmatpush1.bf16.msra.mxu0 0
        %728 = vmatprep.subr.bf16.mxu0 0
        %729 = vmatpush1.bf16.msra.mxu0 0
        %730 = vmatprep.subr.bf16.mxu0 0
        %731 = vmatpush1.bf16.msra.mxu0 0
        %732 = vmatprep.subr.bf16.mxu0 0
        %733 = vmatpush1.bf16.msra.mxu0 0
        %734 = vmatprep.subr.bf16.mxu0 0
        %735 = vmatpush1.bf16.msra.mxu0 0
        %736 = vmatprep.subr.bf16.mxu0 0
        %737 = vmatpush1.bf16.msra.mxu0 0
        %738 = vmatprep.subr.bf16.mxu0 0
        %739 = vmatpush1.bf16.msra.mxu0 0
        %740 = vmatprep.subr.bf16.mxu0 0
        %741 = vmatpush1.bf16.msra.mxu0 0
        %742 = vmatprep.subr.bf16.mxu0 0
        %743 = vmatpush1.bf16.msra.mxu0 0
        %744 = vmatprep.subr.bf16.mxu0 0
        %745 = vmatpush1.bf16.msra.mxu0 0
        %746 = vmatprep.subr.bf16.mxu0 0
        %747 = vmatpush1.bf16.msra.mxu0 0
        %748 = vmatprep.subr.bf16.mxu0 0
        %749 = vmatpush1.bf16.msra.mxu0 0
        %750 = vmatprep.mubr.bf16.mxu0 0
        %751 = vmatmul.mubr.bf16.gmra.mrb[0].mxu0 %v704
        %v752 = vpop.f32.mrb[0].mxu0
        %v753 = vadd.f32 0.0, %v752
        %v754 = vpop.f32.mrb[0].mxu0
        %v755 = vpop.f32.mrb[0].mxu0
        %v756 = vadd.f32 0.0, %v755
        %v757 = vpop.f32.mrb[0].mxu0
        %758 = vmatprep.mubr.bf16.mxu0 0
        %759 = vmatmul.mubr.bf16.gmra.mrb[0].mxu0 %v707
        %v760 = vpop.f32.mrb[0].mxu0
        %v761 = vadd.f32 0.0, %v760
        %v762 = vpop.f32.mrb[0].mxu0
        %v763 = vpop.f32.mrb[0].mxu0
        %v764 = vadd.f32 0.0, %v763
        %v765 = vpop.f32.mrb[0].mxu0
        %766 = vmatprep.mubr.bf16.mxu0 0
        %767 = vmatmul.mubr.bf16.gmra.mrb[0].mxu0 %v710
        %v768 = vpop.f32.mrb[0].mxu0
        %v769 = vadd.f32 0.0, %v768
        %v770 = vpop.f32.mrb[0].mxu0
        %v771 = vpop.f32.mrb[0].mxu0
        %v772 = vadd.f32 0.0, %v771
        %v773 = vpop.f32.mrb[0].mxu0
        %774 = vmatprep.mubr.bf16.mxu0 0
        %775 = vmatmul.mubr.bf16.gmra.mrb[0].mxu0 %v713
        %v776 = vpop.f32.mrb[0].mxu0
        %v777 = vadd.f32 0.0, %v776
        %v778 = vpop.f32.mrb[0].mxu0
        %v779 = vpop.f32.mrb[0].mxu0
        %v780 = vadd.f32 0.0, %v779
        %v781 = vpop.f32.mrb[0].mxu0
        %782 = vdwg.mxu0
        %v783 = vadd.f32 %v659, %v753
        %v784 = vadd.f32 %v662, %v756
        %v785 = vadd.f32 %v667, %v761
        %v786 = vadd.f32 %v670, %v764
        %v787 = vadd.f32 %v675, %v769
        %v788 = vadd.f32 %v678, %v772
        %v789 = vadd.f32 %v683, %v777
        %v790 = vadd.f32 %v686, %v780
        %v791 = vld [vmem:[%s493] sm:$0xff]
        %v792 = vld [vmem:[%s493 + $0x10] sm:$0xff]
        %v793 = vld [vmem:[%s493 + $0x20] sm:$0xff]
        %v794 = vld [vmem:[%s493 + $0x30] sm:$0xff]
        %v795 = vld [vmem:[%s493 + $0x40] sm:$0xff]
        %v796 = vld [vmem:[%s493 + $0x50] sm:$0xff]
        %v797 = vld [vmem:[%s493 + $0x60] sm:$0xff]
        %v798 = vld [vmem:[%s493 + $0x70] sm:$0xff]
        %v799 = vpack.c.bf16 %v792, %v791
        %v800 = vpack.c.bf16 %v794, %v793
        %v801 = vpack.c.bf16 %v796, %v795
        %v802 = vpack.c.bf16 %v798, %v797
        %s803 = scalar_lea.vmem %s4, 6
        %v804 = vld [vmem:[%s803] sm:$0x3]
        %v806 = vsel %vm527, %v799, 0
        %v809 = vsel %vm527, %v800, 0
        %v812 = vsel %vm527, %v801, 0
        %v815 = vsel %vm527, %v802, 0
        %v818 = vsel %vm540, %v804, 0
        %820 = vmatprep.subr.bf16.mxu0 0
        %821 = vmatpush1.bf16.msra.mxu0 %v818
        %822 = vmatprep.subr.bf16.mxu0 0
        %823 = vmatpush1.bf16.msra.mxu0 0
        %824 = vmatprep.subr.bf16.mxu0 0
        %825 = vmatpush1.bf16.msra.mxu0 0
        %826 = vmatprep.subr.bf16.mxu0 0
        %827 = vmatpush1.bf16.msra.mxu0 0
        %828 = vmatprep.subr.bf16.mxu0 0
        %829 = vmatpush1.bf16.msra.mxu0 0
        %830 = vmatprep.subr.bf16.mxu0 0
        %831 = vmatpush1.bf16.msra.mxu0 0
        %832 = vmatprep.subr.bf16.mxu0 0
        %833 = vmatpush1.bf16.msra.mxu0 0
        %834 = vmatprep.subr.bf16.mxu0 0
        %835 = vmatpush1.bf16.msra.mxu0 0
        %836 = vmatprep.subr.bf16.mxu0 0
        %837 = vmatpush1.bf16.msra.mxu0 0
        %838 = vmatprep.subr.bf16.mxu0 0
        %839 = vmatpush1.bf16.msra.mxu0 0
        %840 = vmatprep.subr.bf16.mxu0 0
        %841 = vmatpush1.bf16.msra.mxu0 0
        %842 = vmatprep.subr.bf16.mxu0 0
        %843 = vmatpush1.bf16.msra.mxu0 0
        %844 = vmatprep.subr.bf16.mxu0 0
        %845 = vmatpush1.bf16.msra.mxu0 0
        %846 = vmatprep.subr.bf16.mxu0 0
        %847 = vmatpush1.bf16.msra.mxu0 0
        %848 = vmatprep.subr.bf16.mxu0 0
        %849 = vmatpush1.bf16.msra.mxu0 0
        %850 = vmatprep.subr.bf16.mxu0 0
        %851 = vmatpush1.bf16.msra.mxu0 0
        %852 = vmatprep.mubr.bf16.mxu0 0
        %853 = vmatmul.mubr.bf16.gmra.mrb[0].mxu0 %v806
        %v854 = vpop.f32.mrb[0].mxu0
        %v855 = vadd.f32 0.0, %v854
        %v856 = vpop.f32.mrb[0].mxu0
        %v857 = vpop.f32.mrb[0].mxu0
        %v858 = vadd.f32 0.0, %v857
        %v859 = vpop.f32.mrb[0].mxu0
        %860 = vmatprep.mubr.bf16.mxu0 0
        %861 = vmatmul.mubr.bf16.gmra.mrb[0].mxu0 %v809
        %v862 = vpop.f32.mrb[0].mxu0
        %v863 = vadd.f32 0.0, %v862
        %v864 = vpop.f32.mrb[0].mxu0
        %v865 = vpop.f32.mrb[0].mxu0
        %v866 = vadd.f32 0.0, %v865
        %v867 = vpop.f32.mrb[0].mxu0
        %868 = vmatprep.mubr.bf16.mxu0 0
        %869 = vmatmul.mubr.bf16.gmra.mrb[0].mxu0 %v812
        %v870 = vpop.f32.mrb[0].mxu0
        %v871 = vadd.f32 0.0, %v870
        %v872 = vpop.f32.mrb[0].mxu0
        %v873 = vpop.f32.mrb[0].mxu0
        %v874 = vadd.f32 0.0, %v873
        %v875 = vpop.f32.mrb[0].mxu0
        %876 = vmatprep.mubr.bf16.mxu0 0
        %877 = vmatmul.mubr.bf16.gmra.mrb[0].mxu0 %v815
        %v878 = vpop.f32.mrb[0].mxu0
        %v879 = vadd.f32 0.0, %v878
        %v880 = vpop.f32.mrb[0].mxu0
        %v881 = vpop.f32.mrb[0].mxu0
        %v882 = vadd.f32 0.0, %v881
        %v883 = vpop.f32.mrb[0].mxu0
        %884 = vdwg.mxu0
        %v885 = vadd.f32 %v783, %v855
        %v886 = vadd.f32 %v784, %v858
        %v887 = vadd.f32 %v785, %v863
        %v888 = vadd.f32 %v786, %v866
        %v889 = vadd.f32 %v787, %v871
        %v890 = vadd.f32 %v788, %v874
        %v891 = vadd.f32 %v789, %v879
        %v892 = vadd.f32 %v790, %v882
        %v893 = vld [vmem:[%s498] sm:$0xff]
        %v894 = vld [vmem:[%s498 + $0x10] sm:$0xff]
        %v895 = vld [vmem:[%s498 + $0x20] sm:$0xff]
        %v896 = vld [vmem:[%s498 + $0x30] sm:$0xff]
        %v897 = vld [vmem:[%s498 + $0x40] sm:$0xff]
        %v898 = vld [vmem:[%s498 + $0x50] sm:$0xff]
        %v899 = vld [vmem:[%s498 + $0x60] sm:$0xff]
        %v900 = vld [vmem:[%s498 + $0x70] sm:$0xff]
        %v901 = vpack.c.bf16 %v894, %v893
        %v902 = vpack.c.bf16 %v896, %v895
        %v903 = vpack.c.bf16 %v898, %v897
        %v904 = vpack.c.bf16 %v900, %v899
        %s905 = scalar_lea.vmem %s4, 8
        %v906 = vld [vmem:[%s905] sm:$0x3]
        %v908 = vsel %vm527, %v901, 0
        %v911 = vsel %vm527, %v902, 0
        %v914 = vsel %vm527, %v903, 0
        %v917 = vsel %vm527, %v904, 0
        %v920 = vsel %vm540, %v906, 0
        %922 = vmatprep.subr.bf16.mxu0 0
        %923 = vmatpush1.bf16.msra.mxu0 %v920
        %924 = vmatprep.subr.bf16.mxu0 0
        %925 = vmatpush1.bf16.msra.mxu0 0
        %926 = vmatprep.subr.bf16.mxu0 0
        %927 = vmatpush1.bf16.msra.mxu0 0
        %928 = vmatprep.subr.bf16.mxu0 0
        %929 = vmatpush1.bf16.msra.mxu0 0
        %930 = vmatprep.subr.bf16.mxu0 0
        %931 = vmatpush1.bf16.msra.mxu0 0
        %932 = vmatprep.subr.bf16.mxu0 0
        %933 = vmatpush1.bf16.msra.mxu0 0
        %934 = vmatprep.subr.bf16.mxu0 0
        %935 = vmatpush1.bf16.msra.mxu0 0
        %936 = vmatprep.subr.bf16.mxu0 0
        %937 = vmatpush1.bf16.msra.mxu0 0
        %938 = vmatprep.subr.bf16.mxu0 0
        %939 = vmatpush1.bf16.msra.mxu0 0
        %940 = vmatprep.subr.bf16.mxu0 0
        %941 = vmatpush1.bf16.msra.mxu0 0
        %942 = vmatprep.subr.bf16.mxu0 0
        %943 = vmatpush1.bf16.msra.mxu0 0
        %944 = vmatprep.subr.bf16.mxu0 0
        %945 = vmatpush1.bf16.msra.mxu0 0
        %946 = vmatprep.subr.bf16.mxu0 0
        %947 = vmatpush1.bf16.msra.mxu0 0
        %948 = vmatprep.subr.bf16.mxu0 0
        %949 = vmatpush1.bf16.msra.mxu0 0
        %950 = vmatprep.subr.bf16.mxu0 0
        %951 = vmatpush1.bf16.msra.mxu0 0
        %952 = vmatprep.subr.bf16.mxu0 0
        %953 = vmatpush1.bf16.msra.mxu0 0
        %954 = vmatprep.mubr.bf16.mxu0 0
        %955 = vmatmul.mubr.bf16.gmra.mrb[0].mxu0 %v908
        %v956 = vpop.f32.mrb[0].mxu0
        %v957 = vadd.f32 0.0, %v956
        %v958 = vpop.f32.mrb[0].mxu0
        %v959 = vpop.f32.mrb[0].mxu0
        %v960 = vadd.f32 0.0, %v959
        %v961 = vpop.f32.mrb[0].mxu0
        %962 = vmatprep.mubr.bf16.mxu0 0
        %963 = vmatmul.mubr.bf16.gmra.mrb[0].mxu0 %v911
        %v964 = vpop.f32.mrb[0].mxu0
        %v965 = vadd.f32 0.0, %v964
        %v966 = vpop.f32.mrb[0].mxu0
        %v967 = vpop.f32.mrb[0].mxu0
        %v968 = vadd.f32 0.0, %v967
        %v969 = vpop.f32.mrb[0].mxu0
        %970 = vmatprep.mubr.bf16.mxu0 0
        %971 = vmatmul.mubr.bf16.gmra.mrb[0].mxu0 %v914
        %v972 = vpop.f32.mrb[0].mxu0
        %v973 = vadd.f32 0.0, %v972
        %v974 = vpop.f32.mrb[0].mxu0
        %v975 = vpop.f32.mrb[0].mxu0
        %v976 = vadd.f32 0.0, %v975
        %v977 = vpop.f32.mrb[0].mxu0
        %978 = vmatprep.mubr.bf16.mxu0 0
        %979 = vmatmul.mubr.bf16.gmra.mrb[0].mxu0 %v917
        %v980 = vpop.f32.mrb[0].mxu0
        %v981 = vadd.f32 0.0, %v980
        %v982 = vpop.f32.mrb[0].mxu0
        %v983 = vpop.f32.mrb[0].mxu0
        %v984 = vadd.f32 0.0, %v983
        %v985 = vpop.f32.mrb[0].mxu0
        %986 = vdwg.mxu0
        %v987 = vadd.f32 %v885, %v957
        %v988 = vadd.f32 %v886, %v960
        %v989 = vadd.f32 %v887, %v965
        %v990 = vadd.f32 %v888, %v968
        %v991 = vadd.f32 %v889, %v973
        %v992 = vadd.f32 %v890, %v976
        %v993 = vadd.f32 %v891, %v981
        %v994 = vadd.f32 %v892, %v984
        %v995 = vld [vmem:[%s493 + $0x1] sm:$0xff]
        %v996 = vld [vmem:[%s493 + $0x11] sm:$0xff]
        %v997 = vld [vmem:[%s493 + $0x21] sm:$0xff]
        %v998 = vld [vmem:[%s493 + $0x31] sm:$0xff]
        %v999 = vld [vmem:[%s493 + $0x41] sm:$0xff]
        %v1000 = vld [vmem:[%s493 + $0x51] sm:$0xff]
        %v1001 = vld [vmem:[%s493 + $0x61] sm:$0xff]
        %v1002 = vld [vmem:[%s493 + $0x71] sm:$0xff]
        %v1003 = vpack.c.bf16 %v996, %v995
        %v1004 = vpack.c.bf16 %v998, %v997
        %v1005 = vpack.c.bf16 %v1000, %v999
        %v1006 = vpack.c.bf16 %v1002, %v1001
        %s1007 = scalar_lea.vmem %s4, 10
        %v1008 = vld [vmem:[%s1007] sm:$0x3]
        %v1010 = vsel %vm527, %v1003, 0
        %v1013 = vsel %vm527, %v1004, 0
        %v1016 = vsel %vm527, %v1005, 0
        %v1019 = vsel %vm527, %v1006, 0
        %v1022 = vsel %vm540, %v1008, 0
        %1024 = vmatprep.subr.bf16.mxu0 0
        %1025 = vmatpush1.bf16.msra.mxu0 %v1022
        %1026 = vmatprep.subr.bf16.mxu0 0
        %1027 = vmatpush1.bf16.msra.mxu0 0
        %1028 = vmatprep.subr.bf16.mxu0 0
        %1029 = vmatpush1.bf16.msra.mxu0 0
        %1030 = vmatprep.subr.bf16.mxu0 0
        %1031 = vmatpush1.bf16.msra.mxu0 0
        %1032 = vmatprep.subr.bf16.mxu0 0
        %1033 = vmatpush1.bf16.msra.mxu0 0
        %1034 = vmatprep.subr.bf16.mxu0 0
        %1035 = vmatpush1.bf16.msra.mxu0 0
        %1036 = vmatprep.subr.bf16.mxu0 0
        %1037 = vmatpush1.bf16.msra.mxu0 0
        %1038 = vmatprep.subr.bf16.mxu0 0
        %1039 = vmatpush1.bf16.msra.mxu0 0
        %1040 = vmatprep.subr.bf16.mxu0 0
        %1041 = vmatpush1.bf16.msra.mxu0 0
        %1042 = vmatprep.subr.bf16.mxu0 0
        %1043 = vmatpush1.bf16.msra.mxu0 0
        %1044 = vmatprep.subr.bf16.mxu0 0
        %1045 = vmatpush1.bf16.msra.mxu0 0
        %1046 = vmatprep.subr.bf16.mxu0 0
        %1047 = vmatpush1.bf16.msra.mxu0 0
        %1048 = vmatprep.subr.bf16.mxu0 0
        %1049 = vmatpush1.bf16.msra.mxu0 0
        %1050 = vmatprep.subr.bf16.mxu0 0
        %1051 = vmatpush1.bf16.msra.mxu0 0
        %1052 = vmatprep.subr.bf16.mxu0 0
        %1053 = vmatpush1.bf16.msra.mxu0 0
        %1054 = vmatprep.subr.bf16.mxu0 0
        %1055 = vmatpush1.bf16.msra.mxu0 0
        %1056 = vmatprep.mubr.bf16.mxu0 0
        %1057 = vmatmul.mubr.bf16.gmra.mrb[0].mxu0 %v1010
        %v1058 = vpop.f32.mrb[0].mxu0
        %v1059 = vadd.f32 0.0, %v1058
        %v1060 = vpop.f32.mrb[0].mxu0
        %v1061 = vpop.f32.mrb[0].mxu0
        %v1062 = vadd.f32 0.0, %v1061
        %v1063 = vpop.f32.mrb[0].mxu0
        %1064 = vmatprep.mubr.bf16.mxu0 0
        %1065 = vmatmul.mubr.bf16.gmra.mrb[0].mxu0 %v1013
        %v1066 = vpop.f32.mrb[0].mxu0
        %v1067 = vadd.f32 0.0, %v1066
        %v1068 = vpop.f32.mrb[0].mxu0
        %v1069 = vpop.f32.mrb[0].mxu0
        %v1070 = vadd.f32 0.0, %v1069
        %v1071 = vpop.f32.mrb[0].mxu0
        %1072 = vmatprep.mubr.bf16.mxu0 0
        %1073 = vmatmul.mubr.bf16.gmra.mrb[0].mxu0 %v1016
        %v1074 = vpop.f32.mrb[0].mxu0
        %v1075 = vadd.f32 0.0, %v1074
        %v1076 = vpop.f32.mrb[0].mxu0
        %v1077 = vpop.f32.mrb[0].mxu0
        %v1078 = vadd.f32 0.0, %v1077
        %v1079 = vpop.f32.mrb[0].mxu0
        %1080 = vmatprep.mubr.bf16.mxu0 0
        %1081 = vmatmul.mubr.bf16.gmra.mrb[0].mxu0 %v1019
        %v1082 = vpop.f32.mrb[0].mxu0
        %v1083 = vadd.f32 0.0, %v1082
        %v1084 = vpop.f32.mrb[0].mxu0
        %v1085 = vpop.f32.mrb[0].mxu0
        %v1086 = vadd.f32 0.0, %v1085
        %v1087 = vpop.f32.mrb[0].mxu0
        %1088 = vdwg.mxu0
        %v1089 = vadd.f32 %v987, %v1059
        %v1090 = vadd.f32 %v988, %v1062
        %v1091 = vadd.f32 %v989, %v1067
        %v1092 = vadd.f32 %v990, %v1070
        %v1093 = vadd.f32 %v991, %v1075
        %v1094 = vadd.f32 %v992, %v1078
        %v1095 = vadd.f32 %v993, %v1083
        %v1096 = vadd.f32 %v994, %v1086
        %s1097 = scalar_lea.vmem %s483, 16
        %v1098 = vld [vmem:[%s1097] sm:$0xff]
        %v1099 = vld [vmem:[%s1097 + $0x10] sm:$0xff]
        %v1100 = vld [vmem:[%s1097 + $0x20] sm:$0xff]
        %v1101 = vld [vmem:[%s1097 + $0x30] sm:$0xff]
        %v1102 = vld [vmem:[%s1097 + $0x40] sm:$0xff]
        %v1103 = vld [vmem:[%s1097 + $0x50] sm:$0xff]
        %v1104 = vld [vmem:[%s1097 + $0x60] sm:$0xff]
        %v1105 = vld [vmem:[%s1097 + $0x70] sm:$0xff]
        %v1106 = vpack.c.bf16 %v1099, %v1098
        %v1107 = vpack.c.bf16 %v1101, %v1100
        %v1108 = vpack.c.bf16 %v1103, %v1102
        %v1109 = vpack.c.bf16 %v1105, %v1104
        %s1110 = scalar_lea.vmem %s4, 12
        %v1111 = vld [vmem:[%s1110] sm:$0x3]
        %v1113 = vsel %vm527, %v1106, 0
        %v1116 = vsel %vm527, %v1107, 0
        %v1119 = vsel %vm527, %v1108, 0
        %v1122 = vsel %vm527, %v1109, 0
        %v1125 = vsel %vm540, %v1111, 0
        %1127 = vmatprep.subr.bf16.mxu0 0
        %1128 = vmatpush1.bf16.msra.mxu0 %v1125
        %1129 = vmatprep.subr.bf16.mxu0 0
        %1130 = vmatpush1.bf16.msra.mxu0 0
        %1131 = vmatprep.subr.bf16.mxu0 0
        %1132 = vmatpush1.bf16.msra.mxu0 0
        %1133 = vmatprep.subr.bf16.mxu0 0
        %1134 = vmatpush1.bf16.msra.mxu0 0
        %1135 = vmatprep.subr.bf16.mxu0 0
        %1136 = vmatpush1.bf16.msra.mxu0 0
        %1137 = vmatprep.subr.bf16.mxu0 0
        %1138 = vmatpush1.bf16.msra.mxu0 0
        %1139 = vmatprep.subr.bf16.mxu0 0
        %1140 = vmatpush1.bf16.msra.mxu0 0
        %1141 = vmatprep.subr.bf16.mxu0 0
        %1142 = vmatpush1.bf16.msra.mxu0 0
        %1143 = vmatprep.subr.bf16.mxu0 0
        %1144 = vmatpush1.bf16.msra.mxu0 0
        %1145 = vmatprep.subr.bf16.mxu0 0
        %1146 = vmatpush1.bf16.msra.mxu0 0
        %1147 = vmatprep.subr.bf16.mxu0 0
        %1148 = vmatpush1.bf16.msra.mxu0 0
        %1149 = vmatprep.subr.bf16.mxu0 0
        %1150 = vmatpush1.bf16.msra.mxu0 0
        %1151 = vmatprep.subr.bf16.mxu0 0
        %1152 = vmatpush1.bf16.msra.mxu0 0
        %1153 = vmatprep.subr.bf16.mxu0 0
        %1154 = vmatpush1.bf16.msra.mxu0 0
        %1155 = vmatprep.subr.bf16.mxu0 0
        %1156 = vmatpush1.bf16.msra.mxu0 0
        %1157 = vmatprep.subr.bf16.mxu0 0
        %1158 = vmatpush1.bf16.msra.mxu0 0
        %1159 = vmatprep.mubr.bf16.mxu0 0
        %1160 = vmatmul.mubr.bf16.gmra.mrb[0].mxu0 %v1113
        %v1161 = vpop.f32.mrb[0].mxu0
        %v1162 = vadd.f32 0.0, %v1161
        %v1163 = vpop.f32.mrb[0].mxu0
        %v1164 = vpop.f32.mrb[0].mxu0
        %v1165 = vadd.f32 0.0, %v1164
        %v1166 = vpop.f32.mrb[0].mxu0
        %1167 = vmatprep.mubr.bf16.mxu0 0
        %1168 = vmatmul.mubr.bf16.gmra.mrb[0].mxu0 %v1116
        %v1169 = vpop.f32.mrb[0].mxu0
        %v1170 = vadd.f32 0.0, %v1169
        %v1171 = vpop.f32.mrb[0].mxu0
        %v1172 = vpop.f32.mrb[0].mxu0
        %v1173 = vadd.f32 0.0, %v1172
        %v1174 = vpop.f32.mrb[0].mxu0
        %1175 = vmatprep.mubr.bf16.mxu0 0
        %1176 = vmatmul.mubr.bf16.gmra.mrb[0].mxu0 %v1119
        %v1177 = vpop.f32.mrb[0].mxu0
        %v1178 = vadd.f32 0.0, %v1177
        %v1179 = vpop.f32.mrb[0].mxu0
        %v1180 = vpop.f32.mrb[0].mxu0
        %v1181 = vadd.f32 0.0, %v1180
        %v1182 = vpop.f32.mrb[0].mxu0
        %1183 = vmatprep.mubr.bf16.mxu0 0
        %1184 = vmatmul.mubr.bf16.gmra.mrb[0].mxu0 %v1122
        %v1185 = vpop.f32.mrb[0].mxu0
        %v1186 = vadd.f32 0.0, %v1185
        %v1187 = vpop.f32.mrb[0].mxu0
        %v1188 = vpop.f32.mrb[0].mxu0
        %v1189 = vadd.f32 0.0, %v1188
        %v1190 = vpop.f32.mrb[0].mxu0
        %1191 = vdwg.mxu0
        %v1192 = vadd.f32 %v1089, %v1162
        %v1193 = vadd.f32 %v1090, %v1165
        %v1194 = vadd.f32 %v1091, %v1170
        %v1195 = vadd.f32 %v1092, %v1173
        %v1196 = vadd.f32 %v1093, %v1178
        %v1197 = vadd.f32 %v1094, %v1181
        %v1198 = vadd.f32 %v1095, %v1186
        %v1199 = vadd.f32 %v1096, %v1189
        %s1200 = scalar_lea.vmem %s488, 16
        %v1201 = vld [vmem:[%s1200] sm:$0xff]
        %v1202 = vld [vmem:[%s1200 + $0x10] sm:$0xff]
        %v1203 = vld [vmem:[%s1200 + $0x20] sm:$0xff]
        %v1204 = vld [vmem:[%s1200 + $0x30] sm:$0xff]
        %v1205 = vld [vmem:[%s1200 + $0x40] sm:$0xff]
        %v1206 = vld [vmem:[%s1200 + $0x50] sm:$0xff]
        %v1207 = vld [vmem:[%s1200 + $0x60] sm:$0xff]
        %v1208 = vld [vmem:[%s1200 + $0x70] sm:$0xff]
        %v1209 = vpack.c.bf16 %v1202, %v1201
        %v1210 = vpack.c.bf16 %v1204, %v1203
        %v1211 = vpack.c.bf16 %v1206, %v1205
        %v1212 = vpack.c.bf16 %v1208, %v1207
        %s1213 = scalar_lea.vmem %s4, 14
        %v1214 = vld [vmem:[%s1213] sm:$0x3]
        %v1216 = vsel %vm527, %v1209, 0
        %v1219 = vsel %vm527, %v1210, 0
        %v1222 = vsel %vm527, %v1211, 0
        %v1225 = vsel %vm527, %v1212, 0
        %v1228 = vsel %vm540, %v1214, 0
        %1230 = vmatprep.subr.bf16.mxu0 0
        %1231 = vmatpush1.bf16.msra.mxu0 %v1228
        %1232 = vmatprep.subr.bf16.mxu0 0
        %1233 = vmatpush1.bf16.msra.mxu0 0
        %1234 = vmatprep.subr.bf16.mxu0 0
        %1235 = vmatpush1.bf16.msra.mxu0 0
        %1236 = vmatprep.subr.bf16.mxu0 0
        %1237 = vmatpush1.bf16.msra.mxu0 0
        %1238 = vmatprep.subr.bf16.mxu0 0
        %1239 = vmatpush1.bf16.msra.mxu0 0
        %1240 = vmatprep.subr.bf16.mxu0 0
        %1241 = vmatpush1.bf16.msra.mxu0 0
        %1242 = vmatprep.subr.bf16.mxu0 0
        %1243 = vmatpush1.bf16.msra.mxu0 0
        %1244 = vmatprep.subr.bf16.mxu0 0
        %1245 = vmatpush1.bf16.msra.mxu0 0
        %1246 = vmatprep.subr.bf16.mxu0 0
        %1247 = vmatpush1.bf16.msra.mxu0 0
        %1248 = vmatprep.subr.bf16.mxu0 0
        %1249 = vmatpush1.bf16.msra.mxu0 0
        %1250 = vmatprep.subr.bf16.mxu0 0
        %1251 = vmatpush1.bf16.msra.mxu0 0
        %1252 = vmatprep.subr.bf16.mxu0 0
        %1253 = vmatpush1.bf16.msra.mxu0 0
        %1254 = vmatprep.subr.bf16.mxu0 0
        %1255 = vmatpush1.bf16.msra.mxu0 0
        %1256 = vmatprep.subr.bf16.mxu0 0
        %1257 = vmatpush1.bf16.msra.mxu0 0
        %1258 = vmatprep.subr.bf16.mxu0 0
        %1259 = vmatpush1.bf16.msra.mxu0 0
        %1260 = vmatprep.subr.bf16.mxu0 0
        %1261 = vmatpush1.bf16.msra.mxu0 0
        %1262 = vmatprep.mubr.bf16.mxu0 0
        %1263 = vmatmul.mubr.bf16.gmra.mrb[0].mxu0 %v1216
        %v1264 = vpop.f32.mrb[0].mxu0
        %v1265 = vadd.f32 0.0, %v1264
        %v1266 = vpop.f32.mrb[0].mxu0
        %v1267 = vpop.f32.mrb[0].mxu0
        %v1268 = vadd.f32 0.0, %v1267
        %v1269 = vpop.f32.mrb[0].mxu0
        %1270 = vmatprep.mubr.bf16.mxu0 0
        %1271 = vmatmul.mubr.bf16.gmra.mrb[0].mxu0 %v1219
        %v1272 = vpop.f32.mrb[0].mxu0
        %v1273 = vadd.f32 0.0, %v1272
        %v1274 = vpop.f32.mrb[0].mxu0
        %v1275 = vpop.f32.mrb[0].mxu0
        %v1276 = vadd.f32 0.0, %v1275
        %v1277 = vpop.f32.mrb[0].mxu0
        %1278 = vmatprep.mubr.bf16.mxu0 0
        %1279 = vmatmul.mubr.bf16.gmra.mrb[0].mxu0 %v1222
        %v1280 = vpop.f32.mrb[0].mxu0
        %v1281 = vadd.f32 0.0, %v1280
        %v1282 = vpop.f32.mrb[0].mxu0
        %v1283 = vpop.f32.mrb[0].mxu0
        %v1284 = vadd.f32 0.0, %v1283
        %v1285 = vpop.f32.mrb[0].mxu0
        %1286 = vmatprep.mubr.bf16.mxu0 0
        %1287 = vmatmul.mubr.bf16.gmra.mrb[0].mxu0 %v1225
        %v1288 = vpop.f32.mrb[0].mxu0
        %v1289 = vadd.f32 0.0, %v1288
        %v1290 = vpop.f32.mrb[0].mxu0
        %v1291 = vpop.f32.mrb[0].mxu0
        %v1292 = vadd.f32 0.0, %v1291
        %v1293 = vpop.f32.mrb[0].mxu0
        %1294 = vdwg.mxu0
        %v1295 = vadd.f32 %v1192, %v1265
        %v1296 = vadd.f32 %v1193, %v1268
        %v1297 = vadd.f32 %v1194, %v1273
        %v1298 = vadd.f32 %v1195, %v1276
        %v1299 = vadd.f32 %v1196, %v1281
        %v1300 = vadd.f32 %v1197, %v1284
        %v1301 = vadd.f32 %v1198, %v1289
        %v1302 = vadd.f32 %v1199, %v1292
        %v1303 = vld [vmem:[%s1097 + $0x1] sm:$0xff]
        %v1304 = vld [vmem:[%s1097 + $0x11] sm:$0xff]
        %v1305 = vld [vmem:[%s1097 + $0x21] sm:$0xff]
        %v1306 = vld [vmem:[%s1097 + $0x31] sm:$0xff]
        %v1307 = vld [vmem:[%s1097 + $0x41] sm:$0xff]
        %v1308 = vld [vmem:[%s1097 + $0x51] sm:$0xff]
        %v1309 = vld [vmem:[%s1097 + $0x61] sm:$0xff]
        %v1310 = vld [vmem:[%s1097 + $0x71] sm:$0xff]
        %v1311 = vpack.c.bf16 %v1304, %v1303
        %v1312 = vpack.c.bf16 %v1306, %v1305
        %v1313 = vpack.c.bf16 %v1308, %v1307
        %v1314 = vpack.c.bf16 %v1310, %v1309
        %s1315 = scalar_lea.vmem %s4, 16
        %v1316 = vld [vmem:[%s1315] sm:$0x3]
        %v1318 = vsel %vm527, %v1311, 0
        %v1321 = vsel %vm527, %v1312, 0
        %v1324 = vsel %vm527, %v1313, 0
        %v1327 = vsel %vm527, %v1314, 0
        %v1330 = vsel %vm540, %v1316, 0
        %1332 = vmatprep.subr.bf16.mxu0 0
        %1333 = vmatpush1.bf16.msra.mxu0 %v1330
        %1334 = vmatprep.subr.bf16.mxu0 0
        %1335 = vmatpush1.bf16.msra.mxu0 0
        %1336 = vmatprep.subr.bf16.mxu0 0
        %1337 = vmatpush1.bf16.msra.mxu0 0
        %1338 = vmatprep.subr.bf16.mxu0 0
        %1339 = vmatpush1.bf16.msra.mxu0 0
        %1340 = vmatprep.subr.bf16.mxu0 0
        %1341 = vmatpush1.bf16.msra.mxu0 0
        %1342 = vmatprep.subr.bf16.mxu0 0
        %1343 = vmatpush1.bf16.msra.mxu0 0
        %1344 = vmatprep.subr.bf16.mxu0 0
        %1345 = vmatpush1.bf16.msra.mxu0 0
        %1346 = vmatprep.subr.bf16.mxu0 0
        %1347 = vmatpush1.bf16.msra.mxu0 0
        %1348 = vmatprep.subr.bf16.mxu0 0
        %1349 = vmatpush1.bf16.msra.mxu0 0
        %1350 = vmatprep.subr.bf16.mxu0 0
        %1351 = vmatpush1.bf16.msra.mxu0 0
        %1352 = vmatprep.subr.bf16.mxu0 0
        %1353 = vmatpush1.bf16.msra.mxu0 0
        %1354 = vmatprep.subr.bf16.mxu0 0
        %1355 = vmatpush1.bf16.msra.mxu0 0
        %1356 = vmatprep.subr.bf16.mxu0 0
        %1357 = vmatpush1.bf16.msra.mxu0 0
        %1358 = vmatprep.subr.bf16.mxu0 0
        %1359 = vmatpush1.bf16.msra.mxu0 0
        %1360 = vmatprep.subr.bf16.mxu0 0
        %1361 = vmatpush1.bf16.msra.mxu0 0
        %1362 = vmatprep.subr.bf16.mxu0 0
        %1363 = vmatpush1.bf16.msra.mxu0 0
        %1364 = vmatprep.mubr.bf16.mxu0 0
        %1365 = vmatmul.mubr.bf16.gmra.mrb[0].mxu0 %v1318
        %v1366 = vpop.f32.mrb[0].mxu0
        %v1367 = vadd.f32 0.0, %v1366
        %v1368 = vpop.f32.mrb[0].mxu0
        %v1369 = vpop.f32.mrb[0].mxu0
        %v1370 = vadd.f32 0.0, %v1369
        %v1371 = vpop.f32.mrb[0].mxu0
        %1372 = vmatprep.mubr.bf16.mxu0 0
        %1373 = vmatmul.mubr.bf16.gmra.mrb[0].mxu0 %v1321
        %v1374 = vpop.f32.mrb[0].mxu0
        %v1375 = vadd.f32 0.0, %v1374
        %v1376 = vpop.f32.mrb[0].mxu0
        %v1377 = vpop.f32.mrb[0].mxu0
        %v1378 = vadd.f32 0.0, %v1377
        %v1379 = vpop.f32.mrb[0].mxu0
        %1380 = vmatprep.mubr.bf16.mxu0 0
        %1381 = vmatmul.mubr.bf16.gmra.mrb[0].mxu0 %v1324
        %v1382 = vpop.f32.mrb[0].mxu0
        %v1383 = vadd.f32 0.0, %v1382
        %v1384 = vpop.f32.mrb[0].mxu0
        %v1385 = vpop.f32.mrb[0].mxu0
        %v1386 = vadd.f32 0.0, %v1385
        %v1387 = vpop.f32.mrb[0].mxu0
        %1388 = vmatprep.mubr.bf16.mxu0 0
        %1389 = vmatmul.mubr.bf16.gmra.mrb[0].mxu0 %v1327
        %v1390 = vpop.f32.mrb[0].mxu0
        %v1391 = vadd.f32 0.0, %v1390
        %v1392 = vpop.f32.mrb[0].mxu0
        %v1393 = vpop.f32.mrb[0].mxu0
        %v1394 = vadd.f32 0.0, %v1393
        %v1395 = vpop.f32.mrb[0].mxu0
        %1396 = vdwg.mxu0
        %v1397 = vadd.f32 %v1295, %v1367
        %v1398 = vadd.f32 %v1296, %v1370
        %v1399 = vadd.f32 %v1297, %v1375
        %v1400 = vadd.f32 %v1298, %v1378
        %v1401 = vadd.f32 %v1299, %v1383
        %v1402 = vadd.f32 %v1300, %v1386
        %v1403 = vadd.f32 %v1301, %v1391
        %v1404 = vadd.f32 %v1302, %v1394
        %v1405 = vld [vmem:[%s12] sm:$0x1]
        %v1406 = vlaneseq
        %v1407 = vshrl.u32 %v1406, 7
        %v1408 = vsub.s32 0, %v1407
        %v1409 = vrot.slane %v1405, %v1408
        %v1410 = vadd.f32 %v1397, %v1409
        %v1411 = vadd.f32 %v1398, %v1409
        %v1412 = vadd.f32 %v1399, %v1409
        %v1413 = vadd.f32 %v1400, %v1409
        %v1414 = vadd.f32 %v1401, %v1409
        %v1415 = vadd.f32 %v1402, %v1409
        %v1416 = vadd.f32 %v1403, %v1409
        %v1417 = vadd.f32 %v1404, %v1409
        %v1418 = vmax.f32 %v1410, 0.0
        %v1419 = vmax.f32 %v1411, 0.0
        %v1420 = vmax.f32 %v1412, 0.0
        %v1421 = vmax.f32 %v1413, 0.0
        %v1422 = vmax.f32 %v1414, 0.0
        %v1423 = vmax.f32 %v1415, 0.0
        %v1424 = vmax.f32 %v1416, 0.0
        %v1425 = vmax.f32 %v1417, 0.0
        %v1426 = vld [vmem:[%s5] sm:$0x3]
        %v1427 = vld [vmem:[%s12 + $0x1] sm:$0x1]
        %v1428 = vlaneseq
        %v1429 = vshrl.u32 %v1428, 7
        %v1430 = vsub.s32 0, %v1429
        %v1431 = vrot.slane %v1427, %v1430
        %v1433 = vsel %vm540, %v1426, 0
        %1435 = vmatprep.subr.bf16.mxu0 0
        %1436 = vmatpush1.bf16.msra.mxu0 %v1433
        %1437 = vmatprep.subr.bf16.mxu0 0
        %1438 = vmatpush1.bf16.msra.mxu0 0
        %1439 = vmatprep.subr.bf16.mxu0 0
        %1440 = vmatpush1.bf16.msra.mxu0 0
        %1441 = vmatprep.subr.bf16.mxu0 0
        %1442 = vmatpush1.bf16.msra.mxu0 0
        %1443 = vmatprep.subr.bf16.mxu0 0
        %1444 = vmatpush1.bf16.msra.mxu0 0
        %1445 = vmatprep.subr.bf16.mxu0 0
        %1446 = vmatpush1.bf16.msra.mxu0 0
        %1447 = vmatprep.subr.bf16.mxu0 0
        %1448 = vmatpush1.bf16.msra.mxu0 0
        %1449 = vmatprep.subr.bf16.mxu0 0
        %1450 = vmatpush1.bf16.msra.mxu0 0
        %1451 = vmatprep.subr.bf16.mxu0 0
        %1452 = vmatpush1.bf16.msra.mxu0 0
        %1453 = vmatprep.subr.bf16.mxu0 0
        %1454 = vmatpush1.bf16.msra.mxu0 0
        %1455 = vmatprep.subr.bf16.mxu0 0
        %1456 = vmatpush1.bf16.msra.mxu0 0
        %1457 = vmatprep.subr.bf16.mxu0 0
        %1458 = vmatpush1.bf16.msra.mxu0 0
        %1459 = vmatprep.subr.bf16.mxu0 0
        %1460 = vmatpush1.bf16.msra.mxu0 0
        %1461 = vmatprep.subr.bf16.mxu0 0
        %1462 = vmatpush1.bf16.msra.mxu0 0
        %1463 = vmatprep.subr.bf16.mxu0 0
        %1464 = vmatpush1.bf16.msra.mxu0 0
        %1465 = vmatprep.subr.bf16.mxu0 0
        %1466 = vmatpush1.bf16.msra.mxu0 0
        %1467 = vmatprep.mubr.bf16.mxu0 0
        %1468 = vmatmul.mubr.bf16.gmra.mrb[0].mxu0 %v908
        %v1469 = vpop.f32.mrb[0].mxu0
        %v1470 = vadd.f32 %v1431, %v1469
        %v1471 = vpop.f32.mrb[0].mxu0
        %v1472 = vpop.f32.mrb[0].mxu0
        %v1473 = vadd.f32 %v1431, %v1472
        %v1474 = vpop.f32.mrb[0].mxu0
        %1475 = vmatprep.mubr.bf16.mxu0 0
        %1476 = vmatmul.mubr.bf16.gmra.mrb[0].mxu0 %v911
        %v1477 = vpop.f32.mrb[0].mxu0
        %v1478 = vadd.f32 %v1431, %v1477
        %v1479 = vpop.f32.mrb[0].mxu0
        %v1480 = vpop.f32.mrb[0].mxu0
        %v1481 = vadd.f32 %v1431, %v1480
        %v1482 = vpop.f32.mrb[0].mxu0
        %1483 = vmatprep.mubr.bf16.mxu0 0
        %1484 = vmatmul.mubr.bf16.gmra.mrb[0].mxu0 %v914
        %v1485 = vpop.f32.mrb[0].mxu0
        %v1486 = vadd.f32 %v1431, %v1485
        %v1487 = vpop.f32.mrb[0].mxu0
        %v1488 = vpop.f32.mrb[0].mxu0
        %v1489 = vadd.f32 %v1431, %v1488
        %v1490 = vpop.f32.mrb[0].mxu0
        %1491 = vmatprep.mubr.bf16.mxu0 0
        %1492 = vmatmul.mubr.bf16.gmra.mrb[0].mxu0 %v917
        %v1493 = vpop.f32.mrb[0].mxu0
        %v1494 = vadd.f32 %v1431, %v1493
        %v1495 = vpop.f32.mrb[0].mxu0
        %v1496 = vpop.f32.mrb[0].mxu0
        %v1497 = vadd.f32 %v1431, %v1496
        %v1498 = vpop.f32.mrb[0].mxu0
        %1499 = vdwg.mxu0
        %v1500 = vpack.c.bf16 %v1419, %v1418
        %v1501 = vpack.c.bf16 %v1421, %v1420
        %v1502 = vpack.c.bf16 %v1423, %v1422
        %v1503 = vpack.c.bf16 %v1425, %v1424
        %v1504 = vld [vmem:[%s10] sm:$0xf]
        %v1505 = vld [vmem:[%s10 + $0x4] sm:$0xf]
        %v1506 = vld [vmem:[%s10 + $0x8] sm:$0xf]
        %v1507 = vld [vmem:[%s10 + $0xc] sm:$0xf]
        %v1508 = vld [vmem:[%s10 + $0x10] sm:$0xf]
        %v1509 = vld [vmem:[%s10 + $0x14] sm:$0xf]
        %v1510 = vld [vmem:[%s10 + $0x18] sm:$0xf]
        %v1511 = vld [vmem:[%s10 + $0x1c] sm:$0xf]
        %v1520 = vunpack.c.l.b16 %v1504
        %v1521 = vunpack.c.l.b16 %v1505
        %v1522 = vunpack.c.l.b16 %v1506
        %v1523 = vunpack.c.l.b16 %v1507
        %v1524 = vunpack.c.l.b16 %v1508
        %v1525 = vunpack.c.l.b16 %v1509
        %v1526 = vunpack.c.l.b16 %v1510
        %v1527 = vunpack.c.l.b16 %v1511
        %v1528 = vpack.c.b16 %v1521, %v1520
        %v1529 = vpack.c.b16 %v1523, %v1522
        %v1530 = vpack.c.b16 %v1525, %v1524
        %v1531 = vpack.c.b16 %v1527, %v1526
        %vm1532 = vcmask 523264
        %v1534 = vsel %vm1532, %v1528, 0
        %v1537 = vsel %vm1532, %v1529, 0
        %v1540 = vsel %vm1532, %v1530, 0
        %v1543 = vsel %vm1532, %v1531, 0
        %1545 = vmatprep.subr.bf16.mxu0 0
        %1546 = vmatpush1.bf16.msra.mxu0 %v1500
        %1547 = vmatprep.subr.bf16.mxu0 0
        %1548 = vmatpush1.bf16.msra.mxu0 %v1501
        %1549 = vmatprep.subr.bf16.mxu0 0
        %1550 = vmatpush1.bf16.msra.mxu0 %v1502
        %1551 = vmatprep.subr.bf16.mxu0 0
        %1552 = vmatpush1.bf16.msra.mxu0 %v1503
        %1553 = vmatprep.subr.bf16.mxu0 0
        %1554 = vmatpush1.bf16.msra.mxu0 0
        %1555 = vmatprep.subr.bf16.mxu0 0
        %1556 = vmatpush1.bf16.msra.mxu0 0
        %1557 = vmatprep.subr.bf16.mxu0 0
        %1558 = vmatpush1.bf16.msra.mxu0 0
        %1559 = vmatprep.subr.bf16.mxu0 0
        %1560 = vmatpush1.bf16.msra.mxu0 0
        %1561 = vmatprep.subr.bf16.mxu0 0
        %1562 = vmatpush1.bf16.msra.mxu0 0
        %1563 = vmatprep.subr.bf16.mxu0 0
        %1564 = vmatpush1.bf16.msra.mxu0 0
        %1565 = vmatprep.subr.bf16.mxu0 0
        %1566 = vmatpush1.bf16.msra.mxu0 0
        %1567 = vmatprep.subr.bf16.mxu0 0
        %1568 = vmatpush1.bf16.msra.mxu0 0
        %1569 = vmatprep.subr.bf16.mxu0 0
        %1570 = vmatpush1.bf16.msra.mxu0 0
        %1571 = vmatprep.subr.bf16.mxu0 0
        %1572 = vmatpush1.bf16.msra.mxu0 0
        %1573 = vmatprep.subr.bf16.mxu0 0
        %1574 = vmatpush1.bf16.msra.mxu0 0
        %1575 = vmatprep.subr.bf16.mxu0 0
        %1576 = vmatpush1.bf16.msra.mxu0 0
        %1577 = vmatprep.mubr.bf16.mxu0 0
        %1578 = vmatmul.mubr.bf16.gmra.mrb[0].mxu0 %v1534
        %v1579 = vpop.f32.mrb[0].mxu0
        %v1580 = vadd.f32 0.0, %v1579
        %v1581 = vpop.f32.mrb[0].mxu0
        %v1582 = vpop.f32.mrb[0].mxu0
        %v1583 = vadd.f32 0.0, %v1582
        %v1584 = vpop.f32.mrb[0].mxu0
        %1585 = vmatprep.mubr.bf16.mxu0 0
        %1586 = vmatmul.mubr.bf16.gmra.mrb[0].mxu0 %v1537
        %v1587 = vpop.f32.mrb[0].mxu0
        %v1588 = vadd.f32 0.0, %v1587
        %v1589 = vpop.f32.mrb[0].mxu0
        %v1590 = vpop.f32.mrb[0].mxu0
        %v1591 = vadd.f32 0.0, %v1590
        %v1592 = vpop.f32.mrb[0].mxu0
        %1593 = vmatprep.mubr.bf16.mxu0 0
        %1594 = vmatmul.mubr.bf16.gmra.mrb[0].mxu0 %v1540
        %v1595 = vpop.f32.mrb[0].mxu0
        %v1596 = vadd.f32 0.0, %v1595
        %v1597 = vpop.f32.mrb[0].mxu0
        %v1598 = vpop.f32.mrb[0].mxu0
        %v1599 = vadd.f32 0.0, %v1598
        %v1600 = vpop.f32.mrb[0].mxu0
        %1601 = vmatprep.mubr.bf16.mxu0 0
        %1602 = vmatmul.mubr.bf16.gmra.mrb[0].mxu0 %v1543
        %v1603 = vpop.f32.mrb[0].mxu0
        %v1604 = vadd.f32 0.0, %v1603
        %v1605 = vpop.f32.mrb[0].mxu0
        %v1606 = vpop.f32.mrb[0].mxu0
        %v1607 = vadd.f32 0.0, %v1606
        %v1608 = vpop.f32.mrb[0].mxu0
        %1609 = vdwg.mxu0
        %v1610 = vpack.c.bf16 %v1583, %v1580
        %v1611 = vpack.c.bf16 %v1591, %v1588
        %v1612 = vpack.c.bf16 %v1599, %v1596
        %v1613 = vpack.c.bf16 %v1607, %v1604
        %v1614 = vld [vmem:[%s7] sm:$0xf]
        %v1615 = vld [vmem:[%s7 + $0x4] sm:$0xf]
        %v1616 = vld [vmem:[%s12 + $0x3] sm:$0x1]
        %v1617 = vlaneseq
        %v1618 = vshrl.u32 %v1617, 7
        %v1619 = vsub.s32 0, %v1618
        %v1620 = vrot.slane %v1616, %v1619
        %v1623 = vunpack.c.l.b16 %v1614
        %v1624 = vunpack.c.l.b16 %v1615
        %v1625 = vpack.c.b16 %v1624, %v1623
        %vm1627 = vcmask 130048
        %v1629 = vsel %vm1627, %v1610, 0
        %v1632 = vsel %vm1627, %v1611, 0
        %v1635 = vsel %vm1627, %v1612, 0
        %v1638 = vsel %vm1627, %v1613, 0
        %1640 = vmatprep.subr.bf16.mxu0 0
        %1641 = vmatpush1.bf16.msra.mxu0 %v1625
        %1642 = vmatprep.subr.bf16.mxu0 0
        %1643 = vmatpush1.bf16.msra.mxu0 0
        %1644 = vmatprep.subr.bf16.mxu0 0
        %1645 = vmatpush1.bf16.msra.mxu0 0
        %1646 = vmatprep.subr.bf16.mxu0 0
        %1647 = vmatpush1.bf16.msra.mxu0 0
        %1648 = vmatprep.subr.bf16.mxu0 0
        %1649 = vmatpush1.bf16.msra.mxu0 0
        %1650 = vmatprep.subr.bf16.mxu0 0
        %1651 = vmatpush1.bf16.msra.mxu0 0
        %1652 = vmatprep.subr.bf16.mxu0 0
        %1653 = vmatpush1.bf16.msra.mxu0 0
        %1654 = vmatprep.subr.bf16.mxu0 0
        %1655 = vmatpush1.bf16.msra.mxu0 0
        %1656 = vmatprep.subr.bf16.mxu0 0
        %1657 = vmatpush1.bf16.msra.mxu0 0
        %1658 = vmatprep.subr.bf16.mxu0 0
        %1659 = vmatpush1.bf16.msra.mxu0 0
        %1660 = vmatprep.subr.bf16.mxu0 0
        %1661 = vmatpush1.bf16.msra.mxu0 0
        %1662 = vmatprep.subr.bf16.mxu0 0
        %1663 = vmatpush1.bf16.msra.mxu0 0
        %1664 = vmatprep.subr.bf16.mxu0 0
        %1665 = vmatpush1.bf16.msra.mxu0 0
        %1666 = vmatprep.subr.bf16.mxu0 0
        %1667 = vmatpush1.bf16.msra.mxu0 0
        %1668 = vmatprep.subr.bf16.mxu0 0
        %1669 = vmatpush1.bf16.msra.mxu0 0
        %1670 = vmatprep.subr.bf16.mxu0 0
        %1671 = vmatpush1.bf16.msra.mxu0 0
        %1672 = vmatprep.mubr.bf16.mxu0 0
        %1673 = vmatmul.mubr.bf16.gmra.mrb[0].mxu0 %v1629
        %v1674 = vpop.f32.mrb[0].mxu0
        %v1675 = vadd.f32 %v1620, %v1674
        %v1676 = vpop.f32.mrb[0].mxu0
        %v1677 = vpop.f32.mrb[0].mxu0
        %v1678 = vadd.f32 %v1620, %v1677
        %v1679 = vpop.f32.mrb[0].mxu0
        %1680 = vmatprep.mubr.bf16.mxu0 0
        %1681 = vmatmul.mubr.bf16.gmra.mrb[0].mxu0 %v1632
        %v1682 = vpop.f32.mrb[0].mxu0
        %v1683 = vadd.f32 %v1620, %v1682
        %v1684 = vpop.f32.mrb[0].mxu0
        %v1685 = vpop.f32.mrb[0].mxu0
        %v1686 = vadd.f32 %v1620, %v1685
        %v1687 = vpop.f32.mrb[0].mxu0
        %1688 = vmatprep.mubr.bf16.mxu0 0
        %1689 = vmatmul.mubr.bf16.gmra.mrb[0].mxu0 %v1635
        %v1690 = vpop.f32.mrb[0].mxu0
        %v1691 = vadd.f32 %v1620, %v1690
        %v1692 = vpop.f32.mrb[0].mxu0
        %v1693 = vpop.f32.mrb[0].mxu0
        %v1694 = vadd.f32 %v1620, %v1693
        %v1695 = vpop.f32.mrb[0].mxu0
        %1696 = vmatprep.mubr.bf16.mxu0 0
        %1697 = vmatmul.mubr.bf16.gmra.mrb[0].mxu0 %v1638
        %v1698 = vpop.f32.mrb[0].mxu0
        %v1699 = vadd.f32 %v1620, %v1698
        %v1700 = vpop.f32.mrb[0].mxu0
        %v1701 = vpop.f32.mrb[0].mxu0
        %v1702 = vadd.f32 %v1620, %v1701
        %v1703 = vpop.f32.mrb[0].mxu0
        %1704 = vdwg.mxu0
        %v1705 = vmax.f32 %v1675, 0.0
        %v1706 = vmax.f32 %v1678, 0.0
        %v1707 = vmax.f32 %v1683, 0.0
        %v1708 = vmax.f32 %v1686, 0.0
        %v1709 = vmax.f32 %v1691, 0.0
        %v1710 = vmax.f32 %v1694, 0.0
        %v1711 = vmax.f32 %v1699, 0.0
        %v1712 = vmax.f32 %v1702, 0.0
        %v1713 = vpack.c.bf16 %v1706, %v1705
        %v1714 = vpack.c.bf16 %v1708, %v1707
        %v1715 = vpack.c.bf16 %v1710, %v1709
        %v1716 = vpack.c.bf16 %v1712, %v1711
        %v1717 = vld [vmem:[%s9] sm:$0xf]
        %v1718 = vld [vmem:[%s9 + $0x4] sm:$0x3]
        %v1721 = vunpack.c.l.b16 %v1717
        %v1722 = vunpack.c.l.b16 %v1718
        %v1723 = vpack.c.b16 %v1722, %v1721
        %vm1724 = vcmask 97280
        %v1726 = vsel %vm1724, %v1713, 0
        %v1729 = vsel %vm1724, %v1714, 0
        %v1732 = vsel %vm1724, %v1715, 0
        %v1735 = vsel %vm1724, %v1716, 0
        %vm1737 = vcmask 1045504
        %v1739 = vsel %vm1737, %v1723, 0
        %1741 = vmatprep.subr.bf16.mxu0 0
        %1742 = vmatpush1.bf16.msra.mxu0 %v1739
        %1743 = vmatprep.subr.bf16.mxu0 0
        %1744 = vmatpush1.bf16.msra.mxu0 0
        %1745 = vmatprep.subr.bf16.mxu0 0
        %1746 = vmatpush1.bf16.msra.mxu0 0
        %1747 = vmatprep.subr.bf16.mxu0 0
        %1748 = vmatpush1.bf16.msra.mxu0 0
        %1749 = vmatprep.subr.bf16.mxu0 0
        %1750 = vmatpush1.bf16.msra.mxu0 0
        %1751 = vmatprep.subr.bf16.mxu0 0
        %1752 = vmatpush1.bf16.msra.mxu0 0
        %1753 = vmatprep.subr.bf16.mxu0 0
        %1754 = vmatpush1.bf16.msra.mxu0 0
        %1755 = vmatprep.subr.bf16.mxu0 0
        %1756 = vmatpush1.bf16.msra.mxu0 0
        %1757 = vmatprep.subr.bf16.mxu0 0
        %1758 = vmatpush1.bf16.msra.mxu0 0
        %1759 = vmatprep.subr.bf16.mxu0 0
        %1760 = vmatpush1.bf16.msra.mxu0 0
        %1761 = vmatprep.subr.bf16.mxu0 0
        %1762 = vmatpush1.bf16.msra.mxu0 0
        %1763 = vmatprep.subr.bf16.mxu0 0
        %1764 = vmatpush1.bf16.msra.mxu0 0
        %1765 = vmatprep.subr.bf16.mxu0 0
        %1766 = vmatpush1.bf16.msra.mxu0 0
        %1767 = vmatprep.subr.bf16.mxu0 0
        %1768 = vmatpush1.bf16.msra.mxu0 0
        %1769 = vmatprep.subr.bf16.mxu0 0
        %1770 = vmatpush1.bf16.msra.mxu0 0
        %1771 = vmatprep.subr.bf16.mxu0 0
        %1772 = vmatpush1.bf16.msra.mxu0 0
        %1773 = vmatprep.mubr.bf16.mxu0 0
        %1774 = vmatmul.mubr.bf16.gmra.mrb[0].mxu0 %v1726
        %v1775 = vpop.f32.mrb[0].mxu0
        %v1776 = vadd.f32 0.0, %v1775
        %v1777 = vpop.f32.mrb[0].mxu0
        %v1778 = vpop.f32.mrb[0].mxu0
        %v1779 = vadd.f32 0.0, %v1778
        %v1780 = vpop.f32.mrb[0].mxu0
        %1781 = vmatprep.mubr.bf16.mxu0 0
        %1782 = vmatmul.mubr.bf16.gmra.mrb[0].mxu0 %v1729
        %v1783 = vpop.f32.mrb[0].mxu0
        %v1784 = vadd.f32 0.0, %v1783
        %v1785 = vpop.f32.mrb[0].mxu0
        %v1786 = vpop.f32.mrb[0].mxu0
        %v1787 = vadd.f32 0.0, %v1786
        %v1788 = vpop.f32.mrb[0].mxu0
        %1789 = vmatprep.mubr.bf16.mxu0 0
        %1790 = vmatmul.mubr.bf16.gmra.mrb[0].mxu0 %v1732
        %v1791 = vpop.f32.mrb[0].mxu0
        %v1792 = vadd.f32 0.0, %v1791
        %v1793 = vpop.f32.mrb[0].mxu0
        %v1794 = vpop.f32.mrb[0].mxu0
        %v1795 = vadd.f32 0.0, %v1794
        %v1796 = vpop.f32.mrb[0].mxu0
        %1797 = vmatprep.mubr.bf16.mxu0 0
        %1798 = vmatmul.mubr.bf16.gmra.mrb[0].mxu0 %v1735
        %v1799 = vpop.f32.mrb[0].mxu0
        %v1800 = vadd.f32 0.0, %v1799
        %v1801 = vpop.f32.mrb[0].mxu0
        %v1802 = vpop.f32.mrb[0].mxu0
        %v1803 = vadd.f32 0.0, %v1802
        %v1804 = vpop.f32.mrb[0].mxu0
        %1805 = vdwg.mxu0
        %v1806 = vld [vmem:[%s6] sm:$0xf]
        %v1807 = vld [vmem:[%s6 + $0x4] sm:$0xf]
        %v1808 = vld [vmem:[%s12 + $0x2] sm:$0x1]
        %v1809 = vlaneseq
        %v1810 = vshrl.u32 %v1809, 7
        %v1811 = vsub.s32 0, %v1810
        %v1812 = vrot.slane %v1808, %v1811
        %v1815 = vunpack.c.l.b16 %v1806
        %v1816 = vunpack.c.l.b16 %v1807
        %v1817 = vpack.c.b16 %v1816, %v1815
        %v1820 = vsel %vm1627, %v1500, 0
        %v1823 = vsel %vm1627, %v1501, 0
        %v1826 = vsel %vm1627, %v1502, 0
        %v1829 = vsel %vm1627, %v1503, 0
        %1831 = vmatprep.subr.bf16.mxu0 0
        %1832 = vmatpush1.bf16.msra.mxu0 %v1817
        %1833 = vmatprep.subr.bf16.mxu0 0
        %1834 = vmatpush1.bf16.msra.mxu0 0
        %1835 = vmatprep.subr.bf16.mxu0 0
        %1836 = vmatpush1.bf16.msra.mxu0 0
        %1837 = vmatprep.subr.bf16.mxu0 0
        %1838 = vmatpush1.bf16.msra.mxu0 0
        %1839 = vmatprep.subr.bf16.mxu0 0
        %1840 = vmatpush1.bf16.msra.mxu0 0
        %1841 = vmatprep.subr.bf16.mxu0 0
        %1842 = vmatpush1.bf16.msra.mxu0 0
        %1843 = vmatprep.subr.bf16.mxu0 0
        %1844 = vmatpush1.bf16.msra.mxu0 0
        %1845 = vmatprep.subr.bf16.mxu0 0
        %1846 = vmatpush1.bf16.msra.mxu0 0
        %1847 = vmatprep.subr.bf16.mxu0 0
        %1848 = vmatpush1.bf16.msra.mxu0 0
        %1849 = vmatprep.subr.bf16.mxu0 0
        %1850 = vmatpush1.bf16.msra.mxu0 0
        %1851 = vmatprep.subr.bf16.mxu0 0
        %1852 = vmatpush1.bf16.msra.mxu0 0
        %1853 = vmatprep.subr.bf16.mxu0 0
        %1854 = vmatpush1.bf16.msra.mxu0 0
        %1855 = vmatprep.subr.bf16.mxu0 0
        %1856 = vmatpush1.bf16.msra.mxu0 0
        %1857 = vmatprep.subr.bf16.mxu0 0
        %1858 = vmatpush1.bf16.msra.mxu0 0
        %1859 = vmatprep.subr.bf16.mxu0 0
        %1860 = vmatpush1.bf16.msra.mxu0 0
        %1861 = vmatprep.subr.bf16.mxu0 0
        %1862 = vmatpush1.bf16.msra.mxu0 0
        %1863 = vmatprep.mubr.bf16.mxu0 0
        %1864 = vmatmul.mubr.bf16.gmra.mrb[0].mxu0 %v1820
        %v1865 = vpop.f32.mrb[0].mxu0
        %v1866 = vadd.f32 %v1812, %v1865
        %v1867 = vpop.f32.mrb[0].mxu0
        %v1868 = vpop.f32.mrb[0].mxu0
        %v1869 = vadd.f32 %v1812, %v1868
        %v1870 = vpop.f32.mrb[0].mxu0
        %1871 = vmatprep.mubr.bf16.mxu0 0
        %1872 = vmatmul.mubr.bf16.gmra.mrb[0].mxu0 %v1823
        %v1873 = vpop.f32.mrb[0].mxu0
        %v1874 = vadd.f32 %v1812, %v1873
        %v1875 = vpop.f32.mrb[0].mxu0
        %v1876 = vpop.f32.mrb[0].mxu0
        %v1877 = vadd.f32 %v1812, %v1876
        %v1878 = vpop.f32.mrb[0].mxu0
        %1879 = vmatprep.mubr.bf16.mxu0 0
        %1880 = vmatmul.mubr.bf16.gmra.mrb[0].mxu0 %v1826
        %v1881 = vpop.f32.mrb[0].mxu0
        %v1882 = vadd.f32 %v1812, %v1881
        %v1883 = vpop.f32.mrb[0].mxu0
        %v1884 = vpop.f32.mrb[0].mxu0
        %v1885 = vadd.f32 %v1812, %v1884
        %v1886 = vpop.f32.mrb[0].mxu0
        %1887 = vmatprep.mubr.bf16.mxu0 0
        %1888 = vmatmul.mubr.bf16.gmra.mrb[0].mxu0 %v1829
        %v1889 = vpop.f32.mrb[0].mxu0
        %v1890 = vadd.f32 %v1812, %v1889
        %v1891 = vpop.f32.mrb[0].mxu0
        %v1892 = vpop.f32.mrb[0].mxu0
        %v1893 = vadd.f32 %v1812, %v1892
        %v1894 = vpop.f32.mrb[0].mxu0
        %1895 = vdwg.mxu0
        %v1896 = vmax.f32 %v1866, 0.0
        %v1897 = vmax.f32 %v1869, 0.0
        %v1898 = vmax.f32 %v1874, 0.0
        %v1899 = vmax.f32 %v1877, 0.0
        %v1900 = vmax.f32 %v1882, 0.0
        %v1901 = vmax.f32 %v1885, 0.0
        %v1902 = vmax.f32 %v1890, 0.0
        %v1903 = vmax.f32 %v1893, 0.0
        %v1904 = vpack.c.bf16 %v1897, %v1896
        %v1905 = vpack.c.bf16 %v1899, %v1898
        %v1906 = vpack.c.bf16 %v1901, %v1900
        %v1907 = vpack.c.bf16 %v1903, %v1902
        %v1908 = vld [vmem:[%s8] sm:$0x3]
        %v1910 = vsel %vm527, %v1904, 0
        %v1913 = vsel %vm527, %v1905, 0
        %v1916 = vsel %vm527, %v1906, 0
        %v1919 = vsel %vm527, %v1907, 0
        %v1922 = vsel %vm540, %v1908, 0
        %1924 = vmatprep.subr.bf16.mxu0 0
        %1925 = vmatpush1.bf16.msra.mxu0 %v1922
        %1926 = vmatprep.subr.bf16.mxu0 0
        %1927 = vmatpush1.bf16.msra.mxu0 0
        %1928 = vmatprep.subr.bf16.mxu0 0
        %1929 = vmatpush1.bf16.msra.mxu0 0
        %1930 = vmatprep.subr.bf16.mxu0 0
        %1931 = vmatpush1.bf16.msra.mxu0 0
        %1932 = vmatprep.subr.bf16.mxu0 0
        %1933 = vmatpush1.bf16.msra.mxu0 0
        %1934 = vmatprep.subr.bf16.mxu0 0
        %1935 = vmatpush1.bf16.msra.mxu0 0
        %1936 = vmatprep.subr.bf16.mxu0 0
        %1937 = vmatpush1.bf16.msra.mxu0 0
        %1938 = vmatprep.subr.bf16.mxu0 0
        %1939 = vmatpush1.bf16.msra.mxu0 0
        %1940 = vmatprep.subr.bf16.mxu0 0
        %1941 = vmatpush1.bf16.msra.mxu0 0
        %1942 = vmatprep.subr.bf16.mxu0 0
        %1943 = vmatpush1.bf16.msra.mxu0 0
        %1944 = vmatprep.subr.bf16.mxu0 0
        %1945 = vmatpush1.bf16.msra.mxu0 0
        %1946 = vmatprep.subr.bf16.mxu0 0
        %1947 = vmatpush1.bf16.msra.mxu0 0
        %1948 = vmatprep.subr.bf16.mxu0 0
        %1949 = vmatpush1.bf16.msra.mxu0 0
        %1950 = vmatprep.subr.bf16.mxu0 0
        %1951 = vmatpush1.bf16.msra.mxu0 0
        %1952 = vmatprep.subr.bf16.mxu0 0
        %1953 = vmatpush1.bf16.msra.mxu0 0
        %1954 = vmatprep.subr.bf16.mxu0 0
        %1955 = vmatpush1.bf16.msra.mxu0 0
        %1956 = vmatprep.mubr.bf16.mxu0 0
        %1957 = vmatmul.mubr.bf16.gmra.mrb[0].mxu0 %v1910
        %v1958 = vpop.f32.mrb[0].mxu0
        %v1959 = vadd.f32 %v1776, %v1958
        %v1960 = vpop.f32.mrb[0].mxu0
        %v1961 = vpop.f32.mrb[0].mxu0
        %v1962 = vadd.f32 %v1779, %v1961
        %v1963 = vpop.f32.mrb[0].mxu0
        %1964 = vmatprep.mubr.bf16.mxu0 0
        %1965 = vmatmul.mubr.bf16.gmra.mrb[0].mxu0 %v1913
        %v1966 = vpop.f32.mrb[0].mxu0
        %v1967 = vadd.f32 %v1784, %v1966
        %v1968 = vpop.f32.mrb[0].mxu0
        %v1969 = vpop.f32.mrb[0].mxu0
        %v1970 = vadd.f32 %v1787, %v1969
        %v1971 = vpop.f32.mrb[0].mxu0
        %1972 = vmatprep.mubr.bf16.mxu0 0
        %1973 = vmatmul.mubr.bf16.gmra.mrb[0].mxu0 %v1916
        %v1974 = vpop.f32.mrb[0].mxu0
        %v1975 = vadd.f32 %v1792, %v1974
        %v1976 = vpop.f32.mrb[0].mxu0
        %v1977 = vpop.f32.mrb[0].mxu0
        %v1978 = vadd.f32 %v1795, %v1977
        %v1979 = vpop.f32.mrb[0].mxu0
        %1980 = vmatprep.mubr.bf16.mxu0 0
        %1981 = vmatmul.mubr.bf16.gmra.mrb[0].mxu0 %v1919
        %v1982 = vpop.f32.mrb[0].mxu0
        %v1983 = vadd.f32 %v1800, %v1982
        %v1984 = vpop.f32.mrb[0].mxu0
        %v1985 = vpop.f32.mrb[0].mxu0
        %v1986 = vadd.f32 %v1803, %v1985
        %v1987 = vpop.f32.mrb[0].mxu0
        %1988 = vdwg.mxu0
        %v1989 = vld [vmem:[%s12 + $0x4] sm:$0x1]
        %v1990 = vlaneseq
        %v1991 = vshrl.u32 %v1990, 7
        %v1992 = vsub.s32 0, %v1991
        %v1993 = vrot.slane %v1989, %v1992
        %v1994 = vadd.f32 %v1959, %v1993
        %v1995 = vadd.f32 %v1962, %v1993
        %v1996 = vadd.f32 %v1967, %v1993
        %v1997 = vadd.f32 %v1970, %v1993
        %v1998 = vadd.f32 %v1975, %v1993
        %v1999 = vadd.f32 %v1978, %v1993
        %v2000 = vadd.f32 %v1983, %v1993
        %v2001 = vadd.f32 %v1986, %v1993
        %v2002 = vmax.f32 %v1994, 0.0
        %v2003 = vmax.f32 %v1995, 0.0
        %v2004 = vmax.f32 %v1996, 0.0
        %v2005 = vmax.f32 %v1997, 0.0
        %v2006 = vmax.f32 %v1998, 0.0
        %v2007 = vmax.f32 %v1999, 0.0
        %v2008 = vmax.f32 %v2000, 0.0
        %v2009 = vmax.f32 %v2001, 0.0
        %2010 = vst.msk [vmem:[#allocation2] sm:$0xff] %vm1627, 0.0
        %vm2011 = vcmask 123904
        %2012 = vst.msk [vmem:[#allocation2 + $0x8] sm:$0x3] %vm2011, 0.0
        %2013 = vst.msk [vmem:[#allocation2 + $0x10] sm:$0xff] %vm1627, 0.0
        %2014 = vst.msk [vmem:[#allocation2 + $0x18] sm:$0x3] %vm2011, 0.0
        %2015 = vst.msk [vmem:[#allocation2 + $0x20] sm:$0xff] %vm1627, 0.0
        %2016 = vst.msk [vmem:[#allocation2 + $0x28] sm:$0x3] %vm2011, 0.0
        %2017 = vst.msk [vmem:[#allocation2 + $0x30] sm:$0xff] %vm1627, 0.0
        %2018 = vst.msk [vmem:[#allocation2 + $0x38] sm:$0x3] %vm2011, 0.0
        %2019 = vst.msk [vmem:[#allocation2 + $0x40] sm:$0xff] %vm1627, 0.0
        %2020 = vst.msk [vmem:[#allocation2 + $0x48] sm:$0x3] %vm2011, 0.0
        %2021 = vst.msk [vmem:[#allocation2 + $0x50] sm:$0xff] %vm1627, 0.0
        %2022 = vst.msk [vmem:[#allocation2 + $0x58] sm:$0x3] %vm2011, 0.0
        %2023 = vst.msk [vmem:[#allocation2 + $0x60] sm:$0xff] %vm1627, 0.0
        %2024 = vst.msk [vmem:[#allocation2 + $0x68] sm:$0x3] %vm2011, 0.0
        %2025 = vst.msk [vmem:[#allocation2 + $0x70] sm:$0xff] %vm1627, 0.0
        %2026 = vst.msk [vmem:[#allocation2 + $0x78] sm:$0x3] %vm2011, 0.0
        %2027 = vst.msk [vmem:[#allocation2 + $0x80] sm:$0xff] %vm1627, 0.0
        %2028 = vst.msk [vmem:[#allocation2 + $0x88] sm:$0x3] %vm2011, 0.0
        %2029 = vst.msk [vmem:[#allocation2 + $0x90] sm:$0xff] %vm1627, 0.0
        %2030 = vst.msk [vmem:[#allocation2 + $0x98] sm:$0x3] %vm2011, 0.0
        %s2031 = scalar_lea.vmem [#allocation2], 16
        %2032 = vst.msk [vmem:[%s2031 + $0x1] sm:$0xff] %vm1627, %v2002
        %2033 = vst.msk [vmem:[%s2031 + $0x11] sm:$0xff] %vm1627, %v2003
        %2034 = vst.msk [vmem:[%s2031 + $0x21] sm:$0xff] %vm1627, %v2004
        %2035 = vst.msk [vmem:[%s2031 + $0x31] sm:$0xff] %vm1627, %v2005
        %2036 = vst.msk [vmem:[%s2031 + $0x41] sm:$0xff] %vm1627, %v2006
        %2037 = vst.msk [vmem:[%s2031 + $0x51] sm:$0xff] %vm1627, %v2007
        %2038 = vst.msk [vmem:[%s2031 + $0x61] sm:$0xff] %vm1627, %v2008
        %2039 = vst.msk [vmem:[%s2031 + $0x71] sm:$0xff] %vm1627, %v2009
        %v2040 = vld [vmem:[#allocation2] sm:$0xff]
        %v2041 = vld [vmem:[#allocation2 + $0x10] sm:$0xff]
        %v2042 = vld [vmem:[#allocation2 + $0x20] sm:$0xff]
        %v2043 = vld [vmem:[#allocation2 + $0x30] sm:$0xff]
        %v2044 = vld [vmem:[#allocation2 + $0x40] sm:$0xff]
        %v2045 = vld [vmem:[#allocation2 + $0x50] sm:$0xff]
        %v2046 = vld [vmem:[#allocation2 + $0x60] sm:$0xff]
        %v2047 = vld [vmem:[#allocation2 + $0x70] sm:$0xff]
        %v2048 = vpack.c.bf16 %v2041, %v2040
        %v2049 = vpack.c.bf16 %v2043, %v2042
        %v2050 = vpack.c.bf16 %v2045, %v2044
        %v2051 = vpack.c.bf16 %v2047, %v2046
        %v2052 = vld [vmem:[%s11] sm:$0xf]
        %v2053 = vld [vmem:[%s11 + $0x4] sm:$0xf]
        %v2054 = vld [vmem:[#allocation2 + $0x1] sm:$0xff]
        %v2055 = vld [vmem:[#allocation2 + $0x11] sm:$0xff]
        %v2056 = vld [vmem:[#allocation2 + $0x21] sm:$0xff]
        %v2057 = vld [vmem:[#allocation2 + $0x31] sm:$0xff]
        %v2058 = vld [vmem:[#allocation2 + $0x41] sm:$0xff]
        %v2059 = vld [vmem:[#allocation2 + $0x51] sm:$0xff]
        %v2060 = vld [vmem:[#allocation2 + $0x61] sm:$0xff]
        %v2061 = vld [vmem:[#allocation2 + $0x71] sm:$0xff]
        %v2062 = vpack.c.bf16 %v2055, %v2054
        %v2063 = vpack.c.bf16 %v2057, %v2056
        %v2064 = vpack.c.bf16 %v2059, %v2058
        %v2065 = vpack.c.bf16 %v2061, %v2060
        %s2066 = scalar_lea.vmem %s11, 8
        %v2067 = vld [vmem:[%s2066] sm:$0xf]
        %v2068 = vld [vmem:[%s2066 + $0x4] sm:$0xf]
        %v2071 = vunpack.c.l.b16 %v2067
        %v2072 = vunpack.c.l.b16 %v2068
        %v2073 = vpack.c.b16 %v2072, %v2071
        %v2076 = vsel %vm1627, %v2062, 0
        %v2079 = vsel %vm1627, %v2063, 0
        %v2082 = vsel %vm1627, %v2064, 0
        %v2085 = vsel %vm1627, %v2065, 0
        %2087 = vmatprep.subr.bf16.mxu0 0
        %2088 = vmatpush1.bf16.msra.mxu0 %v2073
        %2089 = vmatprep.subr.bf16.mxu0 0
        %2090 = vmatpush1.bf16.msra.mxu0 0
        %2091 = vmatprep.subr.bf16.mxu0 0
        %2092 = vmatpush1.bf16.msra.mxu0 0
        %2093 = vmatprep.subr.bf16.mxu0 0
        %2094 = vmatpush1.bf16.msra.mxu0 0
        %2095 = vmatprep.subr.bf16.mxu0 0
        %2096 = vmatpush1.bf16.msra.mxu0 0
        %2097 = vmatprep.subr.bf16.mxu0 0
        %2098 = vmatpush1.bf16.msra.mxu0 0
        %2099 = vmatprep.subr.bf16.mxu0 0
        %2100 = vmatpush1.bf16.msra.mxu0 0
        %2101 = vmatprep.subr.bf16.mxu0 0
        %2102 = vmatpush1.bf16.msra.mxu0 0
        %2103 = vmatprep.subr.bf16.mxu0 0
        %2104 = vmatpush1.bf16.msra.mxu0 0
        %2105 = vmatprep.subr.bf16.mxu0 0
        %2106 = vmatpush1.bf16.msra.mxu0 0
        %2107 = vmatprep.subr.bf16.mxu0 0
        %2108 = vmatpush1.bf16.msra.mxu0 0
        %2109 = vmatprep.subr.bf16.mxu0 0
        %2110 = vmatpush1.bf16.msra.mxu0 0
        %2111 = vmatprep.subr.bf16.mxu0 0
        %2112 = vmatpush1.bf16.msra.mxu0 0
        %2113 = vmatprep.subr.bf16.mxu0 0
        %2114 = vmatpush1.bf16.msra.mxu0 0
        %2115 = vmatprep.subr.bf16.mxu0 0
        %2116 = vmatpush1.bf16.msra.mxu0 0
        %2117 = vmatprep.subr.bf16.mxu0 0
        %2118 = vmatpush1.bf16.msra.mxu0 0
        %2119 = vmatprep.mubr.bf16.mxu0 0
        %2120 = vmatmul.mubr.bf16.gmra.mrb[0].mxu0 %v2076
        %v2121 = vpop.f32.mrb[0].mxu0
        %v2122 = vadd.f32 0.0, %v2121
        %v2123 = vpop.f32.mrb[0].mxu0
        %v2124 = vpop.f32.mrb[0].mxu0
        %v2125 = vadd.f32 0.0, %v2124
        %v2126 = vpop.f32.mrb[0].mxu0
        %2127 = vmatprep.mubr.bf16.mxu0 0
        %2128 = vmatmul.mubr.bf16.gmra.mrb[0].mxu0 %v2079
        %v2129 = vpop.f32.mrb[0].mxu0
        %v2130 = vadd.f32 0.0, %v2129
        %v2131 = vpop.f32.mrb[0].mxu0
        %v2132 = vpop.f32.mrb[0].mxu0
        %v2133 = vadd.f32 0.0, %v2132
        %v2134 = vpop.f32.mrb[0].mxu0
        %2135 = vmatprep.mubr.bf16.mxu0 0
        %2136 = vmatmul.mubr.bf16.gmra.mrb[0].mxu0 %v2082
        %v2137 = vpop.f32.mrb[0].mxu0
        %v2138 = vadd.f32 0.0, %v2137
        %v2139 = vpop.f32.mrb[0].mxu0
        %v2140 = vpop.f32.mrb[0].mxu0
        %v2141 = vadd.f32 0.0, %v2140
        %v2142 = vpop.f32.mrb[0].mxu0
        %2143 = vmatprep.mubr.bf16.mxu0 0
        %2144 = vmatmul.mubr.bf16.gmra.mrb[0].mxu0 %v2085
        %v2145 = vpop.f32.mrb[0].mxu0
        %v2146 = vadd.f32 0.0, %v2145
        %v2147 = vpop.f32.mrb[0].mxu0
        %v2148 = vpop.f32.mrb[0].mxu0
        %v2149 = vadd.f32 0.0, %v2148
        %v2150 = vpop.f32.mrb[0].mxu0
        %2151 = vdwg.mxu0
        %v2154 = vunpack.c.l.b16 %v2052
        %v2155 = vunpack.c.l.b16 %v2053
        %v2156 = vpack.c.b16 %v2155, %v2154
        %v2159 = vsel %vm1627, %v2048, 0
        %v2162 = vsel %vm1627, %v2049, 0
        %v2165 = vsel %vm1627, %v2050, 0
        %v2168 = vsel %vm1627, %v2051, 0
        %2170 = vmatprep.subr.bf16.mxu0 0
        %2171 = vmatpush1.bf16.msra.mxu0 %v2156
        %2172 = vmatprep.subr.bf16.mxu0 0
        %2173 = vmatpush1.bf16.msra.mxu0 0
        %2174 = vmatprep.subr.bf16.mxu0 0
        %2175 = vmatpush1.bf16.msra.mxu0 0
        %2176 = vmatprep.subr.bf16.mxu0 0
        %2177 = vmatpush1.bf16.msra.mxu0 0
        %2178 = vmatprep.subr.bf16.mxu0 0
        %2179 = vmatpush1.bf16.msra.mxu0 0
        %2180 = vmatprep.subr.bf16.mxu0 0
        %2181 = vmatpush1.bf16.msra.mxu0 0
        %2182 = vmatprep.subr.bf16.mxu0 0
        %2183 = vmatpush1.bf16.msra.mxu0 0
        %2184 = vmatprep.subr.bf16.mxu0 0
        %2185 = vmatpush1.bf16.msra.mxu0 0
        %2186 = vmatprep.subr.bf16.mxu0 0
        %2187 = vmatpush1.bf16.msra.mxu0 0
        %2188 = vmatprep.subr.bf16.mxu0 0
        %2189 = vmatpush1.bf16.msra.mxu0 0
        %2190 = vmatprep.subr.bf16.mxu0 0
        %2191 = vmatpush1.bf16.msra.mxu0 0
        %2192 = vmatprep.subr.bf16.mxu0 0
        %2193 = vmatpush1.bf16.msra.mxu0 0
        %2194 = vmatprep.subr.bf16.mxu0 0
        %2195 = vmatpush1.bf16.msra.mxu0 0
        %2196 = vmatprep.subr.bf16.mxu0 0
        %2197 = vmatpush1.bf16.msra.mxu0 0
        %2198 = vmatprep.subr.bf16.mxu0 0
        %2199 = vmatpush1.bf16.msra.mxu0 0
        %2200 = vmatprep.subr.bf16.mxu0 0
        %2201 = vmatpush1.bf16.msra.mxu0 0
        %2202 = vmatprep.mubr.bf16.mxu0 0
        %2203 = vmatmul.mubr.bf16.gmra.mrb[0].mxu0 %v2159
        %v2204 = vpop.f32.mrb[0].mxu0
        %v2205 = vadd.f32 %v2122, %v2204
        %v2206 = vpop.f32.mrb[0].mxu0
        %v2207 = vpop.f32.mrb[0].mxu0
        %v2208 = vadd.f32 %v2125, %v2207
        %v2209 = vpop.f32.mrb[0].mxu0
        %2210 = vmatprep.mubr.bf16.mxu0 0
        %2211 = vmatmul.mubr.bf16.gmra.mrb[0].mxu0 %v2162
        %v2212 = vpop.f32.mrb[0].mxu0
        %v2213 = vadd.f32 %v2130, %v2212
        %v2214 = vpop.f32.mrb[0].mxu0
        %v2215 = vpop.f32.mrb[0].mxu0
        %v2216 = vadd.f32 %v2133, %v2215
        %v2217 = vpop.f32.mrb[0].mxu0
        %2218 = vmatprep.mubr.bf16.mxu0 0
        %2219 = vmatmul.mubr.bf16.gmra.mrb[0].mxu0 %v2165
        %v2220 = vpop.f32.mrb[0].mxu0
        %v2221 = vadd.f32 %v2138, %v2220
        %v2222 = vpop.f32.mrb[0].mxu0
        %v2223 = vpop.f32.mrb[0].mxu0
        %v2224 = vadd.f32 %v2141, %v2223
        %v2225 = vpop.f32.mrb[0].mxu0
        %2226 = vmatprep.mubr.bf16.mxu0 0
        %2227 = vmatmul.mubr.bf16.gmra.mrb[0].mxu0 %v2168
        %v2228 = vpop.f32.mrb[0].mxu0
        %v2229 = vadd.f32 %v2146, %v2228
        %v2230 = vpop.f32.mrb[0].mxu0
        %v2231 = vpop.f32.mrb[0].mxu0
        %v2232 = vadd.f32 %v2149, %v2231
        %v2233 = vpop.f32.mrb[0].mxu0
        %2234 = vdwg.mxu0
        %v2235 = vld [vmem:[#allocation2 + $0x2] sm:$0xff]
        %v2236 = vld [vmem:[#allocation2 + $0x12] sm:$0xff]
        %v2237 = vld [vmem:[#allocation2 + $0x22] sm:$0xff]
        %v2238 = vld [vmem:[#allocation2 + $0x32] sm:$0xff]
        %v2239 = vld [vmem:[#allocation2 + $0x42] sm:$0xff]
        %v2240 = vld [vmem:[#allocation2 + $0x52] sm:$0xff]
        %v2241 = vld [vmem:[#allocation2 + $0x62] sm:$0xff]
        %v2242 = vld [vmem:[#allocation2 + $0x72] sm:$0xff]
        %v2243 = vpack.c.bf16 %v2236, %v2235
        %v2244 = vpack.c.bf16 %v2238, %v2237
        %v2245 = vpack.c.bf16 %v2240, %v2239
        %v2246 = vpack.c.bf16 %v2242, %v2241
        %s2247 = scalar_lea.vmem %s11, 16
        %v2248 = vld [vmem:[%s2247] sm:$0xf]
        %v2249 = vld [vmem:[%s2247 + $0x4] sm:$0xf]
        %v2252 = vunpack.c.l.b16 %v2248
        %v2253 = vunpack.c.l.b16 %v2249
        %v2254 = vpack.c.b16 %v2253, %v2252
        %v2257 = vsel %vm1627, %v2243, 0
        %v2260 = vsel %vm1627, %v2244, 0
        %v2263 = vsel %vm1627, %v2245, 0
        %v2266 = vsel %vm1627, %v2246, 0
        %2268 = vmatprep.subr.bf16.mxu0 0
        %2269 = vmatpush1.bf16.msra.mxu0 %v2254
        %2270 = vmatprep.subr.bf16.mxu0 0
        %2271 = vmatpush1.bf16.msra.mxu0 0
        %2272 = vmatprep.subr.bf16.mxu0 0
        %2273 = vmatpush1.bf16.msra.mxu0 0
        %2274 = vmatprep.subr.bf16.mxu0 0
        %2275 = vmatpush1.bf16.msra.mxu0 0
        %2276 = vmatprep.subr.bf16.mxu0 0
        %2277 = vmatpush1.bf16.msra.mxu0 0
        %2278 = vmatprep.subr.bf16.mxu0 0
        %2279 = vmatpush1.bf16.msra.mxu0 0
        %2280 = vmatprep.subr.bf16.mxu0 0
        %2281 = vmatpush1.bf16.msra.mxu0 0
        %2282 = vmatprep.subr.bf16.mxu0 0
        %2283 = vmatpush1.bf16.msra.mxu0 0
        %2284 = vmatprep.subr.bf16.mxu0 0
        %2285 = vmatpush1.bf16.msra.mxu0 0
        %2286 = vmatprep.subr.bf16.mxu0 0
        %2287 = vmatpush1.bf16.msra.mxu0 0
        %2288 = vmatprep.subr.bf16.mxu0 0
        %2289 = vmatpush1.bf16.msra.mxu0 0
        %2290 = vmatprep.subr.bf16.mxu0 0
        %2291 = vmatpush1.bf16.msra.mxu0 0
        %2292 = vmatprep.subr.bf16.mxu0 0
        %2293 = vmatpush1.bf16.msra.mxu0 0
        %2294 = vmatprep.subr.bf16.mxu0 0
        %2295 = vmatpush1.bf16.msra.mxu0 0
        %2296 = vmatprep.subr.bf16.mxu0 0
        %2297 = vmatpush1.bf16.msra.mxu0 0
        %2298 = vmatprep.subr.bf16.mxu0 0
        %2299 = vmatpush1.bf16.msra.mxu0 0
        %2300 = vmatprep.mubr.bf16.mxu0 0
        %2301 = vmatmul.mubr.bf16.gmra.mrb[0].mxu0 %v2257
        %v2302 = vpop.f32.mrb[0].mxu0
        %v2303 = vadd.f32 0.0, %v2302
        %v2304 = vpop.f32.mrb[0].mxu0
        %v2305 = vpop.f32.mrb[0].mxu0
        %v2306 = vadd.f32 0.0, %v2305
        %v2307 = vpop.f32.mrb[0].mxu0
        %2308 = vmatprep.mubr.bf16.mxu0 0
        %2309 = vmatmul.mubr.bf16.gmra.mrb[0].mxu0 %v2260
        %v2310 = vpop.f32.mrb[0].mxu0
        %v2311 = vadd.f32 0.0, %v2310
        %v2312 = vpop.f32.mrb[0].mxu0
        %v2313 = vpop.f32.mrb[0].mxu0
        %v2314 = vadd.f32 0.0, %v2313
        %v2315 = vpop.f32.mrb[0].mxu0
        %2316 = vmatprep.mubr.bf16.mxu0 0
        %2317 = vmatmul.mubr.bf16.gmra.mrb[0].mxu0 %v2263
        %v2318 = vpop.f32.mrb[0].mxu0
        %v2319 = vadd.f32 0.0, %v2318
        %v2320 = vpop.f32.mrb[0].mxu0
        %v2321 = vpop.f32.mrb[0].mxu0
        %v2322 = vadd.f32 0.0, %v2321
        %v2323 = vpop.f32.mrb[0].mxu0
        %2324 = vmatprep.mubr.bf16.mxu0 0
        %2325 = vmatmul.mubr.bf16.gmra.mrb[0].mxu0 %v2266
        %v2326 = vpop.f32.mrb[0].mxu0
        %v2327 = vadd.f32 0.0, %v2326
        %v2328 = vpop.f32.mrb[0].mxu0
        %v2329 = vpop.f32.mrb[0].mxu0
        %v2330 = vadd.f32 0.0, %v2329
        %v2331 = vpop.f32.mrb[0].mxu0
        %2332 = vdwg.mxu0
        %v2333 = vadd.f32 %v2205, %v2303
        %v2334 = vadd.f32 %v2208, %v2306
        %v2335 = vadd.f32 %v2213, %v2311
        %v2336 = vadd.f32 %v2216, %v2314
        %v2337 = vadd.f32 %v2221, %v2319
        %v2338 = vadd.f32 %v2224, %v2322
        %v2339 = vadd.f32 %v2229, %v2327
        %v2340 = vadd.f32 %v2232, %v2330
        %v2341 = vld [vmem:[%s2031] sm:$0xff]
        %v2342 = vld [vmem:[%s2031 + $0x10] sm:$0xff]
        %v2343 = vld [vmem:[%s2031 + $0x20] sm:$0xff]
        %v2344 = vld [vmem:[%s2031 + $0x30] sm:$0xff]
        %v2345 = vld [vmem:[%s2031 + $0x40] sm:$0xff]
        %v2346 = vld [vmem:[%s2031 + $0x50] sm:$0xff]
        %v2347 = vld [vmem:[%s2031 + $0x60] sm:$0xff]
        %v2348 = vld [vmem:[%s2031 + $0x70] sm:$0xff]
        %v2349 = vpack.c.bf16 %v2342, %v2341
        %v2350 = vpack.c.bf16 %v2344, %v2343
        %v2351 = vpack.c.bf16 %v2346, %v2345
        %v2352 = vpack.c.bf16 %v2348, %v2347
        %s2353 = scalar_lea.vmem %s11, 24
        %v2354 = vld [vmem:[%s2353] sm:$0xf]
        %v2355 = vld [vmem:[%s2353 + $0x4] sm:$0xf]
        %v2358 = vunpack.c.l.b16 %v2354
        %v2359 = vunpack.c.l.b16 %v2355
        %v2360 = vpack.c.b16 %v2359, %v2358
        %v2363 = vsel %vm1627, %v2349, 0
        %v2366 = vsel %vm1627, %v2350, 0
        %v2369 = vsel %vm1627, %v2351, 0
        %v2372 = vsel %vm1627, %v2352, 0
        %2374 = vmatprep.subr.bf16.mxu0 0
        %2375 = vmatpush1.bf16.msra.mxu0 %v2360
        %2376 = vmatprep.subr.bf16.mxu0 0
        %2377 = vmatpush1.bf16.msra.mxu0 0
        %2378 = vmatprep.subr.bf16.mxu0 0
        %2379 = vmatpush1.bf16.msra.mxu0 0
        %2380 = vmatprep.subr.bf16.mxu0 0
        %2381 = vmatpush1.bf16.msra.mxu0 0
        %2382 = vmatprep.subr.bf16.mxu0 0
        %2383 = vmatpush1.bf16.msra.mxu0 0
        %2384 = vmatprep.subr.bf16.mxu0 0
        %2385 = vmatpush1.bf16.msra.mxu0 0
        %2386 = vmatprep.subr.bf16.mxu0 0
        %2387 = vmatpush1.bf16.msra.mxu0 0
        %2388 = vmatprep.subr.bf16.mxu0 0
        %2389 = vmatpush1.bf16.msra.mxu0 0
        %2390 = vmatprep.subr.bf16.mxu0 0
        %2391 = vmatpush1.bf16.msra.mxu0 0
        %2392 = vmatprep.subr.bf16.mxu0 0
        %2393 = vmatpush1.bf16.msra.mxu0 0
        %2394 = vmatprep.subr.bf16.mxu0 0
        %2395 = vmatpush1.bf16.msra.mxu0 0
        %2396 = vmatprep.subr.bf16.mxu0 0
        %2397 = vmatpush1.bf16.msra.mxu0 0
        %2398 = vmatprep.subr.bf16.mxu0 0
        %2399 = vmatpush1.bf16.msra.mxu0 0
        %2400 = vmatprep.subr.bf16.mxu0 0
        %2401 = vmatpush1.bf16.msra.mxu0 0
        %2402 = vmatprep.subr.bf16.mxu0 0
        %2403 = vmatpush1.bf16.msra.mxu0 0
        %2404 = vmatprep.subr.bf16.mxu0 0
        %2405 = vmatpush1.bf16.msra.mxu0 0
        %2406 = vmatprep.mubr.bf16.mxu0 0
        %2407 = vmatmul.mubr.bf16.gmra.mrb[0].mxu0 %v2363
        %v2408 = vpop.f32.mrb[0].mxu0
        %v2409 = vadd.f32 0.0, %v2408
        %v2410 = vpop.f32.mrb[0].mxu0
        %v2411 = vpop.f32.mrb[0].mxu0
        %v2412 = vadd.f32 0.0, %v2411
        %v2413 = vpop.f32.mrb[0].mxu0
        %2414 = vmatprep.mubr.bf16.mxu0 0
        %2415 = vmatmul.mubr.bf16.gmra.mrb[0].mxu0 %v2366
        %v2416 = vpop.f32.mrb[0].mxu0
        %v2417 = vadd.f32 0.0, %v2416
        %v2418 = vpop.f32.mrb[0].mxu0
        %v2419 = vpop.f32.mrb[0].mxu0
        %v2420 = vadd.f32 0.0, %v2419
        %v2421 = vpop.f32.mrb[0].mxu0
        %2422 = vmatprep.mubr.bf16.mxu0 0
        %2423 = vmatmul.mubr.bf16.gmra.mrb[0].mxu0 %v2369
        %v2424 = vpop.f32.mrb[0].mxu0
        %v2425 = vadd.f32 0.0, %v2424
        %v2426 = vpop.f32.mrb[0].mxu0
        %v2427 = vpop.f32.mrb[0].mxu0
        %v2428 = vadd.f32 0.0, %v2427
        %v2429 = vpop.f32.mrb[0].mxu0
        %2430 = vmatprep.mubr.bf16.mxu0 0
        %2431 = vmatmul.mubr.bf16.gmra.mrb[0].mxu0 %v2372
        %v2432 = vpop.f32.mrb[0].mxu0
        %v2433 = vadd.f32 0.0, %v2432
        %v2434 = vpop.f32.mrb[0].mxu0
        %v2435 = vpop.f32.mrb[0].mxu0
        %v2436 = vadd.f32 0.0, %v2435
        %v2437 = vpop.f32.mrb[0].mxu0
        %2438 = vdwg.mxu0
        %v2439 = vadd.f32 %v2333, %v2409
        %v2440 = vadd.f32 %v2334, %v2412
        %v2441 = vadd.f32 %v2335, %v2417
        %v2442 = vadd.f32 %v2336, %v2420
        %v2443 = vadd.f32 %v2337, %v2425
        %v2444 = vadd.f32 %v2338, %v2428
        %v2445 = vadd.f32 %v2339, %v2433
        %v2446 = vadd.f32 %v2340, %v2436
        %v2447 = vld [vmem:[%s2031 + $0x1] sm:$0xff]
        %v2448 = vld [vmem:[%s2031 + $0x11] sm:$0xff]
        %v2449 = vld [vmem:[%s2031 + $0x21] sm:$0xff]
        %v2450 = vld [vmem:[%s2031 + $0x31] sm:$0xff]
        %v2451 = vld [vmem:[%s2031 + $0x41] sm:$0xff]
        %v2452 = vld [vmem:[%s2031 + $0x51] sm:$0xff]
        %v2453 = vld [vmem:[%s2031 + $0x61] sm:$0xff]
        %v2454 = vld [vmem:[%s2031 + $0x71] sm:$0xff]
        %v2455 = vpack.c.bf16 %v2448, %v2447
        %v2456 = vpack.c.bf16 %v2450, %v2449
        %v2457 = vpack.c.bf16 %v2452, %v2451
        %v2458 = vpack.c.bf16 %v2454, %v2453
        %s2459 = scalar_lea.vmem %s11, 32
        %v2460 = vld [vmem:[%s2459] sm:$0xf]
        %v2461 = vld [vmem:[%s2459 + $0x4] sm:$0xf]
        %v2464 = vunpack.c.l.b16 %v2460
        %v2465 = vunpack.c.l.b16 %v2461
        %v2466 = vpack.c.b16 %v2465, %v2464
        %v2469 = vsel %vm1627, %v2455, 0
        %v2472 = vsel %vm1627, %v2456, 0
        %v2475 = vsel %vm1627, %v2457, 0
        %v2478 = vsel %vm1627, %v2458, 0
        %2480 = vmatprep.subr.bf16.mxu0 0
        %2481 = vmatpush1.bf16.msra.mxu0 %v2466
        %2482 = vmatprep.subr.bf16.mxu0 0
        %2483 = vmatpush1.bf16.msra.mxu0 0
        %2484 = vmatprep.subr.bf16.mxu0 0
        %2485 = vmatpush1.bf16.msra.mxu0 0
        %2486 = vmatprep.subr.bf16.mxu0 0
        %2487 = vmatpush1.bf16.msra.mxu0 0
        %2488 = vmatprep.subr.bf16.mxu0 0
        %2489 = vmatpush1.bf16.msra.mxu0 0
        %2490 = vmatprep.subr.bf16.mxu0 0
        %2491 = vmatpush1.bf16.msra.mxu0 0
        %2492 = vmatprep.subr.bf16.mxu0 0
        %2493 = vmatpush1.bf16.msra.mxu0 0
        %2494 = vmatprep.subr.bf16.mxu0 0
        %2495 = vmatpush1.bf16.msra.mxu0 0
        %2496 = vmatprep.subr.bf16.mxu0 0
        %2497 = vmatpush1.bf16.msra.mxu0 0
        %2498 = vmatprep.subr.bf16.mxu0 0
        %2499 = vmatpush1.bf16.msra.mxu0 0
        %2500 = vmatprep.subr.bf16.mxu0 0
        %2501 = vmatpush1.bf16.msra.mxu0 0
        %2502 = vmatprep.subr.bf16.mxu0 0
        %2503 = vmatpush1.bf16.msra.mxu0 0
        %2504 = vmatprep.subr.bf16.mxu0 0
        %2505 = vmatpush1.bf16.msra.mxu0 0
        %2506 = vmatprep.subr.bf16.mxu0 0
        %2507 = vmatpush1.bf16.msra.mxu0 0
        %2508 = vmatprep.subr.bf16.mxu0 0
        %2509 = vmatpush1.bf16.msra.mxu0 0
        %2510 = vmatprep.subr.bf16.mxu0 0
        %2511 = vmatpush1.bf16.msra.mxu0 0
        %2512 = vmatprep.mubr.bf16.mxu0 0
        %2513 = vmatmul.mubr.bf16.gmra.mrb[0].mxu0 %v2469
        %v2514 = vpop.f32.mrb[0].mxu0
        %v2515 = vadd.f32 0.0, %v2514
        %v2516 = vpop.f32.mrb[0].mxu0
        %v2517 = vpop.f32.mrb[0].mxu0
        %v2518 = vadd.f32 0.0, %v2517
        %v2519 = vpop.f32.mrb[0].mxu0
        %2520 = vmatprep.mubr.bf16.mxu0 0
        %2521 = vmatmul.mubr.bf16.gmra.mrb[0].mxu0 %v2472
        %v2522 = vpop.f32.mrb[0].mxu0
        %v2523 = vadd.f32 0.0, %v2522
        %v2524 = vpop.f32.mrb[0].mxu0
        %v2525 = vpop.f32.mrb[0].mxu0
        %v2526 = vadd.f32 0.0, %v2525
        %v2527 = vpop.f32.mrb[0].mxu0
        %2528 = vmatprep.mubr.bf16.mxu0 0
        %2529 = vmatmul.mubr.bf16.gmra.mrb[0].mxu0 %v2475
        %v2530 = vpop.f32.mrb[0].mxu0
        %v2531 = vadd.f32 0.0, %v2530
        %v2532 = vpop.f32.mrb[0].mxu0
        %v2533 = vpop.f32.mrb[0].mxu0
        %v2534 = vadd.f32 0.0, %v2533
        %v2535 = vpop.f32.mrb[0].mxu0
        %2536 = vmatprep.mubr.bf16.mxu0 0
        %2537 = vmatmul.mubr.bf16.gmra.mrb[0].mxu0 %v2478
        %v2538 = vpop.f32.mrb[0].mxu0
        %v2539 = vadd.f32 0.0, %v2538
        %v2540 = vpop.f32.mrb[0].mxu0
        %v2541 = vpop.f32.mrb[0].mxu0
        %v2542 = vadd.f32 0.0, %v2541
        %v2543 = vpop.f32.mrb[0].mxu0
        %2544 = vdwg.mxu0
        %v2545 = vadd.f32 %v2439, %v2515
        %v2546 = vadd.f32 %v2440, %v2518
        %v2547 = vadd.f32 %v2441, %v2523
        %v2548 = vadd.f32 %v2442, %v2526
        %v2549 = vadd.f32 %v2443, %v2531
        %v2550 = vadd.f32 %v2444, %v2534
        %v2551 = vadd.f32 %v2445, %v2539
        %v2552 = vadd.f32 %v2446, %v2542
        %v2553 = vld [vmem:[%s2031 + $0x2] sm:$0xff]
        %v2554 = vld [vmem:[%s2031 + $0x12] sm:$0xff]
        %v2555 = vld [vmem:[%s2031 + $0x22] sm:$0xff]
        %v2556 = vld [vmem:[%s2031 + $0x32] sm:$0xff]
        %v2557 = vld [vmem:[%s2031 + $0x42] sm:$0xff]
        %v2558 = vld [vmem:[%s2031 + $0x52] sm:$0xff]
        %v2559 = vld [vmem:[%s2031 + $0x62] sm:$0xff]
        %v2560 = vld [vmem:[%s2031 + $0x72] sm:$0xff]
        %v2561 = vpack.c.bf16 %v2554, %v2553
        %v2562 = vpack.c.bf16 %v2556, %v2555
        %v2563 = vpack.c.bf16 %v2558, %v2557
        %v2564 = vpack.c.bf16 %v2560, %v2559
        %s2565 = scalar_lea.vmem %s11, 40
        %v2566 = vld [vmem:[%s2565] sm:$0xf]
        %v2567 = vld [vmem:[%s2565 + $0x4] sm:$0xf]
        %v2570 = vunpack.c.l.b16 %v2566
        %v2571 = vunpack.c.l.b16 %v2567
        %v2572 = vpack.c.b16 %v2571, %v2570
        %v2575 = vsel %vm1627, %v2561, 0
        %v2578 = vsel %vm1627, %v2562, 0
        %v2581 = vsel %vm1627, %v2563, 0
        %v2584 = vsel %vm1627, %v2564, 0
        %2586 = vmatprep.subr.bf16.mxu0 0
        %2587 = vmatpush1.bf16.msra.mxu0 %v2572
        %2588 = vmatprep.subr.bf16.mxu0 0
        %2589 = vmatpush1.bf16.msra.mxu0 0
        %2590 = vmatprep.subr.bf16.mxu0 0
        %2591 = vmatpush1.bf16.msra.mxu0 0
        %2592 = vmatprep.subr.bf16.mxu0 0
        %2593 = vmatpush1.bf16.msra.mxu0 0
        %2594 = vmatprep.subr.bf16.mxu0 0
        %2595 = vmatpush1.bf16.msra.mxu0 0
        %2596 = vmatprep.subr.bf16.mxu0 0
        %2597 = vmatpush1.bf16.msra.mxu0 0
        %2598 = vmatprep.subr.bf16.mxu0 0
        %2599 = vmatpush1.bf16.msra.mxu0 0
        %2600 = vmatprep.subr.bf16.mxu0 0
        %2601 = vmatpush1.bf16.msra.mxu0 0
        %2602 = vmatprep.subr.bf16.mxu0 0
        %2603 = vmatpush1.bf16.msra.mxu0 0
        %2604 = vmatprep.subr.bf16.mxu0 0
        %2605 = vmatpush1.bf16.msra.mxu0 0
        %2606 = vmatprep.subr.bf16.mxu0 0
        %2607 = vmatpush1.bf16.msra.mxu0 0
        %2608 = vmatprep.subr.bf16.mxu0 0
        %2609 = vmatpush1.bf16.msra.mxu0 0
        %2610 = vmatprep.subr.bf16.mxu0 0
        %2611 = vmatpush1.bf16.msra.mxu0 0
        %2612 = vmatprep.subr.bf16.mxu0 0
        %2613 = vmatpush1.bf16.msra.mxu0 0
        %2614 = vmatprep.subr.bf16.mxu0 0
        %2615 = vmatpush1.bf16.msra.mxu0 0
        %2616 = vmatprep.subr.bf16.mxu0 0
        %2617 = vmatpush1.bf16.msra.mxu0 0
        %2618 = vmatprep.mubr.bf16.mxu0 0
        %2619 = vmatmul.mubr.bf16.gmra.mrb[0].mxu0 %v2575
        %v2620 = vpop.f32.mrb[0].mxu0
        %v2621 = vadd.f32 0.0, %v2620
        %v2622 = vpop.f32.mrb[0].mxu0
        %v2623 = vpop.f32.mrb[0].mxu0
        %v2624 = vadd.f32 0.0, %v2623
        %v2625 = vpop.f32.mrb[0].mxu0
        %2626 = vmatprep.mubr.bf16.mxu0 0
        %2627 = vmatmul.mubr.bf16.gmra.mrb[0].mxu0 %v2578
        %v2628 = vpop.f32.mrb[0].mxu0
        %v2629 = vadd.f32 0.0, %v2628
        %v2630 = vpop.f32.mrb[0].mxu0
        %v2631 = vpop.f32.mrb[0].mxu0
        %v2632 = vadd.f32 0.0, %v2631
        %v2633 = vpop.f32.mrb[0].mxu0
        %2634 = vmatprep.mubr.bf16.mxu0 0
        %2635 = vmatmul.mubr.bf16.gmra.mrb[0].mxu0 %v2581
        %v2636 = vpop.f32.mrb[0].mxu0
        %v2637 = vadd.f32 0.0, %v2636
        %v2638 = vpop.f32.mrb[0].mxu0
        %v2639 = vpop.f32.mrb[0].mxu0
        %v2640 = vadd.f32 0.0, %v2639
        %v2641 = vpop.f32.mrb[0].mxu0
        %2642 = vmatprep.mubr.bf16.mxu0 0
        %2643 = vmatmul.mubr.bf16.gmra.mrb[0].mxu0 %v2584
        %v2644 = vpop.f32.mrb[0].mxu0
        %v2645 = vadd.f32 0.0, %v2644
        %v2646 = vpop.f32.mrb[0].mxu0
        %v2647 = vpop.f32.mrb[0].mxu0
        %v2648 = vadd.f32 0.0, %v2647
        %v2649 = vpop.f32.mrb[0].mxu0
        %2650 = vdwg.mxu0
        %v2651 = vadd.f32 %v2545, %v2621
        %v2652 = vadd.f32 %v2546, %v2624
        %v2653 = vadd.f32 %v2547, %v2629
        %v2654 = vadd.f32 %v2548, %v2632
        %v2655 = vadd.f32 %v2549, %v2637
        %v2656 = vadd.f32 %v2550, %v2640
        %v2657 = vadd.f32 %v2551, %v2645
        %v2658 = vadd.f32 %v2552, %v2648
        %s2659 = scalar_lea.vmem [#allocation2], 32
        %v2660 = vld [vmem:[%s2659] sm:$0xff]
        %v2661 = vld [vmem:[%s2659 + $0x10] sm:$0xff]
        %v2662 = vld [vmem:[%s2659 + $0x20] sm:$0xff]
        %v2663 = vld [vmem:[%s2659 + $0x30] sm:$0xff]
        %v2664 = vld [vmem:[%s2659 + $0x40] sm:$0xff]
        %v2665 = vld [vmem:[%s2659 + $0x50] sm:$0xff]
        %v2666 = vld [vmem:[%s2659 + $0x60] sm:$0xff]
        %v2667 = vld [vmem:[%s2659 + $0x70] sm:$0xff]
        %v2668 = vpack.c.bf16 %v2661, %v2660
        %v2669 = vpack.c.bf16 %v2663, %v2662
        %v2670 = vpack.c.bf16 %v2665, %v2664
        %v2671 = vpack.c.bf16 %v2667, %v2666
        %s2672 = scalar_lea.vmem %s11, 48
        %v2673 = vld [vmem:[%s2672] sm:$0xf]
        %v2674 = vld [vmem:[%s2672 + $0x4] sm:$0xf]
        %v2677 = vunpack.c.l.b16 %v2673
        %v2678 = vunpack.c.l.b16 %v2674
        %v2679 = vpack.c.b16 %v2678, %v2677
        %v2682 = vsel %vm1627, %v2668, 0
        %v2685 = vsel %vm1627, %v2669, 0
        %v2688 = vsel %vm1627, %v2670, 0
        %v2691 = vsel %vm1627, %v2671, 0
        %2693 = vmatprep.subr.bf16.mxu0 0
        %2694 = vmatpush1.bf16.msra.mxu0 %v2679
        %2695 = vmatprep.subr.bf16.mxu0 0
        %2696 = vmatpush1.bf16.msra.mxu0 0
        %2697 = vmatprep.subr.bf16.mxu0 0
        %2698 = vmatpush1.bf16.msra.mxu0 0
        %2699 = vmatprep.subr.bf16.mxu0 0
        %2700 = vmatpush1.bf16.msra.mxu0 0
        %2701 = vmatprep.subr.bf16.mxu0 0
        %2702 = vmatpush1.bf16.msra.mxu0 0
        %2703 = vmatprep.subr.bf16.mxu0 0
        %2704 = vmatpush1.bf16.msra.mxu0 0
        %2705 = vmatprep.subr.bf16.mxu0 0
        %2706 = vmatpush1.bf16.msra.mxu0 0
        %2707 = vmatprep.subr.bf16.mxu0 0
        %2708 = vmatpush1.bf16.msra.mxu0 0
        %2709 = vmatprep.subr.bf16.mxu0 0
        %2710 = vmatpush1.bf16.msra.mxu0 0
        %2711 = vmatprep.subr.bf16.mxu0 0
        %2712 = vmatpush1.bf16.msra.mxu0 0
        %2713 = vmatprep.subr.bf16.mxu0 0
        %2714 = vmatpush1.bf16.msra.mxu0 0
        %2715 = vmatprep.subr.bf16.mxu0 0
        %2716 = vmatpush1.bf16.msra.mxu0 0
        %2717 = vmatprep.subr.bf16.mxu0 0
        %2718 = vmatpush1.bf16.msra.mxu0 0
        %2719 = vmatprep.subr.bf16.mxu0 0
        %2720 = vmatpush1.bf16.msra.mxu0 0
        %2721 = vmatprep.subr.bf16.mxu0 0
        %2722 = vmatpush1.bf16.msra.mxu0 0
        %2723 = vmatprep.subr.bf16.mxu0 0
        %2724 = vmatpush1.bf16.msra.mxu0 0
        %2725 = vmatprep.mubr.bf16.mxu0 0
        %2726 = vmatmul.mubr.bf16.gmra.mrb[0].mxu0 %v2682
        %v2727 = vpop.f32.mrb[0].mxu0
        %v2728 = vadd.f32 0.0, %v2727
        %v2729 = vpop.f32.mrb[0].mxu0
        %v2730 = vpop.f32.mrb[0].mxu0
        %v2731 = vadd.f32 0.0, %v2730
        %v2732 = vpop.f32.mrb[0].mxu0
        %2733 = vmatprep.mubr.bf16.mxu0 0
        %2734 = vmatmul.mubr.bf16.gmra.mrb[0].mxu0 %v2685
        %v2735 = vpop.f32.mrb[0].mxu0
        %v2736 = vadd.f32 0.0, %v2735
        %v2737 = vpop.f32.mrb[0].mxu0
        %v2738 = vpop.f32.mrb[0].mxu0
        %v2739 = vadd.f32 0.0, %v2738
        %v2740 = vpop.f32.mrb[0].mxu0
        %2741 = vmatprep.mubr.bf16.mxu0 0
        %2742 = vmatmul.mubr.bf16.gmra.mrb[0].mxu0 %v2688
        %v2743 = vpop.f32.mrb[0].mxu0
        %v2744 = vadd.f32 0.0, %v2743
        %v2745 = vpop.f32.mrb[0].mxu0
        %v2746 = vpop.f32.mrb[0].mxu0
        %v2747 = vadd.f32 0.0, %v2746
        %v2748 = vpop.f32.mrb[0].mxu0
        %2749 = vmatprep.mubr.bf16.mxu0 0
        %2750 = vmatmul.mubr.bf16.gmra.mrb[0].mxu0 %v2691
        %v2751 = vpop.f32.mrb[0].mxu0
        %v2752 = vadd.f32 0.0, %v2751
        %v2753 = vpop.f32.mrb[0].mxu0
        %v2754 = vpop.f32.mrb[0].mxu0
        %v2755 = vadd.f32 0.0, %v2754
        %v2756 = vpop.f32.mrb[0].mxu0
        %2757 = vdwg.mxu0
        %v2758 = vadd.f32 %v2651, %v2728
        %v2759 = vadd.f32 %v2652, %v2731
        %v2760 = vadd.f32 %v2653, %v2736
        %v2761 = vadd.f32 %v2654, %v2739
        %v2762 = vadd.f32 %v2655, %v2744
        %v2763 = vadd.f32 %v2656, %v2747
        %v2764 = vadd.f32 %v2657, %v2752
        %v2765 = vadd.f32 %v2658, %v2755
        %v2766 = vld [vmem:[%s2659 + $0x1] sm:$0xff]
        %v2767 = vld [vmem:[%s2659 + $0x11] sm:$0xff]
        %v2768 = vld [vmem:[%s2659 + $0x21] sm:$0xff]
        %v2769 = vld [vmem:[%s2659 + $0x31] sm:$0xff]
        %v2770 = vld [vmem:[%s2659 + $0x41] sm:$0xff]
        %v2771 = vld [vmem:[%s2659 + $0x51] sm:$0xff]
        %v2772 = vld [vmem:[%s2659 + $0x61] sm:$0xff]
        %v2773 = vld [vmem:[%s2659 + $0x71] sm:$0xff]
        %v2774 = vpack.c.bf16 %v2767, %v2766
        %v2775 = vpack.c.bf16 %v2769, %v2768
        %v2776 = vpack.c.bf16 %v2771, %v2770
        %v2777 = vpack.c.bf16 %v2773, %v2772
        %s2778 = scalar_lea.vmem %s11, 56
        %v2779 = vld [vmem:[%s2778] sm:$0xf]
        %v2780 = vld [vmem:[%s2778 + $0x4] sm:$0xf]
        %v2783 = vunpack.c.l.b16 %v2779
        %v2784 = vunpack.c.l.b16 %v2780
        %v2785 = vpack.c.b16 %v2784, %v2783
        %v2788 = vsel %vm1627, %v2774, 0
        %v2791 = vsel %vm1627, %v2775, 0
        %v2794 = vsel %vm1627, %v2776, 0
        %v2797 = vsel %vm1627, %v2777, 0
        %2799 = vmatprep.subr.bf16.mxu0 0
        %2800 = vmatpush1.bf16.msra.mxu0 %v2785
        %2801 = vmatprep.subr.bf16.mxu0 0
        %2802 = vmatpush1.bf16.msra.mxu0 0
        %2803 = vmatprep.subr.bf16.mxu0 0
        %2804 = vmatpush1.bf16.msra.mxu0 0
        %2805 = vmatprep.subr.bf16.mxu0 0
        %2806 = vmatpush1.bf16.msra.mxu0 0
        %2807 = vmatprep.subr.bf16.mxu0 0
        %2808 = vmatpush1.bf16.msra.mxu0 0
        %2809 = vmatprep.subr.bf16.mxu0 0
        %2810 = vmatpush1.bf16.msra.mxu0 0
        %2811 = vmatprep.subr.bf16.mxu0 0
        %2812 = vmatpush1.bf16.msra.mxu0 0
        %2813 = vmatprep.subr.bf16.mxu0 0
        %2814 = vmatpush1.bf16.msra.mxu0 0
        %2815 = vmatprep.subr.bf16.mxu0 0
        %2816 = vmatpush1.bf16.msra.mxu0 0
        %2817 = vmatprep.subr.bf16.mxu0 0
        %2818 = vmatpush1.bf16.msra.mxu0 0
        %2819 = vmatprep.subr.bf16.mxu0 0
        %2820 = vmatpush1.bf16.msra.mxu0 0
        %2821 = vmatprep.subr.bf16.mxu0 0
        %2822 = vmatpush1.bf16.msra.mxu0 0
        %2823 = vmatprep.subr.bf16.mxu0 0
        %2824 = vmatpush1.bf16.msra.mxu0 0
        %2825 = vmatprep.subr.bf16.mxu0 0
        %2826 = vmatpush1.bf16.msra.mxu0 0
        %2827 = vmatprep.subr.bf16.mxu0 0
        %2828 = vmatpush1.bf16.msra.mxu0 0
        %2829 = vmatprep.subr.bf16.mxu0 0
        %2830 = vmatpush1.bf16.msra.mxu0 0
        %2831 = vmatprep.mubr.bf16.mxu0 0
        %2832 = vmatmul.mubr.bf16.gmra.mrb[0].mxu0 %v2788
        %v2833 = vpop.f32.mrb[0].mxu0
        %v2834 = vadd.f32 0.0, %v2833
        %v2835 = vpop.f32.mrb[0].mxu0
        %v2836 = vpop.f32.mrb[0].mxu0
        %v2837 = vadd.f32 0.0, %v2836
        %v2838 = vpop.f32.mrb[0].mxu0
        %2839 = vmatprep.mubr.bf16.mxu0 0
        %2840 = vmatmul.mubr.bf16.gmra.mrb[0].mxu0 %v2791
        %v2841 = vpop.f32.mrb[0].mxu0
        %v2842 = vadd.f32 0.0, %v2841
        %v2843 = vpop.f32.mrb[0].mxu0
        %v2844 = vpop.f32.mrb[0].mxu0
        %v2845 = vadd.f32 0.0, %v2844
        %v2846 = vpop.f32.mrb[0].mxu0
        %2847 = vmatprep.mubr.bf16.mxu0 0
        %2848 = vmatmul.mubr.bf16.gmra.mrb[0].mxu0 %v2794
        %v2849 = vpop.f32.mrb[0].mxu0
        %v2850 = vadd.f32 0.0, %v2849
        %v2851 = vpop.f32.mrb[0].mxu0
        %v2852 = vpop.f32.mrb[0].mxu0
        %v2853 = vadd.f32 0.0, %v2852
        %v2854 = vpop.f32.mrb[0].mxu0
        %2855 = vmatprep.mubr.bf16.mxu0 0
        %2856 = vmatmul.mubr.bf16.gmra.mrb[0].mxu0 %v2797
        %v2857 = vpop.f32.mrb[0].mxu0
        %v2858 = vadd.f32 0.0, %v2857
        %v2859 = vpop.f32.mrb[0].mxu0
        %v2860 = vpop.f32.mrb[0].mxu0
        %v2861 = vadd.f32 0.0, %v2860
        %v2862 = vpop.f32.mrb[0].mxu0
        %2863 = vdwg.mxu0
        %v2864 = vadd.f32 %v2758, %v2834
        %v2865 = vadd.f32 %v2759, %v2837
        %v2866 = vadd.f32 %v2760, %v2842
        %v2867 = vadd.f32 %v2761, %v2845
        %v2868 = vadd.f32 %v2762, %v2850
        %v2869 = vadd.f32 %v2763, %v2853
        %v2870 = vadd.f32 %v2764, %v2858
        %v2871 = vadd.f32 %v2765, %v2861
        %v2872 = vld [vmem:[%s2659 + $0x2] sm:$0xff]
        %v2873 = vld [vmem:[%s2659 + $0x12] sm:$0xff]
        %v2874 = vld [vmem:[%s2659 + $0x22] sm:$0xff]
        %v2875 = vld [vmem:[%s2659 + $0x32] sm:$0xff]
        %v2876 = vld [vmem:[%s2659 + $0x42] sm:$0xff]
        %v2877 = vld [vmem:[%s2659 + $0x52] sm:$0xff]
        %v2878 = vld [vmem:[%s2659 + $0x62] sm:$0xff]
        %v2879 = vld [vmem:[%s2659 + $0x72] sm:$0xff]
        %v2880 = vpack.c.bf16 %v2873, %v2872
        %v2881 = vpack.c.bf16 %v2875, %v2874
        %v2882 = vpack.c.bf16 %v2877, %v2876
        %v2883 = vpack.c.bf16 %v2879, %v2878
        %s2884 = scalar_lea.vmem %s11, 64
        %v2885 = vld [vmem:[%s2884] sm:$0xf]
        %v2886 = vld [vmem:[%s2884 + $0x4] sm:$0xf]
        %v2889 = vunpack.c.l.b16 %v2885
        %v2890 = vunpack.c.l.b16 %v2886
        %v2891 = vpack.c.b16 %v2890, %v2889
        %v2894 = vsel %vm1627, %v2880, 0
        %v2897 = vsel %vm1627, %v2881, 0
        %v2900 = vsel %vm1627, %v2882, 0
        %v2903 = vsel %vm1627, %v2883, 0
        %2905 = vmatprep.subr.bf16.mxu0 0
        %2906 = vmatpush1.bf16.msra.mxu0 %v2891
        %2907 = vmatprep.subr.bf16.mxu0 0
        %2908 = vmatpush1.bf16.msra.mxu0 0
        %2909 = vmatprep.subr.bf16.mxu0 0
        %2910 = vmatpush1.bf16.msra.mxu0 0
        %2911 = vmatprep.subr.bf16.mxu0 0
        %2912 = vmatpush1.bf16.msra.mxu0 0
        %2913 = vmatprep.subr.bf16.mxu0 0
        %2914 = vmatpush1.bf16.msra.mxu0 0
        %2915 = vmatprep.subr.bf16.mxu0 0
        %2916 = vmatpush1.bf16.msra.mxu0 0
        %2917 = vmatprep.subr.bf16.mxu0 0
        %2918 = vmatpush1.bf16.msra.mxu0 0
        %2919 = vmatprep.subr.bf16.mxu0 0
        %2920 = vmatpush1.bf16.msra.mxu0 0
        %2921 = vmatprep.subr.bf16.mxu0 0
        %2922 = vmatpush1.bf16.msra.mxu0 0
        %2923 = vmatprep.subr.bf16.mxu0 0
        %2924 = vmatpush1.bf16.msra.mxu0 0
        %2925 = vmatprep.subr.bf16.mxu0 0
        %2926 = vmatpush1.bf16.msra.mxu0 0
        %2927 = vmatprep.subr.bf16.mxu0 0
        %2928 = vmatpush1.bf16.msra.mxu0 0
        %2929 = vmatprep.subr.bf16.mxu0 0
        %2930 = vmatpush1.bf16.msra.mxu0 0
        %2931 = vmatprep.subr.bf16.mxu0 0
        %2932 = vmatpush1.bf16.msra.mxu0 0
        %2933 = vmatprep.subr.bf16.mxu0 0
        %2934 = vmatpush1.bf16.msra.mxu0 0
        %2935 = vmatprep.subr.bf16.mxu0 0
        %2936 = vmatpush1.bf16.msra.mxu0 0
        %2937 = vmatprep.mubr.bf16.mxu0 0
        %2938 = vmatmul.mubr.bf16.gmra.mrb[0].mxu0 %v2894
        %v2939 = vpop.f32.mrb[0].mxu0
        %v2940 = vadd.f32 0.0, %v2939
        %v2941 = vpop.f32.mrb[0].mxu0
        %v2942 = vpop.f32.mrb[0].mxu0
        %v2943 = vadd.f32 0.0, %v2942
        %v2944 = vpop.f32.mrb[0].mxu0
        %2945 = vmatprep.mubr.bf16.mxu0 0
        %2946 = vmatmul.mubr.bf16.gmra.mrb[0].mxu0 %v2897
        %v2947 = vpop.f32.mrb[0].mxu0
        %v2948 = vadd.f32 0.0, %v2947
        %v2949 = vpop.f32.mrb[0].mxu0
        %v2950 = vpop.f32.mrb[0].mxu0
        %v2951 = vadd.f32 0.0, %v2950
        %v2952 = vpop.f32.mrb[0].mxu0
        %2953 = vmatprep.mubr.bf16.mxu0 0
        %2954 = vmatmul.mubr.bf16.gmra.mrb[0].mxu0 %v2900
        %v2955 = vpop.f32.mrb[0].mxu0
        %v2956 = vadd.f32 0.0, %v2955
        %v2957 = vpop.f32.mrb[0].mxu0
        %v2958 = vpop.f32.mrb[0].mxu0
        %v2959 = vadd.f32 0.0, %v2958
        %v2960 = vpop.f32.mrb[0].mxu0
        %2961 = vmatprep.mubr.bf16.mxu0 0
        %2962 = vmatmul.mubr.bf16.gmra.mrb[0].mxu0 %v2903
        %v2963 = vpop.f32.mrb[0].mxu0
        %v2964 = vadd.f32 0.0, %v2963
        %v2965 = vpop.f32.mrb[0].mxu0
        %v2966 = vpop.f32.mrb[0].mxu0
        %v2967 = vadd.f32 0.0, %v2966
        %v2968 = vpop.f32.mrb[0].mxu0
        %2969 = vdwg.mxu0
        %v2970 = vadd.f32 %v2864, %v2940
        %v2971 = vadd.f32 %v2865, %v2943
        %v2972 = vadd.f32 %v2866, %v2948
        %v2973 = vadd.f32 %v2867, %v2951
        %v2974 = vadd.f32 %v2868, %v2956
        %v2975 = vadd.f32 %v2869, %v2959
        %v2976 = vadd.f32 %v2870, %v2964
        %v2977 = vadd.f32 %v2871, %v2967
        %v2978 = vld [vmem:[%s12 + $0x5] sm:$0x1]
        %v2979 = vlaneseq
        %v2980 = vshrl.u32 %v2979, 7
        %v2981 = vsub.s32 0, %v2980
        %v2982 = vrot.slane %v2978, %v2981
        %v2983 = vadd.f32 %v2970, %v2982
        %v2984 = vadd.f32 %v2971, %v2982
        %v2985 = vadd.f32 %v2972, %v2982
        %v2986 = vadd.f32 %v2973, %v2982
        %v2987 = vadd.f32 %v2974, %v2982
        %v2988 = vadd.f32 %v2975, %v2982
        %v2989 = vadd.f32 %v2976, %v2982
        %v2990 = vadd.f32 %v2977, %v2982
        %v2991 = vadd.f32 %v2983, %v1470
        %v2992 = vadd.f32 %v2984, %v1473
        %v2993 = vadd.f32 %v2985, %v1478
        %v2994 = vadd.f32 %v2986, %v1481
        %v2995 = vadd.f32 %v2987, %v1486
        %v2996 = vadd.f32 %v2988, %v1489
        %v2997 = vadd.f32 %v2989, %v1494
        %v2998 = vadd.f32 %v2990, %v1497
        %v2999 = vmax.f32 %v2991, 0.0
        %v3000 = vmax.f32 %v2992, 0.0
        %v3001 = vmax.f32 %v2993, 0.0
        %v3002 = vmax.f32 %v2994, 0.0
        %v3003 = vmax.f32 %v2995, 0.0
        %v3004 = vmax.f32 %v2996, 0.0
        %v3005 = vmax.f32 %v2997, 0.0
        %v3006 = vmax.f32 %v2998, 0.0
        %3007 = vst.msk [vmem:[%s478] sm:$0xff] %vm1627, %v2999
        %3008 = vst.msk [vmem:[%s478 + $0x8] sm:$0xff] %vm1627, %v3000
        %3009 = vst.msk [vmem:[%s478 + $0x10] sm:$0xff] %vm1627, %v3001
        %3010 = vst.msk [vmem:[%s478 + $0x18] sm:$0xff] %vm1627, %v3002
        %3011 = vst.msk [vmem:[%s478 + $0x20] sm:$0xff] %vm1627, %v3003
        %3012 = vst.msk [vmem:[%s478 + $0x28] sm:$0xff] %vm1627, %v3004
        %3013 = vst.msk [vmem:[%s478 + $0x30] sm:$0xff] %vm1627, %v3005
        %3014 = vst.msk [vmem:[%s478 + $0x38] sm:$0xff] %vm1627, %v3006
        %s3015 = sand.u32 %s328, 1
        %s3016 = scalar_lea.sflag [#allocation4], %s3015
        %s3017 = sand.u32 %s328, 1
        %s3018 = smul.addr %s3017, 64
        %s3019 = scalar_lea.vmem [#allocation3], %s3018
        // Predicated region
        $region73: #{block_forward.1} parent=71 // pred_check
          %p3020 = pneg %p338
        $region74: #{block_forward.1} parent=71 // pred_check_branch
          %3022 = sbr.rel (%p3020) target = $region76
        $region75: #{block_forward.1} parent=71 // pred_region
          %s3024 = ssub.s32 1024, 1024
          %3025 = vsyncadd %s3016, %s3024
          %s3026 = smul.addr %s27, 8
          %s3027 = smul.addr %s3026, 128
          %s3028 = scalar_lea.hbm %s13, %s3027
          %s3029 = sshll.u32 %s3019, 4
          %s3030 = int_to_ptr.vmem [resolvable:$true] %s3029
          %3035 = dma.vmem_to_hbm [thread:$0]  %s3030, 1024, %s3028, %s3016, 128, 128, 8
        $region76: #{block_forward.1} parent=71 // pred_fallthru
          _
      $region72: #{block_forward.1} parent=5 // pred_fallthru
        _
      %p3036 = scmp.le.s32.totalorder 2, %s22
      // Predicated region
      $region77: #{block_forward.1} parent=5 // pred_check
        %p3037 = pneg %p3036
      $region78: #{block_forward.1} parent=5 // pred_check_branch
        %3039 = sbr.rel (%p3037) target = $region80
      $region79: #{block_forward.1} parent=5 // pred_region
        %s3040 = ssub.s32 %s22, 2
        // Predicated region
        $region81: #{block_forward.1} parent=79 // pred_check
          %p3041 = pneg %p344
        $region82: #{block_forward.1} parent=79 // pred_check_branch
          %3043 = sbr.rel (%p3041) target = $region84
        $region83: #{block_forward.1} parent=79 // pred_region
          %s3044 = sand.u32 %s329, 1
          %s3045 = scalar_lea.sflag [#allocation4], %s3044
          %s3046 = sand.u32 %s329, 1
          %s3047 = smul.addr %s3046, 64
          %s3048 = scalar_lea.vmem [#allocation3], %s3047
          %3049 = dma.done %s3045, 1024
        $region84: #{block_forward.1} parent=79 // pred_fallthru
          _
      $region80: #{block_forward.1} parent=5 // pred_fallthru
        _
    $region6: #{block_forward.1} parent=1 // loop_footer
      %s26 = sadd.s32 1, %s22
    $region7: #{block_forward.1} parent=1 // loop_footer_branch
      %21 = sbr.rel target = $region3
    $region8: #{block_forward.1} parent=1 // loop_exit
      _
    %3050 = vsyncpa [#allocation4], 1
    %s3051 = scalar_lea.sflag [#allocation4], 1
    %3052 = vsyncpa %s3051, 1

</llo_original>
